<compile_context>
chip_gen: v7x
topology: tpu7x:2x2x1
jax: 0.10.0
libtpu: 0.0.40
codegen_flags: <defaults>
</compile_context>

<pallas_src>
import functools

import numpy as np

import jax
import jax.numpy as jnp
from jax.experimental import pallas as pl
from jax.experimental.pallas import tpu as pltpu

BETA = 0.5  # leak factor of snn.Leaky (beta=0.5 in the module)


# ----------------------------------------------------------------------------
# Kernel 1: hoisted layer-1 Conv1d(k=3, 'same') + MaxPool1d(3, stride=2)
# Processes a chunk of R = TG*B (time, batch) slices in position-major layout:
#   input row  = pad_position * R + slice   (pad_position 0..L+1, zeros at ends)
#   output row = pool_window  * R + slice
# ----------------------------------------------------------------------------
def _conv1_pool_kernel(xp_ref, w_ref, b_ref, out_ref, *, n_slices, seq_len, lp1):
    R, L = n_slices, seq_len
    cin = xp_ref.shape[-1]

    # Conv1d as 3 accumulating matmuls on shifted row-views (im2col-free).
    conv = jnp.dot(xp_ref[0:L * R, :], w_ref[0:cin, :],
                   preferred_element_type=jnp.float32)
    for k in (1, 2):
        conv = conv + jnp.dot(xp_ref[k * R:k * R + L * R, :],
                              w_ref[k * cin:(k + 1) * cin, :],
                              preferred_element_type=jnp.float32)
    conv = conv + b_ref[...]

    # MaxPool1d(3, stride=2): elementwise max of contiguous row blocks.
    for j in range(lp1):
        out_ref[j * R:(j + 1) * R, :] = jnp.maximum(
            jnp.maximum(conv[(2 * j) * R:(2 * j + 1) * R, :],
                        conv[(2 * j + 1) * R:(2 * j + 2) * R, :]),
            conv[(2 * j + 2) * R:(2 * j + 3) * R, :])


# ----------------------------------------------------------------------------
# Kernel 2: fused recurrent chunk (TT time steps per grid invocation).
# Per-step data is position-major with row stride B: row = position * B + b.
# ----------------------------------------------------------------------------
def _recurrent_chunk_kernel(cur1_ref, w2_ref, b2_ref, wfe_ref, bf1_ref,
                            wf2_ref, bf2_ref, thr_ref,
                            spkf1_ref, memf1_ref, spkf2_ref, memf2_ref,
                            mem1_s, xpad_s, mem2_s, mf1_s, mf2_s,
                            *, beta, tt, n_batch, lp1, lp2):
    nb = n_batch
    c1 = mem1_s.shape[-1]
    c2 = mem2_s.shape[-1]

    @pl.when(pl.program_id(0) == 0)
    def _init():
        mem1_s[...] = jnp.zeros_like(mem1_s)
        xpad_s[...] = jnp.zeros_like(xpad_s)   # boundary rows stay 0 forever
        mem2_s[...] = jnp.zeros_like(mem2_s)
        mf1_s[...] = jnp.zeros_like(mf1_s)
        mf2_s[...] = jnp.zeros_like(mf2_s)

    thr1 = thr_ref[0, 0]
    thr2 = thr_ref[0, 1]
    thrf1 = thr_ref[0, 2]
    thrf2 = thr_ref[0, 3]

    b2 = b2_ref[...]
    bf1 = bf1_ref[...]
    wf2 = wf2_ref[...]
    bf2 = bf2_ref[...]

    def leaky(mem, cur, thr):
        # snn.Leaky, reset_mechanism="subtract": reset from the PREVIOUS
        # membrane, spike (strict >) from the UPDATED membrane.  This equals
        # carrying the previous spike only because spk == (mem > thr) here.
        reset = (mem > thr).astype(jnp.float32)
        mem_new = beta * mem + cur - reset * thr
        spk = (mem_new > thr).astype(jnp.float32)
        return spk, mem_new

    # tt is a static Python int: fully-unrolled static loop, all indexing static.
    for tl in range(tt):
        # ---- Leaky 1 (conv1+pool1 hoisted; cur1 is (Lp1*B, C1)) -------------
        spk1, m1 = leaky(mem1_s[...], cur1_ref[tl], thr1)
        mem1_s[...] = m1

        # ---- Conv1d #2 (k=3, 'same'): persistent zero-padded scratch --------
        xpad_s[nb:nb + lp1 * nb, :] = spk1               # one vectorized store
        conv2 = jnp.dot(xpad_s[0:lp1 * nb, :], w2_ref[0:c1, :],
                        preferred_element_type=jnp.float32)
        for k in (1, 2):
            conv2 = conv2 + jnp.dot(xpad_s[k * nb:k * nb + lp1 * nb, :],
                                    w2_ref[k * c1:(k + 1) * c1, :],
                                    preferred_element_type=jnp.float32)
        conv2 = conv2 + b2                               # (Lp1*B, C2)

        # ---- MaxPool1d(3, stride=2), vectorized over batch & channels -------
        cur2 = jnp.concatenate(
            [jnp.maximum(
                jnp.maximum(conv2[(2 * j) * nb:(2 * j + 1) * nb, :],
                            conv2[(2 * j + 1) * nb:(2 * j + 2) * nb, :]),
                conv2[(2 * j + 2) * nb:(2 * j + 3) * nb, :])
             for j in range(lp2)], axis=0)               # (Lp2*B, C2)

        spk2, m2 = leaky(mem2_s[...], cur2, thr2)
        mem2_s[...] = m2

        # ---- AdaptiveAvgPool1d(2)+flatten folded into fc1 weight (wfe) ------
        cur_f1 = jnp.dot(spk2[0:nb, :], wfe_ref[0:c2, :],
                         preferred_element_type=jnp.float32)
        for l in range(1, lp2):
            cur_f1 = cur_f1 + jnp.dot(spk2[l * nb:(l + 1) * nb, :],
                                      wfe_ref[l * c2:(l + 1) * c2, :],
                                      preferred_element_type=jnp.float32)
        cur_f1 = cur_f1 + bf1                            # (B, 256)

        spk_f1, mf1 = leaky(mf1_s[...], cur_f1, thrf1)
        mf1_s[...] = mf1
        spkf1_ref[tl] = spk_f1
        memf1_ref[tl] = mf1

        # ---- FC2 + Leaky (Dout lane-padded to DP) ----------------------------
        cur_f2 = jnp.dot(spk_f1, wf2, preferred_element_type=jnp.float32) + bf2
        spk_f2, mf2 = leaky(mf2_s[...], cur_f2, thrf2)
        mf2_s[...] = mf2
        spkf2_ref[tl] = spk_f2
        memf2_ref[tl] = mf2


# ----------------------------------------------------------------------------
# Wrapper
# ----------------------------------------------------------------------------
def _oc_scnn_forward(x, params, *, num_steps, beta=BETA):
    """x: (B, T, C, L) (time_first=False, gaussian=False path).

    Returns [spk_recs_FC, mem_recs_FC]:
      spk_recs_FC[0]: (T, B, 256), spk_recs_FC[1]: (T, B, 2)  (same for mem).
    """
    conv_params, lin_params = params
    assert len(conv_params) == 2 and len(lin_params) == 2, (
        "fused kernel is specialized to the default OC_SCNN architecture")

    (w1, b1, thr_c1), (w2, b2, thr_c2) = conv_params
    (wf1, bf1, thr_f1), (wf2, bf2, thr_f2) = lin_params

    B, Tx, Cin, L = x.shape
    T = int(num_steps)
    assert Tx >= T
    C1, C2 = w1.shape[0], w2.shape[0]
    D1, D2 = wf1.shape[0], wf2.shape[0]                 # 256, 2
    Lp1 = (L - 3) // 2 + 1
    Lp2 = (Lp1 - 3) // 2 + 1
    DP = -(-D2 // 128) * 128                            # fc2 Dout padded to 128
    f32 = jnp.float32

    # ---- one-time weight prep (hoisted out of the time loop) ----------------
    w1f = jnp.transpose(w1, (2, 1, 0)).reshape(3 * Cin, C1).astype(f32)
    b1r = b1.reshape(1, C1).astype(f32)
    w2f = jnp.transpose(w2, (2, 1, 0)).reshape(3 * C1, C2).astype(f32)
    b2r = b2.reshape(1, C2).astype(f32)

    # AdaptiveAvgPool1d(2) + channel-major flatten folded into the fc1 weight:
    #   W_eff[l*C2 + c, d] = sum_j P[l, j] * wf1[d, c*2 + j]
    P = np.zeros((Lp2, 2), np.float32)
    for j in range(2):
        s = (j * Lp2) // 2
        e = -(-((j + 1) * Lp2) // 2)
        P[s:e, j] = 1.0 / (e - s)
    wf1_r = wf1.astype(f32).reshape(D1, C2, 2)          # [d, c, bin]
    w_eff = jnp.einsum('lj,dcj->lcd', jnp.asarray(P), wf1_r).reshape(Lp2 * C2, D1)
    bf1r = bf1.reshape(1, D1).astype(f32)

    wf2p = jnp.zeros((D1, DP), f32).at[:, :D2].set(jnp.transpose(wf2).astype(f32))
    bf2p = jnp.zeros((1, DP), f32).at[:, :D2].set(bf2.reshape(1, D2).astype(f32))

    thrs = jnp.stack([thr_c1, thr_c2, thr_f1, thr_f2]).reshape(1, 4).astype(f32)

    # ---- hoisted layer-1 conv+pool over ALL time steps (chunked, parallel) --
    TG = min(T, 32)
    T1 = -(-T // TG) * TG
    nch = T1 // TG
    R = TG * B

    xt = jnp.transpose(x[:, :T].astype(f32), (1, 0, 3, 2))        # (T, B, L, Cin)
    xt = jnp.pad(xt, ((0, T1 - T), (0, 0), (1, 1), (0, 0)))       # (T1, B, L+2, Cin)
    x1 = xt.reshape(nch, R, L + 2, Cin).transpose(0, 2, 1, 3)     # (nch, L+2, R, Cin)
    x1 = x1.reshape(nch, (L + 2) * R, Cin)

    kern1 = functools.partial(_conv1_pool_kernel, n_slices=R, seq_len=L, lp1=Lp1)
    cur1 = pl.pallas_call(
        kern1,
        out_shape=jax.ShapeDtypeStruct((nch, Lp1 * R, C1), f32),
        grid=(nch,),
        in_specs=[pl.BlockSpec((None, (L + 2) * R, Cin), lambda i: (i, 0, 0)),
                  pl.BlockSpec((3 * Cin, C1), lambda i: (0, 0)),
                  pl.BlockSpec((1, C1), lambda i: (0, 0))],
        out_specs=pl.BlockSpec((None, Lp1 * R, C1), lambda i: (i, 0, 0)),
        compiler_params=pltpu.CompilerParams(
            dimension_semantics=("parallel",)),
    )(x1, w1f, b1r)

    # re-order to per-time-step position-major (Lp1*B, C1) layout (plain XLA)
    cur1 = cur1.reshape(nch, Lp1, TG, B, C1).transpose(0, 2, 1, 3, 4)
    cur1 = cur1.reshape(T1, Lp1 * B, C1)[:T]

    # ---- fused recurrent kernel, grid chunked over time ---------------------
    TT = min(T, 16)
    T2 = -(-T // TT) * TT
    cur1 = jnp.pad(cur1, ((0, T2 - T), (0, 0), (0, 0)))

    kern2 = functools.partial(_recurrent_chunk_kernel, beta=float(beta),
                              tt=TT, n_batch=B, lp1=Lp1, lp2=Lp2)
    out_shapes = (jax.ShapeDtypeStruct((T2, B, D1), f32),
                  jax.ShapeDtypeStruct((T2, B, D1), f32),
                  jax.ShapeDtypeStruct((T2, B, DP), f32),
                  jax.ShapeDtypeStruct((T2, B, DP), f32))
    spk1r, mem1r, spk2r, mem2r = pl.pallas_call(
        kern2,
        out_shape=out_shapes,
        grid=(T2 // TT,),
        in_specs=[pl.BlockSpec((TT, Lp1 * B, C1), lambda c: (c, 0, 0)),
                  pl.BlockSpec((3 * C1, C2), lambda c: (0, 0)),
                  pl.BlockSpec((1, C2), lambda c: (0, 0)),
                  pl.BlockSpec((Lp2 * C2, D1), lambda c: (0, 0)),
                  pl.BlockSpec((1, D1), lambda c: (0, 0)),
                  pl.BlockSpec((D1, DP), lambda c: (0, 0)),
                  pl.BlockSpec((1, DP), lambda c: (0, 0)),
                  pl.BlockSpec(memory_space=pltpu.MemorySpace.SMEM)],
        out_specs=(pl.BlockSpec((TT, B, D1), lambda c: (c, 0, 0)),
                   pl.BlockSpec((TT, B, D1), lambda c: (c, 0, 0)),
                   pl.BlockSpec((TT, B, DP), lambda c: (c, 0, 0)),
                   pl.BlockSpec((TT, B, DP), lambda c: (c, 0, 0))),
        scratch_shapes=[pltpu.VMEM((Lp1 * B, C1), f32),        # mem1
                        pltpu.VMEM(((Lp1 + 2) * B, C1), f32),  # padded spk1
                        pltpu.VMEM((Lp2 * B, C2), f32),        # mem2
                        pltpu.VMEM((B, D1), f32),              # mem fc1
                        pltpu.VMEM((B, DP), f32)],             # mem fc2
        compiler_params=pltpu.CompilerParams(
            dimension_semantics=("arbitrary",)),
    )(cur1, w2f, b2r, w_eff, bf1r, wf2p, bf2p, thrs)

    spk_recs = [spk1r[:T], spk2r[:T, :, :D2]]
    mem_recs = [mem1r[:T], mem2r[:T, :, :D2]]
    return [spk_recs, mem_recs]


oc_scnn_forward = jax.jit(_oc_scnn_forward, static_argnames=("num_steps", "beta"))


# ----------------------------------------------------------------------------
# Parameters (deterministic, PyTorch-default-style uniform init)
# ----------------------------------------------------------------------------
def init_params(key, input_size, hidden_size=(32, 64)):
    dims = (input_size,) + tuple(hidden_size)
    keys = iter(jax.random.split(key, 4 * (len(dims) - 1) + 8))

    conv_params = []
    for i in range(len(dims) - 1):
        cin, cout = dims[i], dims[i + 1]
        bound = 1.0 / (cin * 3) ** 0.5
        w = jax.random.uniform(next(keys), (cout, cin, 3), jnp.float32, -bound, bound)
        b = jax.random.uniform(next(keys), (cout,), jnp.float32, -bound, bound)
        thr = jnp.array(1.0, jnp.float32)   # snn.Leaky(learn_threshold=True) init
        conv_params.append((w, b, thr))

    lin_dims = [(2 * dims[-1], 256), (256, 2)]
    lin_params = []
    for din, dout in lin_dims:
        bound = 1.0 / din ** 0.5
        w = jax.random.uniform(next(keys), (dout, din), jnp.float32, -bound, bound)
        b = jax.random.uniform(next(keys), (dout,), jnp.float32, -bound, bound)
        thr = jnp.array(1.0, jnp.float32)
        lin_params.append((w, b, thr))

    return conv_params, lin_params


if __name__ == "__main__":
    key = jax.random.PRNGKey(0)
    k_x, k_p = jax.random.split(key)

    # Small shapes consistent with the module: batch=2, time steps=4,
    # input channels=4, sequence length=16, hidden_size=[32, 64].
    B, T, C, L = 2, 4, 4, 16
    x = (jax.random.uniform(k_x, (B, T, C, L)) < 0.5).astype(jnp.float32)

    params = init_params(k_p, input_size=C, hidden_size=(32, 64))
    spk_recs, mem_recs = oc_scnn_forward(x, params, num_steps=T)

    for r in spk_recs + mem_recs:
        jax.block_until_ready(r)

    assert spk_recs[0].shape == (T, B, 256) and spk_recs[1].shape == (T, B, 2)
    assert mem_recs[0].shape == (T, B, 256) and mem_recs[1].shape == (T, B, 2)
    print("KERNEL_OK")
</pallas_src>

<mosaic_0001>
module attributes {stable_mosaic.version = 11 : i64} {
  func.func @_conv1_pool_kernel(%arg0: i32, %arg1: memref<1x144x4xf32, #tpu.memory_space<vmem>>, %arg2: memref<12x32xf32, #tpu.memory_space<vmem>>, %arg3: memref<1x32xf32, #tpu.memory_space<vmem>>, %arg4: memref<1x56x32xf32, #tpu.memory_space<vmem>>) attributes {dimension_semantics = [#tpu.dimension_semantics<parallel>], iteration_bounds = array<i64: 1>, scalar_prefetch = 0 : i64, scratch_operands = 0 : i64, tpu.core_type = #tpu.core_type<tc>, window_params = [{transform_indices = @transform_0, window_bounds = array<i64: 1, 144, 4>}, {pipeline_mode = #tpu.pipeline_mode<synchronous>, transform_indices = @transform_1, window_bounds = array<i64: 12, 32>}, {pipeline_mode = #tpu.pipeline_mode<synchronous>, transform_indices = @transform_2, window_bounds = array<i64: 1, 32>}, {transform_indices = @transform_3, window_bounds = array<i64: 1, 56, 32>}]} {
    %c0 = arith.constant 0 : index
    %c0_0 = arith.constant 0 : index
    %c0_1 = arith.constant 0 : index
    %0 = vector.load %arg1[%c0, %c0_0, %c0_1] : memref<1x144x4xf32, #tpu.memory_space<vmem>>, vector<1x128x4xf32>
    %1 = vector.shape_cast %0 : vector<1x128x4xf32> to vector<128x4xf32>
    %c0_2 = arith.constant 0 : index
    %c0_3 = arith.constant 0 : index
    %2 = vector.load %arg2[%c0_2, %c0_3] : memref<12x32xf32, #tpu.memory_space<vmem>>, vector<4x32xf32>
    %cst = arith.constant dense<0.000000e+00> : vector<128x32xf32>
    %3 = tpu.matmul %1, %2, %cst {dimension_numbers = #tpu.dot_dimension_numbers<[1], [0], [0], [1], [0, 0, 1, 1], [], []>} : vector<128x4xf32>, vector<4x32xf32>, vector<128x32xf32> -> vector<128x32xf32>
    %c0_4 = arith.constant 0 : index
    %c8 = arith.constant 8 : index
    %c0_5 = arith.constant 0 : index
    %4 = vector.load %arg1[%c0_4, %c8, %c0_5] : memref<1x144x4xf32, #tpu.memory_space<vmem>>, vector<1x128x4xf32>
    %5 = vector.shape_cast %4 : vector<1x128x4xf32> to vector<128x4xf32>
    %c4 = arith.constant 4 : index
    %c0_6 = arith.constant 0 : index
    %6 = vector.load %arg2[%c4, %c0_6] : memref<12x32xf32, #tpu.memory_space<vmem>>, vector<4x32xf32>
    %cst_7 = arith.constant dense<0.000000e+00> : vector<128x32xf32>
    %7 = tpu.matmul %5, %6, %cst_7 {dimension_numbers = #tpu.dot_dimension_numbers<[1], [0], [0], [1], [0, 0, 1, 1], [], []>} : vector<128x4xf32>, vector<4x32xf32>, vector<128x32xf32> -> vector<128x32xf32>
    %8 = arith.addf %3, %7 : vector<128x32xf32>
    %c0_8 = arith.constant 0 : index
    %c16 = arith.constant 16 : index
    %c0_9 = arith.constant 0 : index
    %9 = vector.load %arg1[%c0_8, %c16, %c0_9] : memref<1x144x4xf32, #tpu.memory_space<vmem>>, vector<1x128x4xf32>
    %10 = vector.shape_cast %9 : vector<1x128x4xf32> to vector<128x4xf32>
    %c8_10 = arith.constant 8 : index
    %c0_11 = arith.constant 0 : index
    %11 = vector.load %arg2[%c8_10, %c0_11] : memref<12x32xf32, #tpu.memory_space<vmem>>, vector<4x32xf32>
    %cst_12 = arith.constant dense<0.000000e+00> : vector<128x32xf32>
    %12 = tpu.matmul %10, %11, %cst_12 {dimension_numbers = #tpu.dot_dimension_numbers<[1], [0], [0], [1], [0, 0, 1, 1], [], []>} : vector<128x4xf32>, vector<4x32xf32>, vector<128x32xf32> -> vector<128x32xf32>
    %13 = arith.addf %8, %12 : vector<128x32xf32>
    %c0_13 = arith.constant 0 : index
    %c0_14 = arith.constant 0 : index
    %14 = vector.load %arg3[%c0_13, %c0_14] : memref<1x32xf32, #tpu.memory_space<vmem>>, vector<1x32xf32>
    %15 = vector.broadcast %14 : vector<1x32xf32> to vector<128x32xf32>
    %16 = arith.addf %13, %15 : vector<128x32xf32>
    %17 = vector.extract_strided_slice %16 {offsets = [0, 0], sizes = [8, 32], strides = [1, 1]} : vector<128x32xf32> to vector<8x32xf32>
    %18 = vector.extract_strided_slice %16 {offsets = [8, 0], sizes = [8, 32], strides = [1, 1]} : vector<128x32xf32> to vector<8x32xf32>
    %19 = arith.maximumf %17, %18 : vector<8x32xf32>
    %20 = vector.extract_strided_slice %16 {offsets = [16, 0], sizes = [8, 32], strides = [1, 1]} : vector<128x32xf32> to vector<8x32xf32>
    %21 = arith.maximumf %19, %20 : vector<8x32xf32>
    %c0_15 = arith.constant 0 : index
    %c0_16 = arith.constant 0 : index
    %c0_17 = arith.constant 0 : index
    %22 = vector.load %arg4[%c0_15, %c0_16, %c0_17] : memref<1x56x32xf32, #tpu.memory_space<vmem>>, vector<1x8x32xf32>
    %23 = vector.shape_cast %22 : vector<1x8x32xf32> to vector<8x32xf32>
    %24 = vector.shape_cast %21 : vector<8x32xf32> to vector<1x8x32xf32>
    tpu.vector_store %arg4[%c0_15, %c0_16, %c0_17], %24 {strides = array<i32>} : memref<1x56x32xf32, #tpu.memory_space<vmem>>, vector<1x8x32xf32>,
    %25 = vector.extract_strided_slice %16 {offsets = [16, 0], sizes = [8, 32], strides = [1, 1]} : vector<128x32xf32> to vector<8x32xf32>
    %26 = vector.extract_strided_slice %16 {offsets = [24, 0], sizes = [8, 32], strides = [1, 1]} : vector<128x32xf32> to vector<8x32xf32>
    %27 = arith.maximumf %25, %26 : vector<8x32xf32>
    %28 = vector.extract_strided_slice %16 {offsets = [32, 0], sizes = [8, 32], strides = [1, 1]} : vector<128x32xf32> to vector<8x32xf32>
    %29 = arith.maximumf %27, %28 : vector<8x32xf32>
    %c0_18 = arith.constant 0 : index
    %c8_19 = arith.constant 8 : index
    %c0_20 = arith.constant 0 : index
    %30 = vector.load %arg4[%c0_18, %c8_19, %c0_20] : memref<1x56x32xf32, #tpu.memory_space<vmem>>, vector<1x8x32xf32>
    %31 = vector.shape_cast %30 : vector<1x8x32xf32> to vector<8x32xf32>
    %32 = vector.shape_cast %29 : vector<8x32xf32> to vector<1x8x32xf32>
    tpu.vector_store %arg4[%c0_18, %c8_19, %c0_20], %32 {strides = array<i32>} : memref<1x56x32xf32, #tpu.memory_space<vmem>>, vector<1x8x32xf32>,
    %33 = vector.extract_strided_slice %16 {offsets = [32, 0], sizes = [8, 32], strides = [1, 1]} : vector<128x32xf32> to vector<8x32xf32>
    %34 = vector.extract_strided_slice %16 {offsets = [40, 0], sizes = [8, 32], strides = [1, 1]} : vector<128x32xf32> to vector<8x32xf32>
    %35 = arith.maximumf %33, %34 : vector<8x32xf32>
    %36 = vector.extract_strided_slice %16 {offsets = [48, 0], sizes = [8, 32], strides = [1, 1]} : vector<128x32xf32> to vector<8x32xf32>
    %37 = arith.maximumf %35, %36 : vector<8x32xf32>
    %c0_21 = arith.constant 0 : index
    %c16_22 = arith.constant 16 : index
    %c0_23 = arith.constant 0 : index
    %38 = vector.load %arg4[%c0_21, %c16_22, %c0_23] : memref<1x56x32xf32, #tpu.memory_space<vmem>>, vector<1x8x32xf32>
    %39 = vector.shape_cast %38 : vector<1x8x32xf32> to vector<8x32xf32>
    %40 = vector.shape_cast %37 : vector<8x32xf32> to vector<1x8x32xf32>
    tpu.vector_store %arg4[%c0_21, %c16_22, %c0_23], %40 {strides = array<i32>} : memref<1x56x32xf32, #tpu.memory_space<vmem>>, vector<1x8x32xf32>,
    %41 = vector.extract_strided_slice %16 {offsets = [48, 0], sizes = [8, 32], strides = [1, 1]} : vector<128x32xf32> to vector<8x32xf32>
    %42 = vector.extract_strided_slice %16 {offsets = [56, 0], sizes = [8, 32], strides = [1, 1]} : vector<128x32xf32> to vector<8x32xf32>
    %43 = arith.maximumf %41, %42 : vector<8x32xf32>
    %44 = vector.extract_strided_slice %16 {offsets = [64, 0], sizes = [8, 32], strides = [1, 1]} : vector<128x32xf32> to vector<8x32xf32>
    %45 = arith.maximumf %43, %44 : vector<8x32xf32>
    %c0_24 = arith.constant 0 : index
    %c24 = arith.constant 24 : index
    %c0_25 = arith.constant 0 : index
    %46 = vector.load %arg4[%c0_24, %c24, %c0_25] : memref<1x56x32xf32, #tpu.memory_space<vmem>>, vector<1x8x32xf32>
    %47 = vector.shape_cast %46 : vector<1x8x32xf32> to vector<8x32xf32>
    %48 = vector.shape_cast %45 : vector<8x32xf32> to vector<1x8x32xf32>
    tpu.vector_store %arg4[%c0_24, %c24, %c0_25], %48 {strides = array<i32>} : memref<1x56x32xf32, #tpu.memory_space<vmem>>, vector<1x8x32xf32>,
    %49 = vector.extract_strided_slice %16 {offsets = [64, 0], sizes = [8, 32], strides = [1, 1]} : vector<128x32xf32> to vector<8x32xf32>
    %50 = vector.extract_strided_slice %16 {offsets = [72, 0], sizes = [8, 32], strides = [1, 1]} : vector<128x32xf32> to vector<8x32xf32>
    %51 = arith.maximumf %49, %50 : vector<8x32xf32>
    %52 = vector.extract_strided_slice %16 {offsets = [80, 0], sizes = [8, 32], strides = [1, 1]} : vector<128x32xf32> to vector<8x32xf32>
    %53 = arith.maximumf %51, %52 : vector<8x32xf32>
    %c0_26 = arith.constant 0 : index
    %c32 = arith.constant 32 : index
    %c0_27 = arith.constant 0 : index
    %54 = vector.load %arg4[%c0_26, %c32, %c0_27] : memref<1x56x32xf32, #tpu.memory_space<vmem>>, vector<1x8x32xf32>
    %55 = vector.shape_cast %54 : vector<1x8x32xf32> to vector<8x32xf32>
    %56 = vector.shape_cast %53 : vector<8x32xf32> to vector<1x8x32xf32>
    tpu.vector_store %arg4[%c0_26, %c32, %c0_27], %56 {strides = array<i32>} : memref<1x56x32xf32, #tpu.memory_space<vmem>>, vector<1x8x32xf32>,
    %57 = vector.extract_strided_slice %16 {offsets = [80, 0], sizes = [8, 32], strides = [1, 1]} : vector<128x32xf32> to vector<8x32xf32>
    %58 = vector.extract_strided_slice %16 {offsets = [88, 0], sizes = [8, 32], strides = [1, 1]} : vector<128x32xf32> to vector<8x32xf32>
    %59 = arith.maximumf %57, %58 : vector<8x32xf32>
    %60 = vector.extract_strided_slice %16 {offsets = [96, 0], sizes = [8, 32], strides = [1, 1]} : vector<128x32xf32> to vector<8x32xf32>
    %61 = arith.maximumf %59, %60 : vector<8x32xf32>
    %c0_28 = arith.constant 0 : index
    %c40 = arith.constant 40 : index
    %c0_29 = arith.constant 0 : index
    %62 = vector.load %arg4[%c0_28, %c40, %c0_29] : memref<1x56x32xf32, #tpu.memory_space<vmem>>, vector<1x8x32xf32>
    %63 = vector.shape_cast %62 : vector<1x8x32xf32> to vector<8x32xf32>
    %64 = vector.shape_cast %61 : vector<8x32xf32> to vector<1x8x32xf32>
    tpu.vector_store %arg4[%c0_28, %c40, %c0_29], %64 {strides = array<i32>} : memref<1x56x32xf32, #tpu.memory_space<vmem>>, vector<1x8x32xf32>,
    %65 = vector.extract_strided_slice %16 {offsets = [96, 0], sizes = [8, 32], strides = [1, 1]} : vector<128x32xf32> to vector<8x32xf32>
    %66 = vector.extract_strided_slice %16 {offsets = [104, 0], sizes = [8, 32], strides = [1, 1]} : vector<128x32xf32> to vector<8x32xf32>
    %67 = arith.maximumf %65, %66 : vector<8x32xf32>
    %68 = vector.extract_strided_slice %16 {offsets = [112, 0], sizes = [8, 32], strides = [1, 1]} : vector<128x32xf32> to vector<8x32xf32>
    %69 = arith.maximumf %67, %68 : vector<8x32xf32>
    %c0_30 = arith.constant 0 : index
    %c48 = arith.constant 48 : index
    %c0_31 = arith.constant 0 : index
    %70 = vector.load %arg4[%c0_30, %c48, %c0_31] : memref<1x56x32xf32, #tpu.memory_space<vmem>>, vector<1x8x32xf32>
    %71 = vector.shape_cast %70 : vector<1x8x32xf32> to vector<8x32xf32>
    %72 = vector.shape_cast %69 : vector<8x32xf32> to vector<1x8x32xf32>
    tpu.vector_store %arg4[%c0_30, %c48, %c0_31], %72 {strides = array<i32>} : memref<1x56x32xf32, #tpu.memory_space<vmem>>, vector<1x8x32xf32>,
    return
  }
  func.func @transform_0(%arg0: i32) -> (i32, i32, i32) {
    %c0_i32 = arith.constant 0 : i32
    %c0_i32_0 = arith.constant 0 : i32
    %c0_i32_1 = arith.constant 0 : i32
    return %arg0, %c0_i32, %c0_i32_0 : i32, i32, i32
  }
  func.func @transform_1(%arg0: i32) -> (i32, i32) {
    %c0_i32 = arith.constant 0 : i32
    %c0_i32_0 = arith.constant 0 : i32
    %c0_i32_1 = arith.constant 0 : i32
    return %c0_i32, %c0_i32_0 : i32, i32
  }
  func.func @transform_2(%arg0: i32) -> (i32, i32) {
    %c0_i32 = arith.constant 0 : i32
    %c0_i32_0 = arith.constant 0 : i32
    %c0_i32_1 = arith.constant 0 : i32
    return %c0_i32, %c0_i32_0 : i32, i32
  }
  func.func @transform_3(%arg0: i32) -> (i32, i32, i32) {
    %c0_i32 = arith.constant 0 : i32
    %c0_i32_0 = arith.constant 0 : i32
    %c0_i32_1 = arith.constant 0 : i32
    return %arg0, %c0_i32, %c0_i32_0 : i32, i32, i32
  }
}

module attributes {stable_mosaic.version = 11 : i64} {
  func.func @_recurrent_chunk_kernel(%arg0: i32, %arg1: memref<4x14x32xf32, #tpu.memory_space<vmem>>, %arg2: memref<96x64xf32, #tpu.memory_space<vmem>>, %arg3: memref<1x64xf32, #tpu.memory_space<vmem>>, %arg4: memref<192x256xf32, #tpu.memory_space<vmem>>, %arg5: memref<1x256xf32, #tpu.memory_space<vmem>>, %arg6: memref<256x128xf32, #tpu.memory_space<vmem>>, %arg7: memref<1x128xf32, #tpu.memory_space<vmem>>, %arg8: memref<1x4xf32, #tpu.memory_space<smem>>, %arg9: memref<4x2x256xf32, #tpu.memory_space<vmem>>, %arg10: memref<4x2x256xf32, #tpu.memory_space<vmem>>, %arg11: memref<4x2x128xf32, #tpu.memory_space<vmem>>, %arg12: memref<4x2x128xf32, #tpu.memory_space<vmem>>, %arg13: memref<14x32xf32, #tpu.memory_space<vmem>>, %arg14: memref<18x32xf32, #tpu.memory_space<vmem>>, %arg15: memref<6x64xf32, #tpu.memory_space<vmem>>, %arg16: memref<2x256xf32, #tpu.memory_space<vmem>>, %arg17: memref<2x128xf32, #tpu.memory_space<vmem>>) attributes {dimension_semantics = [#tpu.dimension_semantics<arbitrary>], iteration_bounds = array<i64: 1>, scalar_prefetch = 0 : i64, scratch_operands = 5 : i64, tpu.core_type = #tpu.core_type<tc>, window_params = [{transform_indices = @transform_0, window_bounds = array<i64: 4, 14, 32>}, {pipeline_mode = #tpu.pipeline_mode<synchronous>, transform_indices = @transform_1, window_bounds = array<i64: 96, 64>}, {pipeline_mode = #tpu.pipeline_mode<synchronous>, transform_indices = @transform_2, window_bounds = array<i64: 1, 64>}, {pipeline_mode = #tpu.pipeline_mode<synchronous>, transform_indices = @transform_3, window_bounds = array<i64: 192, 256>}, {pipeline_mode = #tpu.pipeline_mode<synchronous>, transform_indices = @transform_4, window_bounds = array<i64: 1, 256>}, {pipeline_mode = #tpu.pipeline_mode<synchronous>, transform_indices = @transform_5, window_bounds = array<i64: 256, 128>}, {pipeline_mode = #tpu.pipeline_mode<synchronous>, transform_indices = @transform_6, window_bounds = array<i64: 1, 128>}, {transform_indices = @transform_7, window_bounds = array<i64: 1, 4>}, {transform_indices = @transform_8, window_bounds = array<i64: 4, 2, 256>}, {transform_indices = @transform_9, window_bounds = array<i64: 4, 2, 256>}, {transform_indices = @transform_10, window_bounds = array<i64: 4, 2, 128>}, {transform_indices = @transform_11, window_bounds = array<i64: 4, 2, 128>}]} {
    %c0_i32 = arith.constant 0 : i32
    %0 = arith.cmpi eq, %arg0, %c0_i32 : i32
    %1 = arith.extui %0 : i1 to i32
    %c0_i32_0 = arith.constant 0 : i32
    %2 = arith.cmpi ne, %1, %c0_i32_0 : i32
    scf.if %2 {
      %cst_256 = arith.constant 0.000000e+00 : f32
      %507 = vector.broadcast %cst_256 : f32 to vector<14x32xf32>
      %c0_257 = arith.constant 0 : index
      %c0_258 = arith.constant 0 : index
      %508 = vector.load %arg13[%c0_257, %c0_258] : memref<14x32xf32, #tpu.memory_space<vmem>>, vector<14x32xf32>
      tpu.vector_store %arg13[%c0_257, %c0_258], %507 {strides = array<i32>} : memref<14x32xf32, #tpu.memory_space<vmem>>, vector<14x32xf32>,
      %cst_259 = arith.constant 0.000000e+00 : f32
      %509 = vector.broadcast %cst_259 : f32 to vector<18x32xf32>
      %c0_260 = arith.constant 0 : index
      %c0_261 = arith.constant 0 : index
      %510 = vector.load %arg14[%c0_260, %c0_261] : memref<18x32xf32, #tpu.memory_space<vmem>>, vector<18x32xf32>
      tpu.vector_store %arg14[%c0_260, %c0_261], %509 {strides = array<i32>} : memref<18x32xf32, #tpu.memory_space<vmem>>, vector<18x32xf32>,
      %cst_262 = arith.constant 0.000000e+00 : f32
      %511 = vector.broadcast %cst_262 : f32 to vector<6x64xf32>
      %c0_263 = arith.constant 0 : index
      %c0_264 = arith.constant 0 : index
      %512 = vector.load %arg15[%c0_263, %c0_264] : memref<6x64xf32, #tpu.memory_space<vmem>>, vector<6x64xf32>
      tpu.vector_store %arg15[%c0_263, %c0_264], %511 {strides = array<i32>} : memref<6x64xf32, #tpu.memory_space<vmem>>, vector<6x64xf32>,
      %cst_265 = arith.constant 0.000000e+00 : f32
      %513 = vector.broadcast %cst_265 : f32 to vector<2x256xf32>
      %c0_266 = arith.constant 0 : index
      %c0_267 = arith.constant 0 : index
      %514 = vector.load %arg16[%c0_266, %c0_267] : memref<2x256xf32, #tpu.memory_space<vmem>>, vector<2x256xf32>
      tpu.vector_store %arg16[%c0_266, %c0_267], %513 {strides = array<i32>} : memref<2x256xf32, #tpu.memory_space<vmem>>, vector<2x256xf32>,
      %cst_268 = arith.constant 0.000000e+00 : f32
      %515 = vector.broadcast %cst_268 : f32 to vector<2x128xf32>
      %c0_269 = arith.constant 0 : index
      %c0_270 = arith.constant 0 : index
      %516 = vector.load %arg17[%c0_269, %c0_270] : memref<2x128xf32, #tpu.memory_space<vmem>>, vector<2x128xf32>
      tpu.vector_store %arg17[%c0_269, %c0_270], %515 {strides = array<i32>} : memref<2x128xf32, #tpu.memory_space<vmem>>, vector<2x128xf32>,
    } else {
    }
    %c0 = arith.constant 0 : index
    %c0_1 = arith.constant 0 : index
    %3 = memref.load %arg8[%c0, %c0_1] : memref<1x4xf32, #tpu.memory_space<smem>>
    %c0_2 = arith.constant 0 : index
    %c1 = arith.constant 1 : index
    %4 = memref.load %arg8[%c0_2, %c1] : memref<1x4xf32, #tpu.memory_space<smem>>
    %c0_3 = arith.constant 0 : index
    %c2 = arith.constant 2 : index
    %5 = memref.load %arg8[%c0_3, %c2] : memref<1x4xf32, #tpu.memory_space<smem>>
    %c0_4 = arith.constant 0 : index
    %c3 = arith.constant 3 : index
    %6 = memref.load %arg8[%c0_4, %c3] : memref<1x4xf32, #tpu.memory_space<smem>>
    %c0_5 = arith.constant 0 : index
    %c0_6 = arith.constant 0 : index
    %7 = vector.load %arg3[%c0_5, %c0_6] : memref<1x64xf32, #tpu.memory_space<vmem>>, vector<1x64xf32>
    %c0_7 = arith.constant 0 : index
    %c0_8 = arith.constant 0 : index
    %8 = vector.load %arg5[%c0_7, %c0_8] : memref<1x256xf32, #tpu.memory_space<vmem>>, vector<1x256xf32>
    %c0_9 = arith.constant 0 : index
    %c0_10 = arith.constant 0 : index
    %9 = vector.load %arg6[%c0_9, %c0_10] : memref<256x128xf32, #tpu.memory_space<vmem>>, vector<256x128xf32>
    %c0_11 = arith.constant 0 : index
    %c0_12 = arith.constant 0 : index
    %10 = vector.load %arg7[%c0_11, %c0_12] : memref<1x128xf32, #tpu.memory_space<vmem>>, vector<1x128xf32>
    %c0_13 = arith.constant 0 : index
    %c0_14 = arith.constant 0 : index
    %11 = vector.load %arg13[%c0_13, %c0_14] : memref<14x32xf32, #tpu.memory_space<vmem>>, vector<14x32xf32>
    %c0_15 = arith.constant 0 : index
    %c0_16 = arith.constant 0 : index
    %c0_17 = arith.constant 0 : index
    %12 = vector.load %arg1[%c0_15, %c0_16, %c0_17] : memref<4x14x32xf32, #tpu.memory_space<vmem>>, vector<1x14x32xf32>
    %13 = vector.shape_cast %12 : vector<1x14x32xf32> to vector<14x32xf32>
    %14 = vector.broadcast %3 : f32 to vector<14x32xf32>
    %15 = arith.cmpf ogt, %11, %14 : vector<14x32xf32>
    %16 = arith.extui %15 : vector<14x32xi1> to vector<14x32xi32>
    %17 = arith.sitofp %16 : vector<14x32xi32> to vector<14x32xf32>
    %cst = arith.constant 5.000000e-01 : f32
    %18 = vector.broadcast %cst : f32 to vector<14x32xf32>
    %19 = arith.mulf %18, %11 : vector<14x32xf32>
    %20 = arith.addf %19, %13 : vector<14x32xf32>
    %21 = vector.broadcast %3 : f32 to vector<14x32xf32>
    %22 = arith.mulf %17, %21 : vector<14x32xf32>
    %23 = arith.subf %20, %22 : vector<14x32xf32>
    %24 = vector.broadcast %3 : f32 to vector<14x32xf32>
    %25 = arith.cmpf ogt, %23, %24 : vector<14x32xf32>
    %26 = arith.extui %25 : vector<14x32xi1> to vector<14x32xi32>
    %27 = arith.sitofp %26 : vector<14x32xi32> to vector<14x32xf32>
    %c0_18 = arith.constant 0 : index
    %c0_19 = arith.constant 0 : index
    %28 = vector.load %arg13[%c0_18, %c0_19] : memref<14x32xf32, #tpu.memory_space<vmem>>, vector<14x32xf32>
    tpu.vector_store %arg13[%c0_18, %c0_19], %23 {strides = array<i32>} : memref<14x32xf32, #tpu.memory_space<vmem>>, vector<14x32xf32>,
    %c2_20 = arith.constant 2 : index
    %c0_21 = arith.constant 0 : index
    %29 = vector.load %arg14[%c2_20, %c0_21] : memref<18x32xf32, #tpu.memory_space<vmem>>, vector<14x32xf32>
    tpu.vector_store %arg14[%c2_20, %c0_21], %27 {strides = array<i32>} : memref<18x32xf32, #tpu.memory_space<vmem>>, vector<14x32xf32>,
    %c0_22 = arith.constant 0 : index
    %c0_23 = arith.constant 0 : index
    %30 = vector.load %arg14[%c0_22, %c0_23] : memref<18x32xf32, #tpu.memory_space<vmem>>, vector<14x32xf32>
    %c0_24 = arith.constant 0 : index
    %c0_25 = arith.constant 0 : index
    %31 = vector.load %arg2[%c0_24, %c0_25] : memref<96x64xf32, #tpu.memory_space<vmem>>, vector<32x64xf32>
    %cst_26 = arith.constant dense<0.000000e+00> : vector<14x64xf32>
    %32 = tpu.matmul %30, %31, %cst_26 {dimension_numbers = #tpu.dot_dimension_numbers<[1], [0], [0], [1], [0, 0, 1, 1], [], []>} : vector<14x32xf32>, vector<32x64xf32>, vector<14x64xf32> -> vector<14x64xf32>
    %c2_27 = arith.constant 2 : index
    %c0_28 = arith.constant 0 : index
    %33 = vector.load %arg14[%c2_27, %c0_28] : memref<18x32xf32, #tpu.memory_space<vmem>>, vector<14x32xf32>
    %c32 = arith.constant 32 : index
    %c0_29 = arith.constant 0 : index
    %34 = vector.load %arg2[%c32, %c0_29] : memref<96x64xf32, #tpu.memory_space<vmem>>, vector<32x64xf32>
    %cst_30 = arith.constant dense<0.000000e+00> : vector<14x64xf32>
    %35 = tpu.matmul %33, %34, %cst_30 {dimension_numbers = #tpu.dot_dimension_numbers<[1], [0], [0], [1], [0, 0, 1, 1], [], []>} : vector<14x32xf32>, vector<32x64xf32>, vector<14x64xf32> -> vector<14x64xf32>
    %36 = arith.addf %32, %35 : vector<14x64xf32>
    %c4 = arith.constant 4 : index
    %c0_31 = arith.constant 0 : index
    %37 = vector.load %arg14[%c4, %c0_31] : memref<18x32xf32, #tpu.memory_space<vmem>>, vector<14x32xf32>
    %c64 = arith.constant 64 : index
    %c0_32 = arith.constant 0 : index
    %38 = vector.load %arg2[%c64, %c0_32] : memref<96x64xf32, #tpu.memory_space<vmem>>, vector<32x64xf32>
    %cst_33 = arith.constant dense<0.000000e+00> : vector<14x64xf32>
    %39 = tpu.matmul %37, %38, %cst_33 {dimension_numbers = #tpu.dot_dimension_numbers<[1], [0], [0], [1], [0, 0, 1, 1], [], []>} : vector<14x32xf32>, vector<32x64xf32>, vector<14x64xf32> -> vector<14x64xf32>
    %40 = arith.addf %36, %39 : vector<14x64xf32>
    %41 = vector.broadcast %7 : vector<1x64xf32> to vector<14x64xf32>
    %42 = arith.addf %40, %41 : vector<14x64xf32>
    %43 = vector.extract_strided_slice %42 {offsets = [0, 0], sizes = [2, 64], strides = [1, 1]} : vector<14x64xf32> to vector<2x64xf32>
    %44 = vector.extract_strided_slice %42 {offsets = [2, 0], sizes = [2, 64], strides = [1, 1]} : vector<14x64xf32> to vector<2x64xf32>
    %45 = arith.maximumf %43, %44 : vector<2x64xf32>
    %46 = vector.extract_strided_slice %42 {offsets = [4, 0], sizes = [2, 64], strides = [1, 1]} : vector<14x64xf32> to vector<2x64xf32>
    %47 = arith.maximumf %45, %46 : vector<2x64xf32>
    %48 = vector.extract_strided_slice %42 {offsets = [4, 0], sizes = [2, 64], strides = [1, 1]} : vector<14x64xf32> to vector<2x64xf32>
    %49 = vector.extract_strided_slice %42 {offsets = [6, 0], sizes = [2, 64], strides = [1, 1]} : vector<14x64xf32> to vector<2x64xf32>
    %50 = arith.maximumf %48, %49 : vector<2x64xf32>
    %51 = vector.extract_strided_slice %42 {offsets = [8, 0], sizes = [2, 64], strides = [1, 1]} : vector<14x64xf32> to vector<2x64xf32>
    %52 = arith.maximumf %50, %51 : vector<2x64xf32>
    %53 = vector.extract_strided_slice %42 {offsets = [8, 0], sizes = [2, 64], strides = [1, 1]} : vector<14x64xf32> to vector<2x64xf32>
    %54 = vector.extract_strided_slice %42 {offsets = [10, 0], sizes = [2, 64], strides = [1, 1]} : vector<14x64xf32> to vector<2x64xf32>
    %55 = arith.maximumf %53, %54 : vector<2x64xf32>
    %56 = vector.extract_strided_slice %42 {offsets = [12, 0], sizes = [2, 64], strides = [1, 1]} : vector<14x64xf32> to vector<2x64xf32>
    %57 = arith.maximumf %55, %56 : vector<2x64xf32>
    %58 = tpu.concatenate %47, %52, %57 in 0 : vector<2x64xf32>, vector<2x64xf32>, vector<2x64xf32> -> vector<6x64xf32>
    %c0_34 = arith.constant 0 : index
    %c0_35 = arith.constant 0 : index
    %59 = vector.load %arg15[%c0_34, %c0_35] : memref<6x64xf32, #tpu.memory_space<vmem>>, vector<6x64xf32>
    %60 = vector.broadcast %4 : f32 to vector<6x64xf32>
    %61 = arith.cmpf ogt, %59, %60 : vector<6x64xf32>
    %62 = arith.extui %61 : vector<6x64xi1> to vector<6x64xi32>
    %63 = arith.sitofp %62 : vector<6x64xi32> to vector<6x64xf32>
    %cst_36 = arith.constant 5.000000e-01 : f32
    %64 = vector.broadcast %cst_36 : f32 to vector<6x64xf32>
    %65 = arith.mulf %64, %59 : vector<6x64xf32>
    %66 = arith.addf %65, %58 : vector<6x64xf32>
    %67 = vector.broadcast %4 : f32 to vector<6x64xf32>
    %68 = arith.mulf %63, %67 : vector<6x64xf32>
    %69 = arith.subf %66, %68 : vector<6x64xf32>
    %70 = vector.broadcast %4 : f32 to vector<6x64xf32>
    %71 = arith.cmpf ogt, %69, %70 : vector<6x64xf32>
    %72 = arith.extui %71 : vector<6x64xi1> to vector<6x64xi32>
    %73 = arith.sitofp %72 : vector<6x64xi32> to vector<6x64xf32>
    %c0_37 = arith.constant 0 : index
    %c0_38 = arith.constant 0 : index
    %74 = vector.load %arg15[%c0_37, %c0_38] : memref<6x64xf32, #tpu.memory_space<vmem>>, vector<6x64xf32>
    tpu.vector_store %arg15[%c0_37, %c0_38], %69 {strides = array<i32>} : memref<6x64xf32, #tpu.memory_space<vmem>>, vector<6x64xf32>,
    %75 = vector.extract_strided_slice %73 {offsets = [0, 0], sizes = [2, 64], strides = [1, 1]} : vector<6x64xf32> to vector<2x64xf32>
    %c0_39 = arith.constant 0 : index
    %c0_40 = arith.constant 0 : index
    %76 = vector.load %arg4[%c0_39, %c0_40] : memref<192x256xf32, #tpu.memory_space<vmem>>, vector<64x256xf32>
    %cst_41 = arith.constant dense<0.000000e+00> : vector<2x256xf32>
    %77 = tpu.matmul %75, %76, %cst_41 {dimension_numbers = #tpu.dot_dimension_numbers<[1], [0], [0], [1], [0, 0, 1, 1], [], []>} : vector<2x64xf32>, vector<64x256xf32>, vector<2x256xf32> -> vector<2x256xf32>
    %78 = vector.extract_strided_slice %73 {offsets = [2, 0], sizes = [2, 64], strides = [1, 1]} : vector<6x64xf32> to vector<2x64xf32>
    %c64_42 = arith.constant 64 : index
    %c0_43 = arith.constant 0 : index
    %79 = vector.load %arg4[%c64_42, %c0_43] : memref<192x256xf32, #tpu.memory_space<vmem>>, vector<64x256xf32>
    %cst_44 = arith.constant dense<0.000000e+00> : vector<2x256xf32>
    %80 = tpu.matmul %78, %79, %cst_44 {dimension_numbers = #tpu.dot_dimension_numbers<[1], [0], [0], [1], [0, 0, 1, 1], [], []>} : vector<2x64xf32>, vector<64x256xf32>, vector<2x256xf32> -> vector<2x256xf32>
    %81 = arith.addf %77, %80 : vector<2x256xf32>
    %82 = vector.extract_strided_slice %73 {offsets = [4, 0], sizes = [2, 64], strides = [1, 1]} : vector<6x64xf32> to vector<2x64xf32>
    %c128 = arith.constant 128 : index
    %c0_45 = arith.constant 0 : index
    %83 = vector.load %arg4[%c128, %c0_45] : memref<192x256xf32, #tpu.memory_space<vmem>>, vector<64x256xf32>
    %cst_46 = arith.constant dense<0.000000e+00> : vector<2x256xf32>
    %84 = tpu.matmul %82, %83, %cst_46 {dimension_numbers = #tpu.dot_dimension_numbers<[1], [0], [0], [1], [0, 0, 1, 1], [], []>} : vector<2x64xf32>, vector<64x256xf32>, vector<2x256xf32> -> vector<2x256xf32>
    %85 = arith.addf %81, %84 : vector<2x256xf32>
    %86 = vector.broadcast %8 : vector<1x256xf32> to vector<2x256xf32>
    %87 = arith.addf %85, %86 : vector<2x256xf32>
    %c0_47 = arith.constant 0 : index
    %c0_48 = arith.constant 0 : index
    %88 = vector.load %arg16[%c0_47, %c0_48] : memref<2x256xf32, #tpu.memory_space<vmem>>, vector<2x256xf32>
    %89 = vector.broadcast %5 : f32 to vector<2x256xf32>
    %90 = arith.cmpf ogt, %88, %89 : vector<2x256xf32>
    %91 = arith.extui %90 : vector<2x256xi1> to vector<2x256xi32>
    %92 = arith.sitofp %91 : vector<2x256xi32> to vector<2x256xf32>
    %cst_49 = arith.constant 5.000000e-01 : f32
    %93 = vector.broadcast %cst_49 : f32 to vector<2x256xf32>
    %94 = arith.mulf %93, %88 : vector<2x256xf32>
    %95 = arith.addf %94, %87 : vector<2x256xf32>
    %96 = vector.broadcast %5 : f32 to vector<2x256xf32>
    %97 = arith.mulf %92, %96 : vector<2x256xf32>
    %98 = arith.subf %95, %97 : vector<2x256xf32>
    %99 = vector.broadcast %5 : f32 to vector<2x256xf32>
    %100 = arith.cmpf ogt, %98, %99 : vector<2x256xf32>
    %101 = arith.extui %100 : vector<2x256xi1> to vector<2x256xi32>
    %102 = arith.sitofp %101 : vector<2x256xi32> to vector<2x256xf32>
    %c0_50 = arith.constant 0 : index
    %c0_51 = arith.constant 0 : index
    %103 = vector.load %arg16[%c0_50, %c0_51] : memref<2x256xf32, #tpu.memory_space<vmem>>, vector<2x256xf32>
    tpu.vector_store %arg16[%c0_50, %c0_51], %98 {strides = array<i32>} : memref<2x256xf32, #tpu.memory_space<vmem>>, vector<2x256xf32>,
    %c0_52 = arith.constant 0 : index
    %c0_53 = arith.constant 0 : index
    %c0_54 = arith.constant 0 : index
    %104 = vector.load %arg9[%c0_52, %c0_53, %c0_54] : memref<4x2x256xf32, #tpu.memory_space<vmem>>, vector<1x2x256xf32>
    %105 = vector.shape_cast %104 : vector<1x2x256xf32> to vector<2x256xf32>
    %106 = vector.shape_cast %102 : vector<2x256xf32> to vector<1x2x256xf32>
    tpu.vector_store %arg9[%c0_52, %c0_53, %c0_54], %106 {strides = array<i32>} : memref<4x2x256xf32, #tpu.memory_space<vmem>>, vector<1x2x256xf32>,
    %c0_55 = arith.constant 0 : index
    %c0_56 = arith.constant 0 : index
    %c0_57 = arith.constant 0 : index
    %107 = vector.load %arg10[%c0_55, %c0_56, %c0_57] : memref<4x2x256xf32, #tpu.memory_space<vmem>>, vector<1x2x256xf32>
    %108 = vector.shape_cast %107 : vector<1x2x256xf32> to vector<2x256xf32>
    %109 = vector.shape_cast %98 : vector<2x256xf32> to vector<1x2x256xf32>
    tpu.vector_store %arg10[%c0_55, %c0_56, %c0_57], %109 {strides = array<i32>} : memref<4x2x256xf32, #tpu.memory_space<vmem>>, vector<1x2x256xf32>,
    %cst_58 = arith.constant dense<0.000000e+00> : vector<2x128xf32>
    %110 = tpu.matmul %102, %9, %cst_58 {dimension_numbers = #tpu.dot_dimension_numbers<[1], [0], [0], [1], [0, 0, 1, 1], [], []>} : vector<2x256xf32>, vector<256x128xf32>, vector<2x128xf32> -> vector<2x128xf32>
    %111 = vector.broadcast %10 : vector<1x128xf32> to vector<2x128xf32>
    %112 = arith.addf %110, %111 : vector<2x128xf32>
    %c0_59 = arith.constant 0 : index
    %c0_60 = arith.constant 0 : index
    %113 = vector.load %arg17[%c0_59, %c0_60] : memref<2x128xf32, #tpu.memory_space<vmem>>, vector<2x128xf32>
    %114 = vector.broadcast %6 : f32 to vector<2x128xf32>
    %115 = arith.cmpf ogt, %113, %114 : vector<2x128xf32>
    %116 = arith.extui %115 : vector<2x128xi1> to vector<2x128xi32>
    %117 = arith.sitofp %116 : vector<2x128xi32> to vector<2x128xf32>
    %cst_61 = arith.constant 5.000000e-01 : f32
    %118 = vector.broadcast %cst_61 : f32 to vector<2x128xf32>
    %119 = arith.mulf %118, %113 : vector<2x128xf32>
    %120 = arith.addf %119, %112 : vector<2x128xf32>
    %121 = vector.broadcast %6 : f32 to vector<2x128xf32>
    %122 = arith.mulf %117, %121 : vector<2x128xf32>
    %123 = arith.subf %120, %122 : vector<2x128xf32>
    %124 = vector.broadcast %6 : f32 to vector<2x128xf32>
    %125 = arith.cmpf ogt, %123, %124 : vector<2x128xf32>
    %126 = arith.extui %125 : vector<2x128xi1> to vector<2x128xi32>
    %127 = arith.sitofp %126 : vector<2x128xi32> to vector<2x128xf32>
    %c0_62 = arith.constant 0 : index
    %c0_63 = arith.constant 0 : index
    %128 = vector.load %arg17[%c0_62, %c0_63] : memref<2x128xf32, #tpu.memory_space<vmem>>, vector<2x128xf32>
    tpu.vector_store %arg17[%c0_62, %c0_63], %123 {strides = array<i32>} : memref<2x128xf32, #tpu.memory_space<vmem>>, vector<2x128xf32>,
    %c0_64 = arith.constant 0 : index
    %c0_65 = arith.constant 0 : index
    %c0_66 = arith.constant 0 : index
    %129 = vector.load %arg11[%c0_64, %c0_65, %c0_66] : memref<4x2x128xf32, #tpu.memory_space<vmem>>, vector<1x2x128xf32>
    %130 = vector.shape_cast %129 : vector<1x2x128xf32> to vector<2x128xf32>
    %131 = vector.shape_cast %127 : vector<2x128xf32> to vector<1x2x128xf32>
    tpu.vector_store %arg11[%c0_64, %c0_65, %c0_66], %131 {strides = array<i32>} : memref<4x2x128xf32, #tpu.memory_space<vmem>>, vector<1x2x128xf32>,
    %c0_67 = arith.constant 0 : index
    %c0_68 = arith.constant 0 : index
    %c0_69 = arith.constant 0 : index
    %132 = vector.load %arg12[%c0_67, %c0_68, %c0_69] : memref<4x2x128xf32, #tpu.memory_space<vmem>>, vector<1x2x128xf32>
    %133 = vector.shape_cast %132 : vector<1x2x128xf32> to vector<2x128xf32>
    %134 = vector.shape_cast %123 : vector<2x128xf32> to vector<1x2x128xf32>
    tpu.vector_store %arg12[%c0_67, %c0_68, %c0_69], %134 {strides = array<i32>} : memref<4x2x128xf32, #tpu.memory_space<vmem>>, vector<1x2x128xf32>,
    %c0_70 = arith.constant 0 : index
    %c0_71 = arith.constant 0 : index
    %135 = vector.load %arg13[%c0_70, %c0_71] : memref<14x32xf32, #tpu.memory_space<vmem>>, vector<14x32xf32>
    %c1_72 = arith.constant 1 : index
    %c0_73 = arith.constant 0 : index
    %c0_74 = arith.constant 0 : index
    %136 = vector.load %arg1[%c1_72, %c0_73, %c0_74] : memref<4x14x32xf32, #tpu.memory_space<vmem>>, vector<1x14x32xf32>
    %137 = vector.shape_cast %136 : vector<1x14x32xf32> to vector<14x32xf32>
    %138 = vector.broadcast %3 : f32 to vector<14x32xf32>
    %139 = arith.cmpf ogt, %135, %138 : vector<14x32xf32>
    %140 = arith.extui %139 : vector<14x32xi1> to vector<14x32xi32>
    %141 = arith.sitofp %140 : vector<14x32xi32> to vector<14x32xf32>
    %cst_75 = arith.constant 5.000000e-01 : f32
    %142 = vector.broadcast %cst_75 : f32 to vector<14x32xf32>
    %143 = arith.mulf %142, %135 : vector<14x32xf32>
    %144 = arith.addf %143, %137 : vector<14x32xf32>
    %145 = vector.broadcast %3 : f32 to vector<14x32xf32>
    %146 = arith.mulf %141, %145 : vector<14x32xf32>
    %147 = arith.subf %144, %146 : vector<14x32xf32>
    %148 = vector.broadcast %3 : f32 to vector<14x32xf32>
    %149 = arith.cmpf ogt, %147, %148 : vector<14x32xf32>
    %150 = arith.extui %149 : vector<14x32xi1> to vector<14x32xi32>
    %151 = arith.sitofp %150 : vector<14x32xi32> to vector<14x32xf32>
    %c0_76 = arith.constant 0 : index
    %c0_77 = arith.constant 0 : index
    %152 = vector.load %arg13[%c0_76, %c0_77] : memref<14x32xf32, #tpu.memory_space<vmem>>, vector<14x32xf32>
    tpu.vector_store %arg13[%c0_76, %c0_77], %147 {strides = array<i32>} : memref<14x32xf32, #tpu.memory_space<vmem>>, vector<14x32xf32>,
    %c2_78 = arith.constant 2 : index
    %c0_79 = arith.constant 0 : index
    %153 = vector.load %arg14[%c2_78, %c0_79] : memref<18x32xf32, #tpu.memory_space<vmem>>, vector<14x32xf32>
    tpu.vector_store %arg14[%c2_78, %c0_79], %151 {strides = array<i32>} : memref<18x32xf32, #tpu.memory_space<vmem>>, vector<14x32xf32>,
    %c0_80 = arith.constant 0 : index
    %c0_81 = arith.constant 0 : index
    %154 = vector.load %arg14[%c0_80, %c0_81] : memref<18x32xf32, #tpu.memory_space<vmem>>, vector<14x32xf32>
    %c0_82 = arith.constant 0 : index
    %c0_83 = arith.constant 0 : index
    %155 = vector.load %arg2[%c0_82, %c0_83] : memref<96x64xf32, #tpu.memory_space<vmem>>, vector<32x64xf32>
    %cst_84 = arith.constant dense<0.000000e+00> : vector<14x64xf32>
    %156 = tpu.matmul %154, %155, %cst_84 {dimension_numbers = #tpu.dot_dimension_numbers<[1], [0], [0], [1], [0, 0, 1, 1], [], []>} : vector<14x32xf32>, vector<32x64xf32>, vector<14x64xf32> -> vector<14x64xf32>
    %c2_85 = arith.constant 2 : index
    %c0_86 = arith.constant 0 : index
    %157 = vector.load %arg14[%c2_85, %c0_86] : memref<18x32xf32, #tpu.memory_space<vmem>>, vector<14x32xf32>
    %c32_87 = arith.constant 32 : index
    %c0_88 = arith.constant 0 : index
    %158 = vector.load %arg2[%c32_87, %c0_88] : memref<96x64xf32, #tpu.memory_space<vmem>>, vector<32x64xf32>
    %cst_89 = arith.constant dense<0.000000e+00> : vector<14x64xf32>
    %159 = tpu.matmul %157, %158, %cst_89 {dimension_numbers = #tpu.dot_dimension_numbers<[1], [0], [0], [1], [0, 0, 1, 1], [], []>} : vector<14x32xf32>, vector<32x64xf32>, vector<14x64xf32> -> vector<14x64xf32>
    %160 = arith.addf %156, %159 : vector<14x64xf32>
    %c4_90 = arith.constant 4 : index
    %c0_91 = arith.constant 0 : index
    %161 = vector.load %arg14[%c4_90, %c0_91] : memref<18x32xf32, #tpu.memory_space<vmem>>, vector<14x32xf32>
    %c64_92 = arith.constant 64 : index
    %c0_93 = arith.constant 0 : index
    %162 = vector.load %arg2[%c64_92, %c0_93] : memref<96x64xf32, #tpu.memory_space<vmem>>, vector<32x64xf32>
    %cst_94 = arith.constant dense<0.000000e+00> : vector<14x64xf32>
    %163 = tpu.matmul %161, %162, %cst_94 {dimension_numbers = #tpu.dot_dimension_numbers<[1], [0], [0], [1], [0, 0, 1, 1], [], []>} : vector<14x32xf32>, vector<32x64xf32>, vector<14x64xf32> -> vector<14x64xf32>
    %164 = arith.addf %160, %163 : vector<14x64xf32>
    %165 = vector.broadcast %7 : vector<1x64xf32> to vector<14x64xf32>
    %166 = arith.addf %164, %165 : vector<14x64xf32>
    %167 = vector.extract_strided_slice %166 {offsets = [0, 0], sizes = [2, 64], strides = [1, 1]} : vector<14x64xf32> to vector<2x64xf32>
    %168 = vector.extract_strided_slice %166 {offsets = [2, 0], sizes = [2, 64], strides = [1, 1]} : vector<14x64xf32> to vector<2x64xf32>
    %169 = arith.maximumf %167, %168 : vector<2x64xf32>
    %170 = vector.extract_strided_slice %166 {offsets = [4, 0], sizes = [2, 64], strides = [1, 1]} : vector<14x64xf32> to vector<2x64xf32>
    %171 = arith.maximumf %169, %170 : vector<2x64xf32>
    %172 = vector.extract_strided_slice %166 {offsets = [4, 0], sizes = [2, 64], strides = [1, 1]} : vector<14x64xf32> to vector<2x64xf32>
    %173 = vector.extract_strided_slice %166 {offsets = [6, 0], sizes = [2, 64], strides = [1, 1]} : vector<14x64xf32> to vector<2x64xf32>
    %174 = arith.maximumf %172, %173 : vector<2x64xf32>
    %175 = vector.extract_strided_slice %166 {offsets = [8, 0], sizes = [2, 64], strides = [1, 1]} : vector<14x64xf32> to vector<2x64xf32>
    %176 = arith.maximumf %174, %175 : vector<2x64xf32>
    %177 = vector.extract_strided_slice %166 {offsets = [8, 0], sizes = [2, 64], strides = [1, 1]} : vector<14x64xf32> to vector<2x64xf32>
    %178 = vector.extract_strided_slice %166 {offsets = [10, 0], sizes = [2, 64], strides = [1, 1]} : vector<14x64xf32> to vector<2x64xf32>
    %179 = arith.maximumf %177, %178 : vector<2x64xf32>
    %180 = vector.extract_strided_slice %166 {offsets = [12, 0], sizes = [2, 64], strides = [1, 1]} : vector<14x64xf32> to vector<2x64xf32>
    %181 = arith.maximumf %179, %180 : vector<2x64xf32>
    %182 = tpu.concatenate %171, %176, %181 in 0 : vector<2x64xf32>, vector<2x64xf32>, vector<2x64xf32> -> vector<6x64xf32>
    %c0_95 = arith.constant 0 : index
    %c0_96 = arith.constant 0 : index
    %183 = vector.load %arg15[%c0_95, %c0_96] : memref<6x64xf32, #tpu.memory_space<vmem>>, vector<6x64xf32>
    %184 = vector.broadcast %4 : f32 to vector<6x64xf32>
    %185 = arith.cmpf ogt, %183, %184 : vector<6x64xf32>
    %186 = arith.extui %185 : vector<6x64xi1> to vector<6x64xi32>
    %187 = arith.sitofp %186 : vector<6x64xi32> to vector<6x64xf32>
    %cst_97 = arith.constant 5.000000e-01 : f32
    %188 = vector.broadcast %cst_97 : f32 to vector<6x64xf32>
    %189 = arith.mulf %188, %183 : vector<6x64xf32>
    %190 = arith.addf %189, %182 : vector<6x64xf32>
    %191 = vector.broadcast %4 : f32 to vector<6x64xf32>
    %192 = arith.mulf %187, %191 : vector<6x64xf32>
    %193 = arith.subf %190, %192 : vector<6x64xf32>
    %194 = vector.broadcast %4 : f32 to vector<6x64xf32>
    %195 = arith.cmpf ogt, %193, %194 : vector<6x64xf32>
    %196 = arith.extui %195 : vector<6x64xi1> to vector<6x64xi32>
    %197 = arith.sitofp %196 : vector<6x64xi32> to vector<6x64xf32>
    %c0_98 = arith.constant 0 : index
    %c0_99 = arith.constant 0 : index
    %198 = vector.load %arg15[%c0_98, %c0_99] : memref<6x64xf32, #tpu.memory_space<vmem>>, vector<6x64xf32>
    tpu.vector_store %arg15[%c0_98, %c0_99], %193 {strides = array<i32>} : memref<6x64xf32, #tpu.memory_space<vmem>>, vector<6x64xf32>,
    %199 = vector.extract_strided_slice %197 {offsets = [0, 0], sizes = [2, 64], strides = [1, 1]} : vector<6x64xf32> to vector<2x64xf32>
    %c0_100 = arith.constant 0 : index
    %c0_101 = arith.constant 0 : index
    %200 = vector.load %arg4[%c0_100, %c0_101] : memref<192x256xf32, #tpu.memory_space<vmem>>, vector<64x256xf32>
    %cst_102 = arith.constant dense<0.000000e+00> : vector<2x256xf32>
    %201 = tpu.matmul %199, %200, %cst_102 {dimension_numbers = #tpu.dot_dimension_numbers<[1], [0], [0], [1], [0, 0, 1, 1], [], []>} : vector<2x64xf32>, vector<64x256xf32>, vector<2x256xf32> -> vector<2x256xf32>
    %202 = vector.extract_strided_slice %197 {offsets = [2, 0], sizes = [2, 64], strides = [1, 1]} : vector<6x64xf32> to vector<2x64xf32>
    %c64_103 = arith.constant 64 : index
    %c0_104 = arith.constant 0 : index
    %203 = vector.load %arg4[%c64_103, %c0_104] : memref<192x256xf32, #tpu.memory_space<vmem>>, vector<64x256xf32>
    %cst_105 = arith.constant dense<0.000000e+00> : vector<2x256xf32>
    %204 = tpu.matmul %202, %203, %cst_105 {dimension_numbers = #tpu.dot_dimension_numbers<[1], [0], [0], [1], [0, 0, 1, 1], [], []>} : vector<2x64xf32>, vector<64x256xf32>, vector<2x256xf32> -> vector<2x256xf32>
    %205 = arith.addf %201, %204 : vector<2x256xf32>
    %206 = vector.extract_strided_slice %197 {offsets = [4, 0], sizes = [2, 64], strides = [1, 1]} : vector<6x64xf32> to vector<2x64xf32>
    %c128_106 = arith.constant 128 : index
    %c0_107 = arith.constant 0 : index
    %207 = vector.load %arg4[%c128_106, %c0_107] : memref<192x256xf32, #tpu.memory_space<vmem>>, vector<64x256xf32>
    %cst_108 = arith.constant dense<0.000000e+00> : vector<2x256xf32>
    %208 = tpu.matmul %206, %207, %cst_108 {dimension_numbers = #tpu.dot_dimension_numbers<[1], [0], [0], [1], [0, 0, 1, 1], [], []>} : vector<2x64xf32>, vector<64x256xf32>, vector<2x256xf32> -> vector<2x256xf32>
    %209 = arith.addf %205, %208 : vector<2x256xf32>
    %210 = vector.broadcast %8 : vector<1x256xf32> to vector<2x256xf32>
    %211 = arith.addf %209, %210 : vector<2x256xf32>
    %c0_109 = arith.constant 0 : index
    %c0_110 = arith.constant 0 : index
    %212 = vector.load %arg16[%c0_109, %c0_110] : memref<2x256xf32, #tpu.memory_space<vmem>>, vector<2x256xf32>
    %213 = vector.broadcast %5 : f32 to vector<2x256xf32>
    %214 = arith.cmpf ogt, %212, %213 : vector<2x256xf32>
    %215 = arith.extui %214 : vector<2x256xi1> to vector<2x256xi32>
    %216 = arith.sitofp %215 : vector<2x256xi32> to vector<2x256xf32>
    %cst_111 = arith.constant 5.000000e-01 : f32
    %217 = vector.broadcast %cst_111 : f32 to vector<2x256xf32>
    %218 = arith.mulf %217, %212 : vector<2x256xf32>
    %219 = arith.addf %218, %211 : vector<2x256xf32>
    %220 = vector.broadcast %5 : f32 to vector<2x256xf32>
    %221 = arith.mulf %216, %220 : vector<2x256xf32>
    %222 = arith.subf %219, %221 : vector<2x256xf32>
    %223 = vector.broadcast %5 : f32 to vector<2x256xf32>
    %224 = arith.cmpf ogt, %222, %223 : vector<2x256xf32>
    %225 = arith.extui %224 : vector<2x256xi1> to vector<2x256xi32>
    %226 = arith.sitofp %225 : vector<2x256xi32> to vector<2x256xf32>
    %c0_112 = arith.constant 0 : index
    %c0_113 = arith.constant 0 : index
    %227 = vector.load %arg16[%c0_112, %c0_113] : memref<2x256xf32, #tpu.memory_space<vmem>>, vector<2x256xf32>
    tpu.vector_store %arg16[%c0_112, %c0_113], %222 {strides = array<i32>} : memref<2x256xf32, #tpu.memory_space<vmem>>, vector<2x256xf32>,
    %c1_114 = arith.constant 1 : index
    %c0_115 = arith.constant 0 : index
    %c0_116 = arith.constant 0 : index
    %228 = vector.load %arg9[%c1_114, %c0_115, %c0_116] : memref<4x2x256xf32, #tpu.memory_space<vmem>>, vector<1x2x256xf32>
    %229 = vector.shape_cast %228 : vector<1x2x256xf32> to vector<2x256xf32>
    %230 = vector.shape_cast %226 : vector<2x256xf32> to vector<1x2x256xf32>
    tpu.vector_store %arg9[%c1_114, %c0_115, %c0_116], %230 {strides = array<i32>} : memref<4x2x256xf32, #tpu.memory_space<vmem>>, vector<1x2x256xf32>,
    %c1_117 = arith.constant 1 : index
    %c0_118 = arith.constant 0 : index
    %c0_119 = arith.constant 0 : index
    %231 = vector.load %arg10[%c1_117, %c0_118, %c0_119] : memref<4x2x256xf32, #tpu.memory_space<vmem>>, vector<1x2x256xf32>
    %232 = vector.shape_cast %231 : vector<1x2x256xf32> to vector<2x256xf32>
    %233 = vector.shape_cast %222 : vector<2x256xf32> to vector<1x2x256xf32>
    tpu.vector_store %arg10[%c1_117, %c0_118, %c0_119], %233 {strides = array<i32>} : memref<4x2x256xf32, #tpu.memory_space<vmem>>, vector<1x2x256xf32>,
    %cst_120 = arith.constant dense<0.000000e+00> : vector<2x128xf32>
    %234 = tpu.matmul %226, %9, %cst_120 {dimension_numbers = #tpu.dot_dimension_numbers<[1], [0], [0], [1], [0, 0, 1, 1], [], []>} : vector<2x256xf32>, vector<256x128xf32>, vector<2x128xf32> -> vector<2x128xf32>
    %235 = vector.broadcast %10 : vector<1x128xf32> to vector<2x128xf32>
    %236 = arith.addf %234, %235 : vector<2x128xf32>
    %c0_121 = arith.constant 0 : index
    %c0_122 = arith.constant 0 : index
    %237 = vector.load %arg17[%c0_121, %c0_122] : memref<2x128xf32, #tpu.memory_space<vmem>>, vector<2x128xf32>
    %238 = vector.broadcast %6 : f32 to vector<2x128xf32>
    %239 = arith.cmpf ogt, %237, %238 : vector<2x128xf32>
    %240 = arith.extui %239 : vector<2x128xi1> to vector<2x128xi32>
    %241 = arith.sitofp %240 : vector<2x128xi32> to vector<2x128xf32>
    %cst_123 = arith.constant 5.000000e-01 : f32
    %242 = vector.broadcast %cst_123 : f32 to vector<2x128xf32>
    %243 = arith.mulf %242, %237 : vector<2x128xf32>
    %244 = arith.addf %243, %236 : vector<2x128xf32>
    %245 = vector.broadcast %6 : f32 to vector<2x128xf32>
    %246 = arith.mulf %241, %245 : vector<2x128xf32>
    %247 = arith.subf %244, %246 : vector<2x128xf32>
    %248 = vector.broadcast %6 : f32 to vector<2x128xf32>
    %249 = arith.cmpf ogt, %247, %248 : vector<2x128xf32>
    %250 = arith.extui %249 : vector<2x128xi1> to vector<2x128xi32>
    %251 = arith.sitofp %250 : vector<2x128xi32> to vector<2x128xf32>
    %c0_124 = arith.constant 0 : index
    %c0_125 = arith.constant 0 : index
    %252 = vector.load %arg17[%c0_124, %c0_125] : memref<2x128xf32, #tpu.memory_space<vmem>>, vector<2x128xf32>
    tpu.vector_store %arg17[%c0_124, %c0_125], %247 {strides = array<i32>} : memref<2x128xf32, #tpu.memory_space<vmem>>, vector<2x128xf32>,
    %c1_126 = arith.constant 1 : index
    %c0_127 = arith.constant 0 : index
    %c0_128 = arith.constant 0 : index
    %253 = vector.load %arg11[%c1_126, %c0_127, %c0_128] : memref<4x2x128xf32, #tpu.memory_space<vmem>>, vector<1x2x128xf32>
    %254 = vector.shape_cast %253 : vector<1x2x128xf32> to vector<2x128xf32>
    %255 = vector.shape_cast %251 : vector<2x128xf32> to vector<1x2x128xf32>
    tpu.vector_store %arg11[%c1_126, %c0_127, %c0_128], %255 {strides = array<i32>} : memref<4x2x128xf32, #tpu.memory_space<vmem>>, vector<1x2x128xf32>,
    %c1_129 = arith.constant 1 : index
    %c0_130 = arith.constant 0 : index
    %c0_131 = arith.constant 0 : index
    %256 = vector.load %arg12[%c1_129, %c0_130, %c0_131] : memref<4x2x128xf32, #tpu.memory_space<vmem>>, vector<1x2x128xf32>
    %257 = vector.shape_cast %256 : vector<1x2x128xf32> to vector<2x128xf32>
    %258 = vector.shape_cast %247 : vector<2x128xf32> to vector<1x2x128xf32>
    tpu.vector_store %arg12[%c1_129, %c0_130, %c0_131], %258 {strides = array<i32>} : memref<4x2x128xf32, #tpu.memory_space<vmem>>, vector<1x2x128xf32>,
    %c0_132 = arith.constant 0 : index
    %c0_133 = arith.constant 0 : index
    %259 = vector.load %arg13[%c0_132, %c0_133] : memref<14x32xf32, #tpu.memory_space<vmem>>, vector<14x32xf32>
    %c2_134 = arith.constant 2 : index
    %c0_135 = arith.constant 0 : index
    %c0_136 = arith.constant 0 : index
    %260 = vector.load %arg1[%c2_134, %c0_135, %c0_136] : memref<4x14x32xf32, #tpu.memory_space<vmem>>, vector<1x14x32xf32>
    %261 = vector.shape_cast %260 : vector<1x14x32xf32> to vector<14x32xf32>
    %262 = vector.broadcast %3 : f32 to vector<14x32xf32>
    %263 = arith.cmpf ogt, %259, %262 : vector<14x32xf32>
    %264 = arith.extui %263 : vector<14x32xi1> to vector<14x32xi32>
    %265 = arith.sitofp %264 : vector<14x32xi32> to vector<14x32xf32>
    %cst_137 = arith.constant 5.000000e-01 : f32
    %266 = vector.broadcast %cst_137 : f32 to vector<14x32xf32>
    %267 = arith.mulf %266, %259 : vector<14x32xf32>
    %268 = arith.addf %267, %261 : vector<14x32xf32>
    %269 = vector.broadcast %3 : f32 to vector<14x32xf32>
    %270 = arith.mulf %265, %269 : vector<14x32xf32>
    %271 = arith.subf %268, %270 : vector<14x32xf32>
    %272 = vector.broadcast %3 : f32 to vector<14x32xf32>
    %273 = arith.cmpf ogt, %271, %272 : vector<14x32xf32>
    %274 = arith.extui %273 : vector<14x32xi1> to vector<14x32xi32>
    %275 = arith.sitofp %274 : vector<14x32xi32> to vector<14x32xf32>
    %c0_138 = arith.constant 0 : index
    %c0_139 = arith.constant 0 : index
    %276 = vector.load %arg13[%c0_138, %c0_139] : memref<14x32xf32, #tpu.memory_space<vmem>>, vector<14x32xf32>
    tpu.vector_store %arg13[%c0_138, %c0_139], %271 {strides = array<i32>} : memref<14x32xf32, #tpu.memory_space<vmem>>, vector<14x32xf32>,
    %c2_140 = arith.constant 2 : index
    %c0_141 = arith.constant 0 : index
    %277 = vector.load %arg14[%c2_140, %c0_141] : memref<18x32xf32, #tpu.memory_space<vmem>>, vector<14x32xf32>
    tpu.vector_store %arg14[%c2_140, %c0_141], %275 {strides = array<i32>} : memref<18x32xf32, #tpu.memory_space<vmem>>, vector<14x32xf32>,
    %c0_142 = arith.constant 0 : index
    %c0_143 = arith.constant 0 : index
    %278 = vector.load %arg14[%c0_142, %c0_143] : memref<18x32xf32, #tpu.memory_space<vmem>>, vector<14x32xf32>
    %c0_144 = arith.constant 0 : index
    %c0_145 = arith.constant 0 : index
    %279 = vector.load %arg2[%c0_144, %c0_145] : memref<96x64xf32, #tpu.memory_space<vmem>>, vector<32x64xf32>
    %cst_146 = arith.constant dense<0.000000e+00> : vector<14x64xf32>
    %280 = tpu.matmul %278, %279, %cst_146 {dimension_numbers = #tpu.dot_dimension_numbers<[1], [0], [0], [1], [0, 0, 1, 1], [], []>} : vector<14x32xf32>, vector<32x64xf32>, vector<14x64xf32> -> vector<14x64xf32>
    %c2_147 = arith.constant 2 : index
    %c0_148 = arith.constant 0 : index
    %281 = vector.load %arg14[%c2_147, %c0_148] : memref<18x32xf32, #tpu.memory_space<vmem>>, vector<14x32xf32>
    %c32_149 = arith.constant 32 : index
    %c0_150 = arith.constant 0 : index
    %282 = vector.load %arg2[%c32_149, %c0_150] : memref<96x64xf32, #tpu.memory_space<vmem>>, vector<32x64xf32>
    %cst_151 = arith.constant dense<0.000000e+00> : vector<14x64xf32>
    %283 = tpu.matmul %281, %282, %cst_151 {dimension_numbers = #tpu.dot_dimension_numbers<[1], [0], [0], [1], [0, 0, 1, 1], [], []>} : vector<14x32xf32>, vector<32x64xf32>, vector<14x64xf32> -> vector<14x64xf32>
    %284 = arith.addf %280, %283 : vector<14x64xf32>
    %c4_152 = arith.constant 4 : index
    %c0_153 = arith.constant 0 : index
    %285 = vector.load %arg14[%c4_152, %c0_153] : memref<18x32xf32, #tpu.memory_space<vmem>>, vector<14x32xf32>
    %c64_154 = arith.constant 64 : index
    %c0_155 = arith.constant 0 : index
    %286 = vector.load %arg2[%c64_154, %c0_155] : memref<96x64xf32, #tpu.memory_space<vmem>>, vector<32x64xf32>
    %cst_156 = arith.constant dense<0.000000e+00> : vector<14x64xf32>
    %287 = tpu.matmul %285, %286, %cst_156 {dimension_numbers = #tpu.dot_dimension_numbers<[1], [0], [0], [1], [0, 0, 1, 1], [], []>} : vector<14x32xf32>, vector<32x64xf32>, vector<14x64xf32> -> vector<14x64xf32>
    %288 = arith.addf %284, %287 : vector<14x64xf32>
    %289 = vector.broadcast %7 : vector<1x64xf32> to vector<14x64xf32>
    %290 = arith.addf %288, %289 : vector<14x64xf32>
    %291 = vector.extract_strided_slice %290 {offsets = [0, 0], sizes = [2, 64], strides = [1, 1]} : vector<14x64xf32> to vector<2x64xf32>
    %292 = vector.extract_strided_slice %290 {offsets = [2, 0], sizes = [2, 64], strides = [1, 1]} : vector<14x64xf32> to vector<2x64xf32>
    %293 = arith.maximumf %291, %292 : vector<2x64xf32>
    %294 = vector.extract_strided_slice %290 {offsets = [4, 0], sizes = [2, 64], strides = [1, 1]} : vector<14x64xf32> to vector<2x64xf32>
    %295 = arith.maximumf %293, %294 : vector<2x64xf32>
    %296 = vector.extract_strided_slice %290 {offsets = [4, 0], sizes = [2, 64], strides = [1, 1]} : vector<14x64xf32> to vector<2x64xf32>
    %297 = vector.extract_strided_slice %290 {offsets = [6, 0], sizes = [2, 64], strides = [1, 1]} : vector<14x64xf32> to vector<2x64xf32>
    %298 = arith.maximumf %296, %297 : vector<2x64xf32>
    %299 = vector.extract_strided_slice %290 {offsets = [8, 0], sizes = [2, 64], strides = [1, 1]} : vector<14x64xf32> to vector<2x64xf32>
    %300 = arith.maximumf %298, %299 : vector<2x64xf32>
    %301 = vector.extract_strided_slice %290 {offsets = [8, 0], sizes = [2, 64], strides = [1, 1]} : vector<14x64xf32> to vector<2x64xf32>
    %302 = vector.extract_strided_slice %290 {offsets = [10, 0], sizes = [2, 64], strides = [1, 1]} : vector<14x64xf32> to vector<2x64xf32>
    %303 = arith.maximumf %301, %302 : vector<2x64xf32>
    %304 = vector.extract_strided_slice %290 {offsets = [12, 0], sizes = [2, 64], strides = [1, 1]} : vector<14x64xf32> to vector<2x64xf32>
    %305 = arith.maximumf %303, %304 : vector<2x64xf32>
    %306 = tpu.concatenate %295, %300, %305 in 0 : vector<2x64xf32>, vector<2x64xf32>, vector<2x64xf32> -> vector<6x64xf32>
    %c0_157 = arith.constant 0 : index
    %c0_158 = arith.constant 0 : index
    %307 = vector.load %arg15[%c0_157, %c0_158] : memref<6x64xf32, #tpu.memory_space<vmem>>, vector<6x64xf32>
    %308 = vector.broadcast %4 : f32 to vector<6x64xf32>
    %309 = arith.cmpf ogt, %307, %308 : vector<6x64xf32>
    %310 = arith.extui %309 : vector<6x64xi1> to vector<6x64xi32>
    %311 = arith.sitofp %310 : vector<6x64xi32> to vector<6x64xf32>
    %cst_159 = arith.constant 5.000000e-01 : f32
    %312 = vector.broadcast %cst_159 : f32 to vector<6x64xf32>
    %313 = arith.mulf %312, %307 : vector<6x64xf32>
    %314 = arith.addf %313, %306 : vector<6x64xf32>
    %315 = vector.broadcast %4 : f32 to vector<6x64xf32>
    %316 = arith.mulf %311, %315 : vector<6x64xf32>
    %317 = arith.subf %314, %316 : vector<6x64xf32>
    %318 = vector.broadcast %4 : f32 to vector<6x64xf32>
    %319 = arith.cmpf ogt, %317, %318 : vector<6x64xf32>
    %320 = arith.extui %319 : vector<6x64xi1> to vector<6x64xi32>
    %321 = arith.sitofp %320 : vector<6x64xi32> to vector<6x64xf32>
    %c0_160 = arith.constant 0 : index
    %c0_161 = arith.constant 0 : index
    %322 = vector.load %arg15[%c0_160, %c0_161] : memref<6x64xf32, #tpu.memory_space<vmem>>, vector<6x64xf32>
    tpu.vector_store %arg15[%c0_160, %c0_161], %317 {strides = array<i32>} : memref<6x64xf32, #tpu.memory_space<vmem>>, vector<6x64xf32>,
    %323 = vector.extract_strided_slice %321 {offsets = [0, 0], sizes = [2, 64], strides = [1, 1]} : vector<6x64xf32> to vector<2x64xf32>
    %c0_162 = arith.constant 0 : index
    %c0_163 = arith.constant 0 : index
    %324 = vector.load %arg4[%c0_162, %c0_163] : memref<192x256xf32, #tpu.memory_space<vmem>>, vector<64x256xf32>
    %cst_164 = arith.constant dense<0.000000e+00> : vector<2x256xf32>
    %325 = tpu.matmul %323, %324, %cst_164 {dimension_numbers = #tpu.dot_dimension_numbers<[1], [0], [0], [1], [0, 0, 1, 1], [], []>} : vector<2x64xf32>, vector<64x256xf32>, vector<2x256xf32> -> vector<2x256xf32>
    %326 = vector.extract_strided_slice %321 {offsets = [2, 0], sizes = [2, 64], strides = [1, 1]} : vector<6x64xf32> to vector<2x64xf32>
    %c64_165 = arith.constant 64 : index
    %c0_166 = arith.constant 0 : index
    %327 = vector.load %arg4[%c64_165, %c0_166] : memref<192x256xf32, #tpu.memory_space<vmem>>, vector<64x256xf32>
    %cst_167 = arith.constant dense<0.000000e+00> : vector<2x256xf32>
    %328 = tpu.matmul %326, %327, %cst_167 {dimension_numbers = #tpu.dot_dimension_numbers<[1], [0], [0], [1], [0, 0, 1, 1], [], []>} : vector<2x64xf32>, vector<64x256xf32>, vector<2x256xf32> -> vector<2x256xf32>
    %329 = arith.addf %325, %328 : vector<2x256xf32>
    %330 = vector.extract_strided_slice %321 {offsets = [4, 0], sizes = [2, 64], strides = [1, 1]} : vector<6x64xf32> to vector<2x64xf32>
    %c128_168 = arith.constant 128 : index
    %c0_169 = arith.constant 0 : index
    %331 = vector.load %arg4[%c128_168, %c0_169] : memref<192x256xf32, #tpu.memory_space<vmem>>, vector<64x256xf32>
    %cst_170 = arith.constant dense<0.000000e+00> : vector<2x256xf32>
    %332 = tpu.matmul %330, %331, %cst_170 {dimension_numbers = #tpu.dot_dimension_numbers<[1], [0], [0], [1], [0, 0, 1, 1], [], []>} : vector<2x64xf32>, vector<64x256xf32>, vector<2x256xf32> -> vector<2x256xf32>
    %333 = arith.addf %329, %332 : vector<2x256xf32>
    %334 = vector.broadcast %8 : vector<1x256xf32> to vector<2x256xf32>
    %335 = arith.addf %333, %334 : vector<2x256xf32>
    %c0_171 = arith.constant 0 : index
    %c0_172 = arith.constant 0 : index
    %336 = vector.load %arg16[%c0_171, %c0_172] : memref<2x256xf32, #tpu.memory_space<vmem>>, vector<2x256xf32>
    %337 = vector.broadcast %5 : f32 to vector<2x256xf32>
    %338 = arith.cmpf ogt, %336, %337 : vector<2x256xf32>
    %339 = arith.extui %338 : vector<2x256xi1> to vector<2x256xi32>
    %340 = arith.sitofp %339 : vector<2x256xi32> to vector<2x256xf32>
    %cst_173 = arith.constant 5.000000e-01 : f32
    %341 = vector.broadcast %cst_173 : f32 to vector<2x256xf32>
    %342 = arith.mulf %341, %336 : vector<2x256xf32>
    %343 = arith.addf %342, %335 : vector<2x256xf32>
    %344 = vector.broadcast %5 : f32 to vector<2x256xf32>
    %345 = arith.mulf %340, %344 : vector<2x256xf32>
    %346 = arith.subf %343, %345 : vector<2x256xf32>
    %347 = vector.broadcast %5 : f32 to vector<2x256xf32>
    %348 = arith.cmpf ogt, %346, %347 : vector<2x256xf32>
    %349 = arith.extui %348 : vector<2x256xi1> to vector<2x256xi32>
    %350 = arith.sitofp %349 : vector<2x256xi32> to vector<2x256xf32>
    %c0_174 = arith.constant 0 : index
    %c0_175 = arith.constant 0 : index
    %351 = vector.load %arg16[%c0_174, %c0_175] : memref<2x256xf32, #tpu.memory_space<vmem>>, vector<2x256xf32>
    tpu.vector_store %arg16[%c0_174, %c0_175], %346 {strides = array<i32>} : memref<2x256xf32, #tpu.memory_space<vmem>>, vector<2x256xf32>,
    %c2_176 = arith.constant 2 : index
    %c0_177 = arith.constant 0 : index
    %c0_178 = arith.constant 0 : index
    %352 = vector.load %arg9[%c2_176, %c0_177, %c0_178] : memref<4x2x256xf32, #tpu.memory_space<vmem>>, vector<1x2x256xf32>
    %353 = vector.shape_cast %352 : vector<1x2x256xf32> to vector<2x256xf32>
    %354 = vector.shape_cast %350 : vector<2x256xf32> to vector<1x2x256xf32>
    tpu.vector_store %arg9[%c2_176, %c0_177, %c0_178], %354 {strides = array<i32>} : memref<4x2x256xf32, #tpu.memory_space<vmem>>, vector<1x2x256xf32>,
    %c2_179 = arith.constant 2 : index
    %c0_180 = arith.constant 0 : index
    %c0_181 = arith.constant 0 : index
    %355 = vector.load %arg10[%c2_179, %c0_180, %c0_181] : memref<4x2x256xf32, #tpu.memory_space<vmem>>, vector<1x2x256xf32>
    %356 = vector.shape_cast %355 : vector<1x2x256xf32> to vector<2x256xf32>
    %357 = vector.shape_cast %346 : vector<2x256xf32> to vector<1x2x256xf32>
    tpu.vector_store %arg10[%c2_179, %c0_180, %c0_181], %357 {strides = array<i32>} : memref<4x2x256xf32, #tpu.memory_space<vmem>>, vector<1x2x256xf32>,
    %cst_182 = arith.constant dense<0.000000e+00> : vector<2x128xf32>
    %358 = tpu.matmul %350, %9, %cst_182 {dimension_numbers = #tpu.dot_dimension_numbers<[1], [0], [0], [1], [0, 0, 1, 1], [], []>} : vector<2x256xf32>, vector<256x128xf32>, vector<2x128xf32> -> vector<2x128xf32>
    %359 = vector.broadcast %10 : vector<1x128xf32> to vector<2x128xf32>
    %360 = arith.addf %358, %359 : vector<2x128xf32>
    %c0_183 = arith.constant 0 : index
    %c0_184 = arith.constant 0 : index
    %361 = vector.load %arg17[%c0_183, %c0_184] : memref<2x128xf32, #tpu.memory_space<vmem>>, vector<2x128xf32>
    %362 = vector.broadcast %6 : f32 to vector<2x128xf32>
    %363 = arith.cmpf ogt, %361, %362 : vector<2x128xf32>
    %364 = arith.extui %363 : vector<2x128xi1> to vector<2x128xi32>
    %365 = arith.sitofp %364 : vector<2x128xi32> to vector<2x128xf32>
    %cst_185 = arith.constant 5.000000e-01 : f32
    %366 = vector.broadcast %cst_185 : f32 to vector<2x128xf32>
    %367 = arith.mulf %366, %361 : vector<2x128xf32>
    %368 = arith.addf %367, %360 : vector<2x128xf32>
    %369 = vector.broadcast %6 : f32 to vector<2x128xf32>
    %370 = arith.mulf %365, %369 : vector<2x128xf32>
    %371 = arith.subf %368, %370 : vector<2x128xf32>
    %372 = vector.broadcast %6 : f32 to vector<2x128xf32>
    %373 = arith.cmpf ogt, %371, %372 : vector<2x128xf32>
    %374 = arith.extui %373 : vector<2x128xi1> to vector<2x128xi32>
    %375 = arith.sitofp %374 : vector<2x128xi32> to vector<2x128xf32>
    %c0_186 = arith.constant 0 : index
    %c0_187 = arith.constant 0 : index
    %376 = vector.load %arg17[%c0_186, %c0_187] : memref<2x128xf32, #tpu.memory_space<vmem>>, vector<2x128xf32>
    tpu.vector_store %arg17[%c0_186, %c0_187], %371 {strides = array<i32>} : memref<2x128xf32, #tpu.memory_space<vmem>>, vector<2x128xf32>,
    %c2_188 = arith.constant 2 : index
    %c0_189 = arith.constant 0 : index
    %c0_190 = arith.constant 0 : index
    %377 = vector.load %arg11[%c2_188, %c0_189, %c0_190] : memref<4x2x128xf32, #tpu.memory_space<vmem>>, vector<1x2x128xf32>
    %378 = vector.shape_cast %377 : vector<1x2x128xf32> to vector<2x128xf32>
    %379 = vector.shape_cast %375 : vector<2x128xf32> to vector<1x2x128xf32>
    tpu.vector_store %arg11[%c2_188, %c0_189, %c0_190], %379 {strides = array<i32>} : memref<4x2x128xf32, #tpu.memory_space<vmem>>, vector<1x2x128xf32>,
    %c2_191 = arith.constant 2 : index
    %c0_192 = arith.constant 0 : index
    %c0_193 = arith.constant 0 : index
    %380 = vector.load %arg12[%c2_191, %c0_192, %c0_193] : memref<4x2x128xf32, #tpu.memory_space<vmem>>, vector<1x2x128xf32>
    %381 = vector.shape_cast %380 : vector<1x2x128xf32> to vector<2x128xf32>
    %382 = vector.shape_cast %371 : vector<2x128xf32> to vector<1x2x128xf32>
    tpu.vector_store %arg12[%c2_191, %c0_192, %c0_193], %382 {strides = array<i32>} : memref<4x2x128xf32, #tpu.memory_space<vmem>>, vector<1x2x128xf32>,
    %c0_194 = arith.constant 0 : index
    %c0_195 = arith.constant 0 : index
    %383 = vector.load %arg13[%c0_194, %c0_195] : memref<14x32xf32, #tpu.memory_space<vmem>>, vector<14x32xf32>
    %c3_196 = arith.constant 3 : index
    %c0_197 = arith.constant 0 : index
    %c0_198 = arith.constant 0 : index
    %384 = vector.load %arg1[%c3_196, %c0_197, %c0_198] : memref<4x14x32xf32, #tpu.memory_space<vmem>>, vector<1x14x32xf32>
    %385 = vector.shape_cast %384 : vector<1x14x32xf32> to vector<14x32xf32>
    %386 = vector.broadcast %3 : f32 to vector<14x32xf32>
    %387 = arith.cmpf ogt, %383, %386 : vector<14x32xf32>
    %388 = arith.extui %387 : vector<14x32xi1> to vector<14x32xi32>
    %389 = arith.sitofp %388 : vector<14x32xi32> to vector<14x32xf32>
    %cst_199 = arith.constant 5.000000e-01 : f32
    %390 = vector.broadcast %cst_199 : f32 to vector<14x32xf32>
    %391 = arith.mulf %390, %383 : vector<14x32xf32>
    %392 = arith.addf %391, %385 : vector<14x32xf32>
    %393 = vector.broadcast %3 : f32 to vector<14x32xf32>
    %394 = arith.mulf %389, %393 : vector<14x32xf32>
    %395 = arith.subf %392, %394 : vector<14x32xf32>
    %396 = vector.broadcast %3 : f32 to vector<14x32xf32>
    %397 = arith.cmpf ogt, %395, %396 : vector<14x32xf32>
    %398 = arith.extui %397 : vector<14x32xi1> to vector<14x32xi32>
    %399 = arith.sitofp %398 : vector<14x32xi32> to vector<14x32xf32>
    %c0_200 = arith.constant 0 : index
    %c0_201 = arith.constant 0 : index
    %400 = vector.load %arg13[%c0_200, %c0_201] : memref<14x32xf32, #tpu.memory_space<vmem>>, vector<14x32xf32>
    tpu.vector_store %arg13[%c0_200, %c0_201], %395 {strides = array<i32>} : memref<14x32xf32, #tpu.memory_space<vmem>>, vector<14x32xf32>,
    %c2_202 = arith.constant 2 : index
    %c0_203 = arith.constant 0 : index
    %401 = vector.load %arg14[%c2_202, %c0_203] : memref<18x32xf32, #tpu.memory_space<vmem>>, vector<14x32xf32>
    tpu.vector_store %arg14[%c2_202, %c0_203], %399 {strides = array<i32>} : memref<18x32xf32, #tpu.memory_space<vmem>>, vector<14x32xf32>,
    %c0_204 = arith.constant 0 : index
    %c0_205 = arith.constant 0 : index
    %402 = vector.load %arg14[%c0_204, %c0_205] : memref<18x32xf32, #tpu.memory_space<vmem>>, vector<14x32xf32>
    %c0_206 = arith.constant 0 : index
    %c0_207 = arith.constant 0 : index
    %403 = vector.load %arg2[%c0_206, %c0_207] : memref<96x64xf32, #tpu.memory_space<vmem>>, vector<32x64xf32>
    %cst_208 = arith.constant dense<0.000000e+00> : vector<14x64xf32>
    %404 = tpu.matmul %402, %403, %cst_208 {dimension_numbers = #tpu.dot_dimension_numbers<[1], [0], [0], [1], [0, 0, 1, 1], [], []>} : vector<14x32xf32>, vector<32x64xf32>, vector<14x64xf32> -> vector<14x64xf32>
    %c2_209 = arith.constant 2 : index
    %c0_210 = arith.constant 0 : index
    %405 = vector.load %arg14[%c2_209, %c0_210] : memref<18x32xf32, #tpu.memory_space<vmem>>, vector<14x32xf32>
    %c32_211 = arith.constant 32 : index
    %c0_212 = arith.constant 0 : index
    %406 = vector.load %arg2[%c32_211, %c0_212] : memref<96x64xf32, #tpu.memory_space<vmem>>, vector<32x64xf32>
    %cst_213 = arith.constant dense<0.000000e+00> : vector<14x64xf32>
    %407 = tpu.matmul %405, %406, %cst_213 {dimension_numbers = #tpu.dot_dimension_numbers<[1], [0], [0], [1], [0, 0, 1, 1], [], []>} : vector<14x32xf32>, vector<32x64xf32>, vector<14x64xf32> -> vector<14x64xf32>
    %408 = arith.addf %404, %407 : vector<14x64xf32>
    %c4_214 = arith.constant 4 : index
    %c0_215 = arith.constant 0 : index
    %409 = vector.load %arg14[%c4_214, %c0_215] : memref<18x32xf32, #tpu.memory_space<vmem>>, vector<14x32xf32>
    %c64_216 = arith.constant 64 : index
    %c0_217 = arith.constant 0 : index
    %410 = vector.load %arg2[%c64_216, %c0_217] : memref<96x64xf32, #tpu.memory_space<vmem>>, vector<32x64xf32>
    %cst_218 = arith.constant dense<0.000000e+00> : vector<14x64xf32>
    %411 = tpu.matmul %409, %410, %cst_218 {dimension_numbers = #tpu.dot_dimension_numbers<[1], [0], [0], [1], [0, 0, 1, 1], [], []>} : vector<14x32xf32>, vector<32x64xf32>, vector<14x64xf32> -> vector<14x64xf32>
    %412 = arith.addf %408, %411 : vector<14x64xf32>
    %413 = vector.broadcast %7 : vector<1x64xf32> to vector<14x64xf32>
    %414 = arith.addf %412, %413 : vector<14x64xf32>
    %415 = vector.extract_strided_slice %414 {offsets = [0, 0], sizes = [2, 64], strides = [1, 1]} : vector<14x64xf32> to vector<2x64xf32>
    %416 = vector.extract_strided_slice %414 {offsets = [2, 0], sizes = [2, 64], strides = [1, 1]} : vector<14x64xf32> to vector<2x64xf32>
    %417 = arith.maximumf %415, %416 : vector<2x64xf32>
    %418 = vector.extract_strided_slice %414 {offsets = [4, 0], sizes = [2, 64], strides = [1, 1]} : vector<14x64xf32> to vector<2x64xf32>
    %419 = arith.maximumf %417, %418 : vector<2x64xf32>
    %420 = vector.extract_strided_slice %414 {offsets = [4, 0], sizes = [2, 64], strides = [1, 1]} : vector<14x64xf32> to vector<2x64xf32>
    %421 = vector.extract_strided_slice %414 {offsets = [6, 0], sizes = [2, 64], strides = [1, 1]} : vector<14x64xf32> to vector<2x64xf32>
    %422 = arith.maximumf %420, %421 : vector<2x64xf32>
    %423 = vector.extract_strided_slice %414 {offsets = [8, 0], sizes = [2, 64], strides = [1, 1]} : vector<14x64xf32> to vector<2x64xf32>
    %424 = arith.maximumf %422, %423 : vector<2x64xf32>
    %425 = vector.extract_strided_slice %414 {offsets = [8, 0], sizes = [2, 64], strides = [1, 1]} : vector<14x64xf32> to vector<2x64xf32>
    %426 = vector.extract_strided_slice %414 {offsets = [10, 0], sizes = [2, 64], strides = [1, 1]} : vector<14x64xf32> to vector<2x64xf32>
    %427 = arith.maximumf %425, %426 : vector<2x64xf32>
    %428 = vector.extract_strided_slice %414 {offsets = [12, 0], sizes = [2, 64], strides = [1, 1]} : vector<14x64xf32> to vector<2x64xf32>
    %429 = arith.maximumf %427, %428 : vector<2x64xf32>
    %430 = tpu.concatenate %419, %424, %429 in 0 : vector<2x64xf32>, vector<2x64xf32>, vector<2x64xf32> -> vector<6x64xf32>
    %c0_219 = arith.constant 0 : index
    %c0_220 = arith.constant 0 : index
    %431 = vector.load %arg15[%c0_219, %c0_220] : memref<6x64xf32, #tpu.memory_space<vmem>>, vector<6x64xf32>
    %432 = vector.broadcast %4 : f32 to vector<6x64xf32>
    %433 = arith.cmpf ogt, %431, %432 : vector<6x64xf32>
    %434 = arith.extui %433 : vector<6x64xi1> to vector<6x64xi32>
    %435 = arith.sitofp %434 : vector<6x64xi32> to vector<6x64xf32>
    %cst_221 = arith.constant 5.000000e-01 : f32
    %436 = vector.broadcast %cst_221 : f32 to vector<6x64xf32>
    %437 = arith.mulf %436, %431 : vector<6x64xf32>
    %438 = arith.addf %437, %430 : vector<6x64xf32>
    %439 = vector.broadcast %4 : f32 to vector<6x64xf32>
    %440 = arith.mulf %435, %439 : vector<6x64xf32>
    %441 = arith.subf %438, %440 : vector<6x64xf32>
    %442 = vector.broadcast %4 : f32 to vector<6x64xf32>
    %443 = arith.cmpf ogt, %441, %442 : vector<6x64xf32>
    %444 = arith.extui %443 : vector<6x64xi1> to vector<6x64xi32>
    %445 = arith.sitofp %444 : vector<6x64xi32> to vector<6x64xf32>
    %c0_222 = arith.constant 0 : index
    %c0_223 = arith.constant 0 : index
    %446 = vector.load %arg15[%c0_222, %c0_223] : memref<6x64xf32, #tpu.memory_space<vmem>>, vector<6x64xf32>
    tpu.vector_store %arg15[%c0_222, %c0_223], %441 {strides = array<i32>} : memref<6x64xf32, #tpu.memory_space<vmem>>, vector<6x64xf32>,
    %447 = vector.extract_strided_slice %445 {offsets = [0, 0], sizes = [2, 64], strides = [1, 1]} : vector<6x64xf32> to vector<2x64xf32>
    %c0_224 = arith.constant 0 : index
    %c0_225 = arith.constant 0 : index
    %448 = vector.load %arg4[%c0_224, %c0_225] : memref<192x256xf32, #tpu.memory_space<vmem>>, vector<64x256xf32>
    %cst_226 = arith.constant dense<0.000000e+00> : vector<2x256xf32>
    %449 = tpu.matmul %447, %448, %cst_226 {dimension_numbers = #tpu.dot_dimension_numbers<[1], [0], [0], [1], [0, 0, 1, 1], [], []>} : vector<2x64xf32>, vector<64x256xf32>, vector<2x256xf32> -> vector<2x256xf32>
    %450 = vector.extract_strided_slice %445 {offsets = [2, 0], sizes = [2, 64], strides = [1, 1]} : vector<6x64xf32> to vector<2x64xf32>
    %c64_227 = arith.constant 64 : index
    %c0_228 = arith.constant 0 : index
    %451 = vector.load %arg4[%c64_227, %c0_228] : memref<192x256xf32, #tpu.memory_space<vmem>>, vector<64x256xf32>
    %cst_229 = arith.constant dense<0.000000e+00> : vector<2x256xf32>
    %452 = tpu.matmul %450, %451, %cst_229 {dimension_numbers = #tpu.dot_dimension_numbers<[1], [0], [0], [1], [0, 0, 1, 1], [], []>} : vector<2x64xf32>, vector<64x256xf32>, vector<2x256xf32> -> vector<2x256xf32>
    %453 = arith.addf %449, %452 : vector<2x256xf32>
    %454 = vector.extract_strided_slice %445 {offsets = [4, 0], sizes = [2, 64], strides = [1, 1]} : vector<6x64xf32> to vector<2x64xf32>
    %c128_230 = arith.constant 128 : index
    %c0_231 = arith.constant 0 : index
    %455 = vector.load %arg4[%c128_230, %c0_231] : memref<192x256xf32, #tpu.memory_space<vmem>>, vector<64x256xf32>
    %cst_232 = arith.constant dense<0.000000e+00> : vector<2x256xf32>
    %456 = tpu.matmul %454, %455, %cst_232 {dimension_numbers = #tpu.dot_dimension_numbers<[1], [0], [0], [1], [0, 0, 1, 1], [], []>} : vector<2x64xf32>, vector<64x256xf32>, vector<2x256xf32> -> vector<2x256xf32>
    %457 = arith.addf %453, %456 : vector<2x256xf32>
    %458 = vector.broadcast %8 : vector<1x256xf32> to vector<2x256xf32>
    %459 = arith.addf %457, %458 : vector<2x256xf32>
    %c0_233 = arith.constant 0 : index
    %c0_234 = arith.constant 0 : index
    %460 = vector.load %arg16[%c0_233, %c0_234] : memref<2x256xf32, #tpu.memory_space<vmem>>, vector<2x256xf32>
    %461 = vector.broadcast %5 : f32 to vector<2x256xf32>
    %462 = arith.cmpf ogt, %460, %461 : vector<2x256xf32>
    %463 = arith.extui %462 : vector<2x256xi1> to vector<2x256xi32>
    %464 = arith.sitofp %463 : vector<2x256xi32> to vector<2x256xf32>
    %cst_235 = arith.constant 5.000000e-01 : f32
    %465 = vector.broadcast %cst_235 : f32 to vector<2x256xf32>
    %466 = arith.mulf %465, %460 : vector<2x256xf32>
    %467 = arith.addf %466, %459 : vector<2x256xf32>
    %468 = vector.broadcast %5 : f32 to vector<2x256xf32>
    %469 = arith.mulf %464, %468 : vector<2x256xf32>
    %470 = arith.subf %467, %469 : vector<2x256xf32>
    %471 = vector.broadcast %5 : f32 to vector<2x256xf32>
    %472 = arith.cmpf ogt, %470, %471 : vector<2x256xf32>
    %473 = arith.extui %472 : vector<2x256xi1> to vector<2x256xi32>
    %474 = arith.sitofp %473 : vector<2x256xi32> to vector<2x256xf32>
    %c0_236 = arith.constant 0 : index
    %c0_237 = arith.constant 0 : index
    %475 = vector.load %arg16[%c0_236, %c0_237] : memref<2x256xf32, #tpu.memory_space<vmem>>, vector<2x256xf32>
    tpu.vector_store %arg16[%c0_236, %c0_237], %470 {strides = array<i32>} : memref<2x256xf32, #tpu.memory_space<vmem>>, vector<2x256xf32>,
    %c3_238 = arith.constant 3 : index
    %c0_239 = arith.constant 0 : index
    %c0_240 = arith.constant 0 : index
    %476 = vector.load %arg9[%c3_238, %c0_239, %c0_240] : memref<4x2x256xf32, #tpu.memory_space<vmem>>, vector<1x2x256xf32>
    %477 = vector.shape_cast %476 : vector<1x2x256xf32> to vector<2x256xf32>
    %478 = vector.shape_cast %474 : vector<2x256xf32> to vector<1x2x256xf32>
    tpu.vector_store %arg9[%c3_238, %c0_239, %c0_240], %478 {strides = array<i32>} : memref<4x2x256xf32, #tpu.memory_space<vmem>>, vector<1x2x256xf32>,
    %c3_241 = arith.constant 3 : index
    %c0_242 = arith.constant 0 : index
    %c0_243 = arith.constant 0 : index
    %479 = vector.load %arg10[%c3_241, %c0_242, %c0_243] : memref<4x2x256xf32, #tpu.memory_space<vmem>>, vector<1x2x256xf32>
    %480 = vector.shape_cast %479 : vector<1x2x256xf32> to vector<2x256xf32>
    %481 = vector.shape_cast %470 : vector<2x256xf32> to vector<1x2x256xf32>
    tpu.vector_store %arg10[%c3_241, %c0_242, %c0_243], %481 {strides = array<i32>} : memref<4x2x256xf32, #tpu.memory_space<vmem>>, vector<1x2x256xf32>,
    %cst_244 = arith.constant dense<0.000000e+00> : vector<2x128xf32>
    %482 = tpu.matmul %474, %9, %cst_244 {dimension_numbers = #tpu.dot_dimension_numbers<[1], [0], [0], [1], [0, 0, 1, 1], [], []>} : vector<2x256xf32>, vector<256x128xf32>, vector<2x128xf32> -> vector<2x128xf32>
    %483 = vector.broadcast %10 : vector<1x128xf32> to vector<2x128xf32>
    %484 = arith.addf %482, %483 : vector<2x128xf32>
    %c0_245 = arith.constant 0 : index
    %c0_246 = arith.constant 0 : index
    %485 = vector.load %arg17[%c0_245, %c0_246] : memref<2x128xf32, #tpu.memory_space<vmem>>, vector<2x128xf32>
    %486 = vector.broadcast %6 : f32 to vector<2x128xf32>
    %487 = arith.cmpf ogt, %485, %486 : vector<2x128xf32>
    %488 = arith.extui %487 : vector<2x128xi1> to vector<2x128xi32>
    %489 = arith.sitofp %488 : vector<2x128xi32> to vector<2x128xf32>
    %cst_247 = arith.constant 5.000000e-01 : f32
    %490 = vector.broadcast %cst_247 : f32 to vector<2x128xf32>
    %491 = arith.mulf %490, %485 : vector<2x128xf32>
    %492 = arith.addf %491, %484 : vector<2x128xf32>
    %493 = vector.broadcast %6 : f32 to vector<2x128xf32>
    %494 = arith.mulf %489, %493 : vector<2x128xf32>
    %495 = arith.subf %492, %494 : vector<2x128xf32>
    %496 = vector.broadcast %6 : f32 to vector<2x128xf32>
    %497 = arith.cmpf ogt, %495, %496 : vector<2x128xf32>
    %498 = arith.extui %497 : vector<2x128xi1> to vector<2x128xi32>
    %499 = arith.sitofp %498 : vector<2x128xi32> to vector<2x128xf32>
    %c0_248 = arith.constant 0 : index
    %c0_249 = arith.constant 0 : index
    %500 = vector.load %arg17[%c0_248, %c0_249] : memref<2x128xf32, #tpu.memory_space<vmem>>, vector<2x128xf32>
    tpu.vector_store %arg17[%c0_248, %c0_249], %495 {strides = array<i32>} : memref<2x128xf32, #tpu.memory_space<vmem>>, vector<2x128xf32>,
    %c3_250 = arith.constant 3 : index
    %c0_251 = arith.constant 0 : index
    %c0_252 = arith.constant 0 : index
    %501 = vector.load %arg11[%c3_250, %c0_251, %c0_252] : memref<4x2x128xf32, #tpu.memory_space<vmem>>, vector<1x2x128xf32>
    %502 = vector.shape_cast %501 : vector<1x2x128xf32> to vector<2x128xf32>
    %503 = vector.shape_cast %499 : vector<2x128xf32> to vector<1x2x128xf32>
    tpu.vector_store %arg11[%c3_250, %c0_251, %c0_252], %503 {strides = array<i32>} : memref<4x2x128xf32, #tpu.memory_space<vmem>>, vector<1x2x128xf32>,
    %c3_253 = arith.constant 3 : index
    %c0_254 = arith.constant 0 : index
    %c0_255 = arith.constant 0 : index
    %504 = vector.load %arg12[%c3_253, %c0_254, %c0_255] : memref<4x2x128xf32, #tpu.memory_space<vmem>>, vector<1x2x128xf32>
    %505 = vector.shape_cast %504 : vector<1x2x128xf32> to vector<2x128xf32>
    %506 = vector.shape_cast %495 : vector<2x128xf32> to vector<1x2x128xf32>
    tpu.vector_store %arg12[%c3_253, %c0_254, %c0_255], %506 {strides = array<i32>} : memref<4x2x128xf32, #tpu.memory_space<vmem>>, vector<1x2x128xf32>,
    return
  }
  func.func @transform_0(%arg0: i32) -> (i32, i32, i32) {
    %c0_i32 = arith.constant 0 : i32
    %c0_i32_0 = arith.constant 0 : i32
    %c0_i32_1 = arith.constant 0 : i32
    return %arg0, %c0_i32, %c0_i32_0 : i32, i32, i32
  }
  func.func @transform_1(%arg0: i32) -> (i32, i32) {
    %c0_i32 = arith.constant 0 : i32
    %c0_i32_0 = arith.constant 0 : i32
    %c0_i32_1 = arith.constant 0 : i32
    return %c0_i32, %c0_i32_0 : i32, i32
  }
  func.func @transform_2(%arg0: i32) -> (i32, i32) {
    %c0_i32 = arith.constant 0 : i32
    %c0_i32_0 = arith.constant 0 : i32
    %c0_i32_1 = arith.constant 0 : i32
    return %c0_i32, %c0_i32_0 : i32, i32
  }
  func.func @transform_3(%arg0: i32) -> (i32, i32) {
    %c0_i32 = arith.constant 0 : i32
    %c0_i32_0 = arith.constant 0 : i32
    %c0_i32_1 = arith.constant 0 : i32
    return %c0_i32, %c0_i32_0 : i32, i32
  }
  func.func @transform_4(%arg0: i32) -> (i32, i32) {
    %c0_i32 = arith.constant 0 : i32
    %c0_i32_0 = arith.constant 0 : i32
    %c0_i32_1 = arith.constant 0 : i32
    return %c0_i32, %c0_i32_0 : i32, i32
  }
  func.func @transform_5(%arg0: i32) -> (i32, i32) {
    %c0_i32 = arith.constant 0 : i32
    %c0_i32_0 = arith.constant 0 : i32
    %c0_i32_1 = arith.constant 0 : i32
    return %c0_i32, %c0_i32_0 : i32, i32
  }
  func.func @transform_6(%arg0: i32) -> (i32, i32) {
    %c0_i32 = arith.constant 0 : i32
    %c0_i32_0 = arith.constant 0 : i32
    %c0_i32_1 = arith.constant 0 : i32
    return %c0_i32, %c0_i32_0 : i32, i32
  }
  func.func @transform_7(%arg0: i32) -> (i32, i32) {
    %c0_i32 = arith.constant 0 : i32
    %c0_i32_0 = arith.constant 0 : i32
    %c0_i32_1 = arith.constant 0 : i32
    return %c0_i32, %c0_i32_0 : i32, i32
  }
  func.func @transform_8(%arg0: i32) -> (i32, i32, i32) {
    %c0_i32 = arith.constant 0 : i32
    %c0_i32_0 = arith.constant 0 : i32
    %c0_i32_1 = arith.constant 0 : i32
    return %arg0, %c0_i32, %c0_i32_0 : i32, i32, i32
  }
  func.func @transform_9(%arg0: i32) -> (i32, i32, i32) {
    %c0_i32 = arith.constant 0 : i32
    %c0_i32_0 = arith.constant 0 : i32
    %c0_i32_1 = arith.constant 0 : i32
    return %arg0, %c0_i32, %c0_i32_0 : i32, i32, i32
  }
  func.func @transform_10(%arg0: i32) -> (i32, i32, i32) {
    %c0_i32 = arith.constant 0 : i32
    %c0_i32_0 = arith.constant 0 : i32
    %c0_i32_1 = arith.constant 0 : i32
    return %arg0, %c0_i32, %c0_i32_0 : i32, i32, i32
  }
  func.func @transform_11(%arg0: i32) -> (i32, i32, i32) {
    %c0_i32 = arith.constant 0 : i32
    %c0_i32_0 = arith.constant 0 : i32
    %c0_i32_1 = arith.constant 0 : i32
    return %arg0, %c0_i32, %c0_i32_0 : i32, i32, i32
  }
}

</mosaic_0001>

<llo_original>
// kernel: _oc_scnn_forward.2
$region0: #{_oc_scnn_forward.2}
  #allocation0 [shape = 'u32[]', space=smem, size = 0x4, offset = 0x4, fixed_abs, tag = 'smem constant byte address 0x4 - core index']
  #allocation1 [shape = 'u32[144,128]{1,0:T(1,128)}', space=vmem, size = 0x12000, scoped, tag = 'internal scratch']
  %s0 = inlined_call_operand.vmem [shape: f32[1,144,4], index: 0, kind: input, shape index: {}]
  %s1 = inlined_call_operand.vmem [shape: f32[12,32], index: 1, kind: input, shape index: {}]
  %s2 = inlined_call_operand.vmem [shape: f32[1,32], index: 2, kind: input, shape index: {}]
  %s3 = inlined_call_operand.vmem [shape: f32[1,56,32], index: 3, kind: output, shape index: {}]
  %s4 = sld [smem:[#allocation0]]
  $region22: #{_oc_scnn_forward.2} parent=0
    _
  %s6 = ssub.s32 1, %s4
  %s7 = scalar_select 0, %s6, %s4
  // Predicated region
  $region2: #{_oc_scnn_forward.2} parent=0 // pred_check
    _
  $region3: #{_oc_scnn_forward.2} parent=0 // pred_check_branch
    %9 = sbr.rel (0) target = $region5
  $region4: #{_oc_scnn_forward.2} parent=0 // pred_region
    _
  $region5: #{_oc_scnn_forward.2} parent=0 // pred_fallthru
    _
  // Predicated region
  $region6: #{_oc_scnn_forward.2} parent=0 // pred_check
    _
  $region7: #{_oc_scnn_forward.2} parent=0 // pred_check_branch
    %11 = sbr.rel (0) target = $region9
  $region8: #{_oc_scnn_forward.2} parent=0 // pred_region
    _
  $region9: #{_oc_scnn_forward.2} parent=0 // pred_fallthru
    _
  // Predicated region
  $region10: #{_oc_scnn_forward.2} parent=0 // pred_check
    _
  $region11: #{_oc_scnn_forward.2} parent=0 // pred_check_branch
    %13 = sbr.rel (0) target = $region13
  $region12: #{_oc_scnn_forward.2} parent=0 // pred_region
    _
  $region13: #{_oc_scnn_forward.2} parent=0 // pred_fallthru
    _
  %v14 = vld [vmem:[%s0] sm:$0xff]
  %v15 = vld [vmem:[%s0 + $0x8] sm:$0xff]
  %v16 = vld [vmem:[%s0 + $0x10] sm:$0xff]
  %v17 = vld [vmem:[%s0 + $0x18] sm:$0xff]
  %v18 = vld [vmem:[%s0 + $0x20] sm:$0xff]
  %v19 = vld [vmem:[%s0 + $0x28] sm:$0xff]
  %v20 = vld [vmem:[%s0 + $0x30] sm:$0xff]
  %v21 = vld [vmem:[%s0 + $0x38] sm:$0xff]
  %v22 = vld [vmem:[%s0 + $0x40] sm:$0xff]
  %v23 = vld [vmem:[%s0 + $0x48] sm:$0xff]
  %v24 = vld [vmem:[%s0 + $0x50] sm:$0xff]
  %v25 = vld [vmem:[%s0 + $0x58] sm:$0xff]
  %v26 = vld [vmem:[%s0 + $0x60] sm:$0xff]
  %v27 = vld [vmem:[%s0 + $0x68] sm:$0xff]
  %v28 = vld [vmem:[%s0 + $0x70] sm:$0xff]
  %v29 = vld [vmem:[%s0 + $0x78] sm:$0xff]
  %v30 = vld [vmem:[%s1] sm:$0xf]
  %v31 = vld [vmem:[%s0 + $0x80] sm:$0xff]
  %v32 = vld [vmem:[%s1 + $0x4] sm:$0xf]
  %vm33 = vcmask 31744
  %v35 = vsel %vm33, %v15, 0
  %v38 = vsel %vm33, %v16, 0
  %v41 = vsel %vm33, %v17, 0
  %v44 = vsel %vm33, %v18, 0
  %v47 = vsel %vm33, %v19, 0
  %v50 = vsel %vm33, %v20, 0
  %v53 = vsel %vm33, %v21, 0
  %v56 = vsel %vm33, %v22, 0
  %v59 = vsel %vm33, %v23, 0
  %v62 = vsel %vm33, %v24, 0
  %v65 = vsel %vm33, %v25, 0
  %v68 = vsel %vm33, %v26, 0
  %v71 = vsel %vm33, %v27, 0
  %v74 = vsel %vm33, %v28, 0
  %v77 = vsel %vm33, %v29, 0
  %v80 = vsel %vm33, %v31, 0
  %vm82 = vcmask 1043456
  %v84 = vsel %vm82, %v32, 0
  %86 = vmatprep.subr.mxu0 0.0
  %87 = vmatpush1.msra.mxu0 %v84
  %88 = vmatprep.subr.mxu0 0.0
  %89 = vmatpush1.msra.mxu0 0.0
  %90 = vmatprep.subr.mxu0 0.0
  %91 = vmatpush1.msra.mxu0 0.0
  %92 = vmatprep.subr.mxu0 0.0
  %93 = vmatpush1.msra.mxu0 0.0
  %94 = vmatprep.subr.mxu0 0.0
  %95 = vmatpush1.msra.mxu0 0.0
  %96 = vmatprep.subr.mxu0 0.0
  %97 = vmatpush1.msra.mxu0 0.0
  %98 = vmatprep.subr.mxu0 0.0
  %99 = vmatpush1.msra.mxu0 0.0
  %100 = vmatprep.subr.mxu0 0.0
  %101 = vmatpush1.msra.mxu0 0.0
  %102 = vmatprep.subr.mxu0 0.0
  %103 = vmatpush1.msra.mxu0 0.0
  %104 = vmatprep.subr.mxu0 0.0
  %105 = vmatpush1.msra.mxu0 0.0
  %106 = vmatprep.subr.mxu0 0.0
  %107 = vmatpush1.msra.mxu0 0.0
  %108 = vmatprep.subr.mxu0 0.0
  %109 = vmatpush1.msra.mxu0 0.0
  %110 = vmatprep.subr.mxu0 0.0
  %111 = vmatpush1.msra.mxu0 0.0
  %112 = vmatprep.subr.mxu0 0.0
  %113 = vmatpush1.msra.mxu0 0.0
  %114 = vmatprep.subr.mxu0 0.0
  %115 = vmatpush1.msra.mxu0 0.0
  %116 = vmatprep.subr.mxu0 0.0
  %117 = vmatpush1.msra.mxu0 0.0
  %118 = vmatprep.subr.mxu0 0.0
  %119 = vmatpush1.msra.mxu0 0.0
  %120 = vmatprep.subr.mxu0 0.0
  %121 = vmatpush1.msra.mxu0 0.0
  %122 = vmatprep.subr.mxu0 0.0
  %123 = vmatpush1.msra.mxu0 0.0
  %124 = vmatprep.subr.mxu0 0.0
  %125 = vmatpush1.msra.mxu0 0.0
  %126 = vmatprep.subr.mxu0 0.0
  %127 = vmatpush1.msra.mxu0 0.0
  %128 = vmatprep.subr.mxu0 0.0
  %129 = vmatpush1.msra.mxu0 0.0
  %130 = vmatprep.subr.mxu0 0.0
  %131 = vmatpush1.msra.mxu0 0.0
  %132 = vmatprep.subr.mxu0 0.0
  %133 = vmatpush1.msra.mxu0 0.0
  %134 = vmatprep.subr.mxu0 0.0
  %135 = vmatpush1.msra.mxu0 0.0
  %136 = vmatprep.subr.mxu0 0.0
  %137 = vmatpush1.msra.mxu0 0.0
  %138 = vmatprep.subr.mxu0 0.0
  %139 = vmatpush1.msra.mxu0 0.0
  %140 = vmatprep.subr.mxu0 0.0
  %141 = vmatpush1.msra.mxu0 0.0
  %142 = vmatprep.subr.mxu0 0.0
  %143 = vmatpush1.msra.mxu0 0.0
  %144 = vmatprep.subr.mxu0 0.0
  %145 = vmatpush1.msra.mxu0 0.0
  %146 = vmatprep.subr.mxu0 0.0
  %147 = vmatpush1.msra.mxu0 0.0
  %148 = vmatprep.subr.mxu0 0.0
  %149 = vmatpush1.msra.mxu0 0.0
  %150 = vmatprep.mubr.f32.mxu0 0.0
  %151 = vmatmul.mubr.f32.gmra.mrb[0].mxu0 %v35
  %v152 = vpop.f32.mrb[0].mxu0
  %v153 = vadd.f32 0.0, %v152
  %v154 = vpop.f32.mrb[0].mxu0
  %155 = vmatprep.mubr.f32.mxu0 0.0
  %156 = vmatmul.mubr.f32.gmra.mrb[0].mxu0 %v38
  %v157 = vpop.f32.mrb[0].mxu0
  %v158 = vadd.f32 0.0, %v157
  %v159 = vpop.f32.mrb[0].mxu0
  %160 = vmatprep.mubr.f32.mxu0 0.0
  %161 = vmatmul.mubr.f32.gmra.mrb[0].mxu0 %v41
  %v162 = vpop.f32.mrb[0].mxu0
  %v163 = vadd.f32 0.0, %v162
  %v164 = vpop.f32.mrb[0].mxu0
  %165 = vmatprep.mubr.f32.mxu0 0.0
  %166 = vmatmul.mubr.f32.gmra.mrb[0].mxu0 %v44
  %v167 = vpop.f32.mrb[0].mxu0
  %v168 = vadd.f32 0.0, %v167
  %v169 = vpop.f32.mrb[0].mxu0
  %170 = vmatprep.mubr.f32.mxu0 0.0
  %171 = vmatmul.mubr.f32.gmra.mrb[0].mxu0 %v47
  %v172 = vpop.f32.mrb[0].mxu0
  %v173 = vadd.f32 0.0, %v172
  %v174 = vpop.f32.mrb[0].mxu0
  %175 = vmatprep.mubr.f32.mxu0 0.0
  %176 = vmatmul.mubr.f32.gmra.mrb[0].mxu0 %v50
  %v177 = vpop.f32.mrb[0].mxu0
  %v178 = vadd.f32 0.0, %v177
  %v179 = vpop.f32.mrb[0].mxu0
  %180 = vmatprep.mubr.f32.mxu0 0.0
  %181 = vmatmul.mubr.f32.gmra.mrb[0].mxu0 %v53
  %v182 = vpop.f32.mrb[0].mxu0
  %v183 = vadd.f32 0.0, %v182
  %v184 = vpop.f32.mrb[0].mxu0
  %185 = vmatprep.mubr.f32.mxu0 0.0
  %186 = vmatmul.mubr.f32.gmra.mrb[0].mxu0 %v56
  %v187 = vpop.f32.mrb[0].mxu0
  %v188 = vadd.f32 0.0, %v187
  %v189 = vpop.f32.mrb[0].mxu0
  %190 = vmatprep.mubr.f32.mxu0 0.0
  %191 = vmatmul.mubr.f32.gmra.mrb[0].mxu0 %v59
  %v192 = vpop.f32.mrb[0].mxu0
  %v193 = vadd.f32 0.0, %v192
  %v194 = vpop.f32.mrb[0].mxu0
  %195 = vmatprep.mubr.f32.mxu0 0.0
  %196 = vmatmul.mubr.f32.gmra.mrb[0].mxu0 %v62
  %v197 = vpop.f32.mrb[0].mxu0
  %v198 = vadd.f32 0.0, %v197
  %v199 = vpop.f32.mrb[0].mxu0
  %200 = vmatprep.mubr.f32.mxu0 0.0
  %201 = vmatmul.mubr.f32.gmra.mrb[0].mxu0 %v65
  %v202 = vpop.f32.mrb[0].mxu0
  %v203 = vadd.f32 0.0, %v202
  %v204 = vpop.f32.mrb[0].mxu0
  %205 = vmatprep.mubr.f32.mxu0 0.0
  %206 = vmatmul.mubr.f32.gmra.mrb[0].mxu0 %v68
  %v207 = vpop.f32.mrb[0].mxu0
  %v208 = vadd.f32 0.0, %v207
  %v209 = vpop.f32.mrb[0].mxu0
  %210 = vmatprep.mubr.f32.mxu0 0.0
  %211 = vmatmul.mubr.f32.gmra.mrb[0].mxu0 %v71
  %v212 = vpop.f32.mrb[0].mxu0
  %v213 = vadd.f32 0.0, %v212
  %v214 = vpop.f32.mrb[0].mxu0
  %215 = vmatprep.mubr.f32.mxu0 0.0
  %216 = vmatmul.mubr.f32.gmra.mrb[0].mxu0 %v74
  %v217 = vpop.f32.mrb[0].mxu0
  %v218 = vadd.f32 0.0, %v217
  %v219 = vpop.f32.mrb[0].mxu0
  %220 = vmatprep.mubr.f32.mxu0 0.0
  %221 = vmatmul.mubr.f32.gmra.mrb[0].mxu0 %v77
  %v222 = vpop.f32.mrb[0].mxu0
  %v223 = vadd.f32 0.0, %v222
  %v224 = vpop.f32.mrb[0].mxu0
  %225 = vmatprep.mubr.f32.mxu0 0.0
  %226 = vmatmul.mubr.f32.gmra.mrb[0].mxu0 %v80
  %v227 = vpop.f32.mrb[0].mxu0
  %v228 = vpop.f32.mrb[0].mxu0
  %229 = vdwg.mxu0
  %v231 = vsel %vm33, %v14, 0
  %v234 = vsel %vm82, %v30, 0
  %236 = vmatprep.subr.mxu0 0.0
  %237 = vmatpush1.msra.mxu0 %v234
  %238 = vmatprep.subr.mxu0 0.0
  %239 = vmatpush1.msra.mxu0 0.0
  %240 = vmatprep.subr.mxu0 0.0
  %241 = vmatpush1.msra.mxu0 0.0
  %242 = vmatprep.subr.mxu0 0.0
  %243 = vmatpush1.msra.mxu0 0.0
  %244 = vmatprep.subr.mxu0 0.0
  %245 = vmatpush1.msra.mxu0 0.0
  %246 = vmatprep.subr.mxu0 0.0
  %247 = vmatpush1.msra.mxu0 0.0
  %248 = vmatprep.subr.mxu0 0.0
  %249 = vmatpush1.msra.mxu0 0.0
  %250 = vmatprep.subr.mxu0 0.0
  %251 = vmatpush1.msra.mxu0 0.0
  %252 = vmatprep.subr.mxu0 0.0
  %253 = vmatpush1.msra.mxu0 0.0
  %254 = vmatprep.subr.mxu0 0.0
  %255 = vmatpush1.msra.mxu0 0.0
  %256 = vmatprep.subr.mxu0 0.0
  %257 = vmatpush1.msra.mxu0 0.0
  %258 = vmatprep.subr.mxu0 0.0
  %259 = vmatpush1.msra.mxu0 0.0
  %260 = vmatprep.subr.mxu0 0.0
  %261 = vmatpush1.msra.mxu0 0.0
  %262 = vmatprep.subr.mxu0 0.0
  %263 = vmatpush1.msra.mxu0 0.0
  %264 = vmatprep.subr.mxu0 0.0
  %265 = vmatpush1.msra.mxu0 0.0
  %266 = vmatprep.subr.mxu0 0.0
  %267 = vmatpush1.msra.mxu0 0.0
  %268 = vmatprep.subr.mxu0 0.0
  %269 = vmatpush1.msra.mxu0 0.0
  %270 = vmatprep.subr.mxu0 0.0
  %271 = vmatpush1.msra.mxu0 0.0
  %272 = vmatprep.subr.mxu0 0.0
  %273 = vmatpush1.msra.mxu0 0.0
  %274 = vmatprep.subr.mxu0 0.0
  %275 = vmatpush1.msra.mxu0 0.0
  %276 = vmatprep.subr.mxu0 0.0
  %277 = vmatpush1.msra.mxu0 0.0
  %278 = vmatprep.subr.mxu0 0.0
  %279 = vmatpush1.msra.mxu0 0.0
  %280 = vmatprep.subr.mxu0 0.0
  %281 = vmatpush1.msra.mxu0 0.0
  %282 = vmatprep.subr.mxu0 0.0
  %283 = vmatpush1.msra.mxu0 0.0
  %284 = vmatprep.subr.mxu0 0.0
  %285 = vmatpush1.msra.mxu0 0.0
  %286 = vmatprep.subr.mxu0 0.0
  %287 = vmatpush1.msra.mxu0 0.0
  %288 = vmatprep.subr.mxu0 0.0
  %289 = vmatpush1.msra.mxu0 0.0
  %290 = vmatprep.subr.mxu0 0.0
  %291 = vmatpush1.msra.mxu0 0.0
  %292 = vmatprep.subr.mxu0 0.0
  %293 = vmatpush1.msra.mxu0 0.0
  %294 = vmatprep.subr.mxu0 0.0
  %295 = vmatpush1.msra.mxu0 0.0
  %296 = vmatprep.subr.mxu0 0.0
  %297 = vmatpush1.msra.mxu0 0.0
  %298 = vmatprep.subr.mxu0 0.0
  %299 = vmatpush1.msra.mxu0 0.0
  %300 = vmatprep.mubr.f32.mxu0 0.0
  %301 = vmatmul.mubr.f32.gmra.mrb[0].mxu0 %v231
  %v302 = vpop.f32.mrb[0].mxu0
  %v303 = vadd.f32 %v153, %v302
  %v304 = vpop.f32.mrb[0].mxu0
  %305 = vmatprep.mubr.f32.mxu0 0.0
  %306 = vmatmul.mubr.f32.gmra.mrb[0].mxu0 %v35
  %v307 = vpop.f32.mrb[0].mxu0
  %v308 = vadd.f32 %v158, %v307
  %v309 = vpop.f32.mrb[0].mxu0
  %310 = vmatprep.mubr.f32.mxu0 0.0
  %311 = vmatmul.mubr.f32.gmra.mrb[0].mxu0 %v38
  %v312 = vpop.f32.mrb[0].mxu0
  %v313 = vadd.f32 %v163, %v312
  %v314 = vpop.f32.mrb[0].mxu0
  %315 = vmatprep.mubr.f32.mxu0 0.0
  %316 = vmatmul.mubr.f32.gmra.mrb[0].mxu0 %v41
  %v317 = vpop.f32.mrb[0].mxu0
  %v318 = vadd.f32 %v168, %v317
  %v319 = vpop.f32.mrb[0].mxu0
  %320 = vmatprep.mubr.f32.mxu0 0.0
  %321 = vmatmul.mubr.f32.gmra.mrb[0].mxu0 %v44
  %v322 = vpop.f32.mrb[0].mxu0
  %v323 = vadd.f32 %v173, %v322
  %v324 = vpop.f32.mrb[0].mxu0
  %325 = vmatprep.mubr.f32.mxu0 0.0
  %326 = vmatmul.mubr.f32.gmra.mrb[0].mxu0 %v47
  %v327 = vpop.f32.mrb[0].mxu0
  %v328 = vadd.f32 %v178, %v327
  %v329 = vpop.f32.mrb[0].mxu0
  %330 = vmatprep.mubr.f32.mxu0 0.0
  %331 = vmatmul.mubr.f32.gmra.mrb[0].mxu0 %v50
  %v332 = vpop.f32.mrb[0].mxu0
  %v333 = vadd.f32 %v183, %v332
  %v334 = vpop.f32.mrb[0].mxu0
  %335 = vmatprep.mubr.f32.mxu0 0.0
  %336 = vmatmul.mubr.f32.gmra.mrb[0].mxu0 %v53
  %v337 = vpop.f32.mrb[0].mxu0
  %v338 = vadd.f32 %v188, %v337
  %v339 = vpop.f32.mrb[0].mxu0
  %340 = vmatprep.mubr.f32.mxu0 0.0
  %341 = vmatmul.mubr.f32.gmra.mrb[0].mxu0 %v56
  %v342 = vpop.f32.mrb[0].mxu0
  %v343 = vadd.f32 %v193, %v342
  %v344 = vpop.f32.mrb[0].mxu0
  %345 = vmatprep.mubr.f32.mxu0 0.0
  %346 = vmatmul.mubr.f32.gmra.mrb[0].mxu0 %v59
  %v347 = vpop.f32.mrb[0].mxu0
  %v348 = vadd.f32 %v198, %v347
  %v349 = vpop.f32.mrb[0].mxu0
  %350 = vmatprep.mubr.f32.mxu0 0.0
  %351 = vmatmul.mubr.f32.gmra.mrb[0].mxu0 %v62
  %v352 = vpop.f32.mrb[0].mxu0
  %v353 = vadd.f32 %v203, %v352
  %v354 = vpop.f32.mrb[0].mxu0
  %355 = vmatprep.mubr.f32.mxu0 0.0
  %356 = vmatmul.mubr.f32.gmra.mrb[0].mxu0 %v65
  %v357 = vpop.f32.mrb[0].mxu0
  %v358 = vadd.f32 %v208, %v357
  %v359 = vpop.f32.mrb[0].mxu0
  %360 = vmatprep.mubr.f32.mxu0 0.0
  %361 = vmatmul.mubr.f32.gmra.mrb[0].mxu0 %v68
  %v362 = vpop.f32.mrb[0].mxu0
  %v363 = vadd.f32 %v213, %v362
  %v364 = vpop.f32.mrb[0].mxu0
  %365 = vmatprep.mubr.f32.mxu0 0.0
  %366 = vmatmul.mubr.f32.gmra.mrb[0].mxu0 %v71
  %v367 = vpop.f32.mrb[0].mxu0
  %v368 = vadd.f32 %v218, %v367
  %v369 = vpop.f32.mrb[0].mxu0
  %370 = vmatprep.mubr.f32.mxu0 0.0
  %371 = vmatmul.mubr.f32.gmra.mrb[0].mxu0 %v74
  %v372 = vpop.f32.mrb[0].mxu0
  %v373 = vadd.f32 %v223, %v372
  %v374 = vpop.f32.mrb[0].mxu0
  %375 = vmatprep.mubr.f32.mxu0 0.0
  %376 = vmatmul.mubr.f32.gmra.mrb[0].mxu0 %v77
  %v377 = vpop.f32.mrb[0].mxu0
  %v378 = vpop.f32.mrb[0].mxu0
  %379 = vdwg.mxu0
  %v380 = vld [vmem:[%s0 + $0x10] sm:$0xff]
  %v381 = vld [vmem:[%s0 + $0x18] sm:$0xff]
  %v382 = vld [vmem:[%s0 + $0x20] sm:$0xff]
  %v383 = vld [vmem:[%s0 + $0x28] sm:$0xff]
  %v384 = vld [vmem:[%s0 + $0x30] sm:$0xff]
  %v385 = vld [vmem:[%s0 + $0x38] sm:$0xff]
  %v386 = vld [vmem:[%s0 + $0x40] sm:$0xff]
  %v387 = vld [vmem:[%s0 + $0x48] sm:$0xff]
  %v388 = vld [vmem:[%s0 + $0x50] sm:$0xff]
  %v389 = vld [vmem:[%s0 + $0x58] sm:$0xff]
  %v390 = vld [vmem:[%s0 + $0x60] sm:$0xff]
  %v391 = vld [vmem:[%s0 + $0x68] sm:$0xff]
  %v392 = vld [vmem:[%s0 + $0x70] sm:$0xff]
  %v393 = vld [vmem:[%s0 + $0x78] sm:$0xff]
  %v394 = vld [vmem:[%s0 + $0x80] sm:$0xff]
  %v395 = vld [vmem:[%s0 + $0x88] sm:$0xff]
  %v396 = vld [vmem:[%s1 + $0x8] sm:$0xf]
  %v398 = vsel %vm33, %v380, 0
  %v401 = vsel %vm33, %v381, 0
  %v404 = vsel %vm33, %v382, 0
  %v407 = vsel %vm33, %v383, 0
  %v410 = vsel %vm33, %v384, 0
  %v413 = vsel %vm33, %v385, 0
  %v416 = vsel %vm33, %v386, 0
  %v419 = vsel %vm33, %v387, 0
  %v422 = vsel %vm33, %v388, 0
  %v425 = vsel %vm33, %v389, 0
  %v428 = vsel %vm33, %v390, 0
  %v431 = vsel %vm33, %v391, 0
  %v434 = vsel %vm33, %v392, 0
  %v437 = vsel %vm33, %v393, 0
  %v440 = vsel %vm33, %v394, 0
  %v443 = vsel %vm33, %v395, 0
  %v446 = vsel %vm82, %v396, 0
  %448 = vmatprep.subr.mxu0 0.0
  %449 = vmatpush1.msra.mxu0 %v446
  %450 = vmatprep.subr.mxu0 0.0
  %451 = vmatpush1.msra.mxu0 0.0
  %452 = vmatprep.subr.mxu0 0.0
  %453 = vmatpush1.msra.mxu0 0.0
  %454 = vmatprep.subr.mxu0 0.0
  %455 = vmatpush1.msra.mxu0 0.0
  %456 = vmatprep.subr.mxu0 0.0
  %457 = vmatpush1.msra.mxu0 0.0
  %458 = vmatprep.subr.mxu0 0.0
  %459 = vmatpush1.msra.mxu0 0.0
  %460 = vmatprep.subr.mxu0 0.0
  %461 = vmatpush1.msra.mxu0 0.0
  %462 = vmatprep.subr.mxu0 0.0
  %463 = vmatpush1.msra.mxu0 0.0
  %464 = vmatprep.subr.mxu0 0.0
  %465 = vmatpush1.msra.mxu0 0.0
  %466 = vmatprep.subr.mxu0 0.0
  %467 = vmatpush1.msra.mxu0 0.0
  %468 = vmatprep.subr.mxu0 0.0
  %469 = vmatpush1.msra.mxu0 0.0
  %470 = vmatprep.subr.mxu0 0.0
  %471 = vmatpush1.msra.mxu0 0.0
  %472 = vmatprep.subr.mxu0 0.0
  %473 = vmatpush1.msra.mxu0 0.0
  %474 = vmatprep.subr.mxu0 0.0
  %475 = vmatpush1.msra.mxu0 0.0
  %476 = vmatprep.subr.mxu0 0.0
  %477 = vmatpush1.msra.mxu0 0.0
  %478 = vmatprep.subr.mxu0 0.0
  %479 = vmatpush1.msra.mxu0 0.0
  %480 = vmatprep.subr.mxu0 0.0
  %481 = vmatpush1.msra.mxu0 0.0
  %482 = vmatprep.subr.mxu0 0.0
  %483 = vmatpush1.msra.mxu0 0.0
  %484 = vmatprep.subr.mxu0 0.0
  %485 = vmatpush1.msra.mxu0 0.0
  %486 = vmatprep.subr.mxu0 0.0
  %487 = vmatpush1.msra.mxu0 0.0
  %488 = vmatprep.subr.mxu0 0.0
  %489 = vmatpush1.msra.mxu0 0.0
  %490 = vmatprep.subr.mxu0 0.0
  %491 = vmatpush1.msra.mxu0 0.0
  %492 = vmatprep.subr.mxu0 0.0
  %493 = vmatpush1.msra.mxu0 0.0
  %494 = vmatprep.subr.mxu0 0.0
  %495 = vmatpush1.msra.mxu0 0.0
  %496 = vmatprep.subr.mxu0 0.0
  %497 = vmatpush1.msra.mxu0 0.0
  %498 = vmatprep.subr.mxu0 0.0
  %499 = vmatpush1.msra.mxu0 0.0
  %500 = vmatprep.subr.mxu0 0.0
  %501 = vmatpush1.msra.mxu0 0.0
  %502 = vmatprep.subr.mxu0 0.0
  %503 = vmatpush1.msra.mxu0 0.0
  %504 = vmatprep.subr.mxu0 0.0
  %505 = vmatpush1.msra.mxu0 0.0
  %506 = vmatprep.subr.mxu0 0.0
  %507 = vmatpush1.msra.mxu0 0.0
  %508 = vmatprep.subr.mxu0 0.0
  %509 = vmatpush1.msra.mxu0 0.0
  %510 = vmatprep.subr.mxu0 0.0
  %511 = vmatpush1.msra.mxu0 0.0
  %512 = vmatprep.mubr.f32.mxu0 0.0
  %513 = vmatmul.mubr.f32.gmra.mrb[0].mxu0 %v398
  %v514 = vpop.f32.mrb[0].mxu0
  %v515 = vadd.f32 0.0, %v514
  %v516 = vpop.f32.mrb[0].mxu0
  %517 = vmatprep.mubr.f32.mxu0 0.0
  %518 = vmatmul.mubr.f32.gmra.mrb[0].mxu0 %v401
  %v519 = vpop.f32.mrb[0].mxu0
  %v520 = vadd.f32 0.0, %v519
  %v521 = vpop.f32.mrb[0].mxu0
  %522 = vmatprep.mubr.f32.mxu0 0.0
  %523 = vmatmul.mubr.f32.gmra.mrb[0].mxu0 %v404
  %v524 = vpop.f32.mrb[0].mxu0
  %v525 = vadd.f32 0.0, %v524
  %v526 = vpop.f32.mrb[0].mxu0
  %527 = vmatprep.mubr.f32.mxu0 0.0
  %528 = vmatmul.mubr.f32.gmra.mrb[0].mxu0 %v407
  %v529 = vpop.f32.mrb[0].mxu0
  %v530 = vadd.f32 0.0, %v529
  %v531 = vpop.f32.mrb[0].mxu0
  %532 = vmatprep.mubr.f32.mxu0 0.0
  %533 = vmatmul.mubr.f32.gmra.mrb[0].mxu0 %v410
  %v534 = vpop.f32.mrb[0].mxu0
  %v535 = vadd.f32 0.0, %v534
  %v536 = vpop.f32.mrb[0].mxu0
  %537 = vmatprep.mubr.f32.mxu0 0.0
  %538 = vmatmul.mubr.f32.gmra.mrb[0].mxu0 %v413
  %v539 = vpop.f32.mrb[0].mxu0
  %v540 = vadd.f32 0.0, %v539
  %v541 = vpop.f32.mrb[0].mxu0
  %542 = vmatprep.mubr.f32.mxu0 0.0
  %543 = vmatmul.mubr.f32.gmra.mrb[0].mxu0 %v416
  %v544 = vpop.f32.mrb[0].mxu0
  %v545 = vadd.f32 0.0, %v544
  %v546 = vpop.f32.mrb[0].mxu0
  %547 = vmatprep.mubr.f32.mxu0 0.0
  %548 = vmatmul.mubr.f32.gmra.mrb[0].mxu0 %v419
  %v549 = vpop.f32.mrb[0].mxu0
  %v550 = vadd.f32 0.0, %v549
  %v551 = vpop.f32.mrb[0].mxu0
  %552 = vmatprep.mubr.f32.mxu0 0.0
  %553 = vmatmul.mubr.f32.gmra.mrb[0].mxu0 %v422
  %v554 = vpop.f32.mrb[0].mxu0
  %v555 = vadd.f32 0.0, %v554
  %v556 = vpop.f32.mrb[0].mxu0
  %557 = vmatprep.mubr.f32.mxu0 0.0
  %558 = vmatmul.mubr.f32.gmra.mrb[0].mxu0 %v425
  %v559 = vpop.f32.mrb[0].mxu0
  %v560 = vadd.f32 0.0, %v559
  %v561 = vpop.f32.mrb[0].mxu0
  %562 = vmatprep.mubr.f32.mxu0 0.0
  %563 = vmatmul.mubr.f32.gmra.mrb[0].mxu0 %v428
  %v564 = vpop.f32.mrb[0].mxu0
  %v565 = vadd.f32 0.0, %v564
  %v566 = vpop.f32.mrb[0].mxu0
  %567 = vmatprep.mubr.f32.mxu0 0.0
  %568 = vmatmul.mubr.f32.gmra.mrb[0].mxu0 %v431
  %v569 = vpop.f32.mrb[0].mxu0
  %v570 = vadd.f32 0.0, %v569
  %v571 = vpop.f32.mrb[0].mxu0
  %572 = vmatprep.mubr.f32.mxu0 0.0
  %573 = vmatmul.mubr.f32.gmra.mrb[0].mxu0 %v434
  %v574 = vpop.f32.mrb[0].mxu0
  %v575 = vadd.f32 0.0, %v574
  %v576 = vpop.f32.mrb[0].mxu0
  %577 = vmatprep.mubr.f32.mxu0 0.0
  %578 = vmatmul.mubr.f32.gmra.mrb[0].mxu0 %v437
  %v579 = vpop.f32.mrb[0].mxu0
  %v580 = vadd.f32 0.0, %v579
  %v581 = vpop.f32.mrb[0].mxu0
  %582 = vmatprep.mubr.f32.mxu0 0.0
  %583 = vmatmul.mubr.f32.gmra.mrb[0].mxu0 %v440
  %v584 = vpop.f32.mrb[0].mxu0
  %v585 = vadd.f32 0.0, %v584
  %v586 = vpop.f32.mrb[0].mxu0
  %587 = vmatprep.mubr.f32.mxu0 0.0
  %588 = vmatmul.mubr.f32.gmra.mrb[0].mxu0 %v443
  %v589 = vpop.f32.mrb[0].mxu0
  %v590 = vpop.f32.mrb[0].mxu0
  %591 = vdwg.mxu0
  %v592 = vadd.f32 %v303, %v515
  %v593 = vadd.f32 %v308, %v520
  %v594 = vadd.f32 %v313, %v525
  %v595 = vadd.f32 %v318, %v530
  %v596 = vadd.f32 %v323, %v535
  %v597 = vadd.f32 %v328, %v540
  %v598 = vadd.f32 %v333, %v545
  %v599 = vadd.f32 %v338, %v550
  %v600 = vadd.f32 %v343, %v555
  %v601 = vadd.f32 %v348, %v560
  %v602 = vadd.f32 %v353, %v565
  %v603 = vadd.f32 %v358, %v570
  %v604 = vadd.f32 %v363, %v575
  %v605 = vadd.f32 %v368, %v580
  %v606 = vadd.f32 %v373, %v585
  %v607 = vld [vmem:[%s2] sm:$0x1]
  %v609 = vlaneseq
  %v610 = vshrl.u32 %v609, 7
  %v611 = vsub.s32 0, %v610
  %v612 = vrot.slane %v607, %v611
  %v614 = vadd.f32 %v592, %v612
  %v615 = vadd.f32 %v593, %v612
  %v616 = vadd.f32 %v594, %v612
  %v617 = vadd.f32 %v595, %v612
  %v618 = vadd.f32 %v596, %v612
  %v619 = vadd.f32 %v597, %v612
  %v620 = vadd.f32 %v598, %v612
  %v621 = vadd.f32 %v599, %v612
  %v622 = vadd.f32 %v600, %v612
  %v623 = vadd.f32 %v601, %v612
  %v624 = vadd.f32 %v602, %v612
  %v625 = vadd.f32 %v603, %v612
  %v626 = vadd.f32 %v604, %v612
  %v627 = vadd.f32 %v605, %v612
  %v628 = vadd.f32 %v606, %v612
  %v629 = vmax.f32 %v614, %v615
  %v630 = vmax.f32 %v629, %v616
  %vm631 = vcmask 261120
  %632 = vst.msk [vmem:[%s3] sm:$0xff] %vm631, %v630
  %v633 = vmax.f32 %v616, %v617
  %v634 = vmax.f32 %v633, %v618
  %635 = vst.msk [vmem:[%s3 + $0x8] sm:$0xff] %vm631, %v634
  %v636 = vmax.f32 %v618, %v619
  %v637 = vmax.f32 %v636, %v620
  %638 = vst.msk [vmem:[%s3 + $0x10] sm:$0xff] %vm631, %v637
  %v639 = vmax.f32 %v620, %v621
  %v640 = vmax.f32 %v639, %v622
  %641 = vst.msk [vmem:[%s3 + $0x18] sm:$0xff] %vm631, %v640
  %v642 = vmax.f32 %v622, %v623
  %v643 = vmax.f32 %v642, %v624
  %644 = vst.msk [vmem:[%s3 + $0x20] sm:$0xff] %vm631, %v643
  %v645 = vmax.f32 %v624, %v625
  %v646 = vmax.f32 %v645, %v626
  %647 = vst.msk [vmem:[%s3 + $0x28] sm:$0xff] %vm631, %v646
  %v648 = vmax.f32 %v626, %v627
  %v649 = vmax.f32 %v648, %v628
  %650 = vst.msk [vmem:[%s3 + $0x30] sm:$0xff] %vm631, %v649
  // Predicated region
  $region14: #{_oc_scnn_forward.2} parent=0 // pred_check
    _
  $region15: #{_oc_scnn_forward.2} parent=0 // pred_check_branch
    %652 = sbr.rel (0) target = $region17
  $region16: #{_oc_scnn_forward.2} parent=0 // pred_region
    _
  $region17: #{_oc_scnn_forward.2} parent=0 // pred_fallthru
    _
  // Predicated region
  $region18: #{_oc_scnn_forward.2} parent=0 // pred_check
    _
  $region19: #{_oc_scnn_forward.2} parent=0 // pred_check_branch
    %654 = sbr.rel (0) target = $region21
  $region20: #{_oc_scnn_forward.2} parent=0 // pred_region
    _
  $region21: #{_oc_scnn_forward.2} parent=0 // pred_fallthru
    _

// kernel: _oc_scnn_forward.3
$region0: #{_oc_scnn_forward.3}
  #allocation0 [shape = 'u32[]', space=smem, size = 0x4, offset = 0x4, fixed_abs, tag = 'smem constant byte address 0x4 - core index']
  #allocation1 [shape = 'u32[144,128]{1,0:T(1,128)}', space=vmem, size = 0x12000, scoped, tag = 'internal scratch']
  #allocation2 [shape = 'f32[14,32]{1,0:T(8,128)}', space=vmem, size = 0x2000, scoped, tag = 'scratch operand']
  #allocation3 [shape = 'f32[18,32]{1,0:T(8,128)}', space=vmem, size = 0x3000, scoped, tag = 'scratch operand']
  #allocation4 [shape = 'f32[6,64]{1,0:T(8,128)}', space=vmem, size = 0x1000, scoped, tag = 'scratch operand']
  #allocation5 [shape = 'f32[2,256]{1,0:T(2,128)}', space=vmem, size = 0x800, scoped, tag = 'scratch operand']
  #allocation6 [shape = 'f32[2,128]{1,0:T(2,128)}', space=vmem, size = 0x400, scoped, tag = 'scratch operand']
  %s0 = inlined_call_operand.vmem [shape: f32[4,14,32], index: 0, kind: input, shape index: {}]
  %s1 = inlined_call_operand.vmem [shape: f32[96,64], index: 1, kind: input, shape index: {}]
  %s2 = inlined_call_operand.vmem [shape: f32[1,64], index: 2, kind: input, shape index: {}]
  %s3 = inlined_call_operand.vmem [shape: f32[192,256], index: 3, kind: input, shape index: {}]
  %s4 = inlined_call_operand.vmem [shape: f32[1,256], index: 4, kind: input, shape index: {}]
  %s5 = inlined_call_operand.vmem [shape: f32[256,128], index: 5, kind: input, shape index: {}]
  %s6 = inlined_call_operand.vmem [shape: f32[1,128], index: 6, kind: input, shape index: {}]
  %s7 = inlined_call_operand.vmem [shape: f32[1,4], index: 7, kind: input, shape index: {}]
  %s8 = inlined_call_operand.hbm [shape: f32[4,2,256], index: 8, kind: output, shape index: {0}]
  %s9 = inlined_call_operand.hbm [shape: f32[4,2,256], index: 9, kind: output, shape index: {1}]
  %s10 = inlined_call_operand.vmem [shape: f32[4,2,128], index: 10, kind: output, shape index: {2}]
  %s11 = inlined_call_operand.vmem [shape: f32[4,2,128], index: 11, kind: output, shape index: {3}]
  %12 = xla_tuple %s8, %s9, %s10, %s11
  %s13 = sld [smem:[#allocation0]]
  $region74: #{_oc_scnn_forward.3} parent=0
    _
  %s15 = ssub.s32 1, %s13
  %s16 = scalar_select 0, %s15, %s13
  $region1: #{_oc_scnn_forward.3} parent=0
    #allocation7 [shape = 'u8[512]{0}', space=smem, size = 0x200, scoped, tag = 'input window, operand 7, single buffered']
    #allocation8 [shape = 's32[1]{0}', space=sflag, size = 0x4, scoped, tag = 'scoped memory for _oc_scnn_forward.3']
    #allocation9 [shape = 's32[1]{0}', space=sflag, size = 0x4, scoped, tag = 'scoped memory for _oc_scnn_forward.3']
    #allocation10 [shape = 'u8[8192]{0}', space=vmem, size = 0x2000, scoped, tag = 'output window, operand 0, single buffered']
    #allocation11 [shape = 'u8[8192]{0}', space=vmem, size = 0x2000, scoped, tag = 'output window, operand 1, single buffered']
    #allocation12 [shape = 's32[1]{0}', space=sflag, size = 0x4, scoped, tag = 'scoped memory for _oc_scnn_forward.3']
    %17 = vsyncpa [#allocation9], 0
    %18 = vsyncpa [#allocation8], 0
    %19 = vsyncpa [#allocation12], 0
    // Predicated region
    $region2: #{_oc_scnn_forward.3} parent=1 // pred_check
      _
    $region3: #{_oc_scnn_forward.3} parent=1 // pred_check_branch
      %21 = sbr.rel (0) target = $region5
    $region4: #{_oc_scnn_forward.3} parent=1 // pred_region
      _
    $region5: #{_oc_scnn_forward.3} parent=1 // pred_fallthru
      _
    // Predicated region
    $region6: #{_oc_scnn_forward.3} parent=1 // pred_check
      _
    $region7: #{_oc_scnn_forward.3} parent=1 // pred_check_branch
      %23 = sbr.rel (0) target = $region9
    $region8: #{_oc_scnn_forward.3} parent=1 // pred_region
      _
    $region9: #{_oc_scnn_forward.3} parent=1 // pred_fallthru
      _
    // Predicated region
    $region10: #{_oc_scnn_forward.3} parent=1 // pred_check
      _
    $region11: #{_oc_scnn_forward.3} parent=1 // pred_check_branch
      %25 = sbr.rel (0) target = $region13
    $region12: #{_oc_scnn_forward.3} parent=1 // pred_region
      _
    $region13: #{_oc_scnn_forward.3} parent=1 // pred_fallthru
      _
    // Predicated region
    $region14: #{_oc_scnn_forward.3} parent=1 // pred_check
      _
    $region15: #{_oc_scnn_forward.3} parent=1 // pred_check_branch
      %27 = sbr.rel (0) target = $region17
    $region16: #{_oc_scnn_forward.3} parent=1 // pred_region
      _
    $region17: #{_oc_scnn_forward.3} parent=1 // pred_fallthru
      _
    // Predicated region
    $region18: #{_oc_scnn_forward.3} parent=1 // pred_check
      _
    $region19: #{_oc_scnn_forward.3} parent=1 // pred_check_branch
      %29 = sbr.rel (0) target = $region21
    $region20: #{_oc_scnn_forward.3} parent=1 // pred_region
      _
    $region21: #{_oc_scnn_forward.3} parent=1 // pred_fallthru
      _
    // Predicated region
    $region22: #{_oc_scnn_forward.3} parent=1 // pred_check
      _
    $region23: #{_oc_scnn_forward.3} parent=1 // pred_check_branch
      %31 = sbr.rel (0) target = $region25
    $region24: #{_oc_scnn_forward.3} parent=1 // pred_region
      _
    $region25: #{_oc_scnn_forward.3} parent=1 // pred_fallthru
      _
    // Predicated region
    $region26: #{_oc_scnn_forward.3} parent=1 // pred_check
      _
    $region27: #{_oc_scnn_forward.3} parent=1 // pred_check_branch
      %33 = sbr.rel (0) target = $region29
    $region28: #{_oc_scnn_forward.3} parent=1 // pred_region
      _
    $region29: #{_oc_scnn_forward.3} parent=1 // pred_fallthru
      _
    // Predicated region
    $region30: #{_oc_scnn_forward.3} parent=1 // pred_check
      _
    $region31: #{_oc_scnn_forward.3} parent=1 // pred_check_branch
      %35 = sbr.rel (0) target = $region33
    $region32: #{_oc_scnn_forward.3} parent=1 // pred_region
      %s37 = ssub.s32 16, 16
      %38 = vsyncadd [#allocation9], %s37
      %s40 = sshll.u32 %s7, 4
      %s41 = int_to_ptr.vmem [resolvable:$true] %s40
      %43 = dma.vmem_to_smem %s41, 16, [#allocation7], [#allocation9]
    $region33: #{_oc_scnn_forward.3} parent=1 // pred_fallthru
      _
    // Predicated region
    $region34: #{_oc_scnn_forward.3} parent=1 // pred_check
      _
    $region35: #{_oc_scnn_forward.3} parent=1 // pred_check_branch
      %45 = sbr.rel (0) target = $region37
    $region36: #{_oc_scnn_forward.3} parent=1 // pred_region
      %46 = dma.done [#allocation9], 16
    $region37: #{_oc_scnn_forward.3} parent=1 // pred_fallthru
      _
    %47 = sfence
    %p48 = scmp.eq.s32.totalorder 0, 0
    // Predicated region
    $region38: #{_oc_scnn_forward.3} parent=1 // pred_check
      %p49 = pneg %p48
    $region39: #{_oc_scnn_forward.3} parent=1 // pred_check_branch
      %51 = sbr.rel (%p49) target = $region41
    $region40: #{_oc_scnn_forward.3} parent=1 // pred_region
      %vm52 = vcmask 261120
      %53 = vst.msk [vmem:[#allocation2] sm:$0xff] %vm52, 0.0
      %vm54 = vcmask 259072
      %55 = vst.msk [vmem:[#allocation2 + $0x8] sm:$0x3f] %vm54, 0.0
      %56 = vst.msk [vmem:[#allocation3] sm:$0xff] %vm52, 0.0
      %57 = vst.msk [vmem:[#allocation3 + $0x8] sm:$0xff] %vm52, 0.0
      %vm58 = vcmask 254976
      %59 = vst.msk [vmem:[#allocation3 + $0x10] sm:$0x3] %vm58, 0.0
      %vm60 = vcmask 521216
      %61 = vst.msk [vmem:[#allocation4] sm:$0x3f] %vm60, 0.0
      %62 = vst [vmem:[#allocation5] sm:$0xf] 0.0
      %63 = vst [vmem:[#allocation6] sm:$0x3] 0.0
    $region41: #{_oc_scnn_forward.3} parent=1 // pred_fallthru
      _
    %s64 = sld [smem:[#allocation7]]
    %s65 = sld [smem:[#allocation7 + $0x1]]
    %s66 = sld [smem:[#allocation7 + $0x2]]
    %s67 = sld [smem:[#allocation7 + $0x3]]
    %v68 = vld [vmem:[%s2] sm:$0x1]
    %v69 = vld [vmem:[%s4] sm:$0x3]
    %v70 = vld [vmem:[%s5] sm:$0xff]
    %v71 = vld [vmem:[%s5 + $0x8] sm:$0xff]
    %v72 = vld [vmem:[%s5 + $0x10] sm:$0xff]
    %v73 = vld [vmem:[%s5 + $0x18] sm:$0xff]
    %v74 = vld [vmem:[%s5 + $0x20] sm:$0xff]
    %v75 = vld [vmem:[%s5 + $0x28] sm:$0xff]
    %v76 = vld [vmem:[%s5 + $0x30] sm:$0xff]
    %v77 = vld [vmem:[%s5 + $0x38] sm:$0xff]
    %v78 = vld [vmem:[%s5 + $0x40] sm:$0xff]
    %v79 = vld [vmem:[%s5 + $0x48] sm:$0xff]
    %v80 = vld [vmem:[%s5 + $0x50] sm:$0xff]
    %v81 = vld [vmem:[%s5 + $0x58] sm:$0xff]
    %v82 = vld [vmem:[%s5 + $0x60] sm:$0xff]
    %v83 = vld [vmem:[%s5 + $0x68] sm:$0xff]
    %v84 = vld [vmem:[%s5 + $0x70] sm:$0xff]
    %v85 = vld [vmem:[%s5 + $0x78] sm:$0xff]
    %v86 = vld [vmem:[%s5 + $0x80] sm:$0xff]
    %v87 = vld [vmem:[%s5 + $0x88] sm:$0xff]
    %v88 = vld [vmem:[%s5 + $0x90] sm:$0xff]
    %v89 = vld [vmem:[%s5 + $0x98] sm:$0xff]
    %v90 = vld [vmem:[%s5 + $0xa0] sm:$0xff]
    %v91 = vld [vmem:[%s5 + $0xa8] sm:$0xff]
    %v92 = vld [vmem:[%s5 + $0xb0] sm:$0xff]
    %v93 = vld [vmem:[%s5 + $0xb8] sm:$0xff]
    %v94 = vld [vmem:[%s5 + $0xc0] sm:$0xff]
    %v95 = vld [vmem:[%s5 + $0xc8] sm:$0xff]
    %v96 = vld [vmem:[%s5 + $0xd0] sm:$0xff]
    %v97 = vld [vmem:[%s5 + $0xd8] sm:$0xff]
    %v98 = vld [vmem:[%s5 + $0xe0] sm:$0xff]
    %v99 = vld [vmem:[%s5 + $0xe8] sm:$0xff]
    %v100 = vld [vmem:[%s5 + $0xf0] sm:$0xff]
    %v101 = vld [vmem:[%s5 + $0xf8] sm:$0xff]
    %v102 = vld [vmem:[%s6] sm:$0x1]
    %v103 = vld [vmem:[#allocation2] sm:$0xff]
    %v104 = vld [vmem:[#allocation2 + $0x8] sm:$0x3f]
    %v105 = vld [vmem:[%s0] sm:$0xff]
    %v106 = vld [vmem:[%s0 + $0x8] sm:$0x3f]
    %v107 = vstv %s64
    %vm108 = vcmp.gt.f32.partialorder %v103, %v107
    %vm109 = vcmp.gt.f32.partialorder %v104, %v107
    %v110 = vsel %vm108, 1, 0
    %v111 = vsel %vm109, 1, 0
    %v112 = vcvt.s32.f32 %v110
    %v113 = vcvt.s32.f32 %v111
    %v114 = vmul.f32 %v103, 0.5
    %v115 = vmul.f32 %v104, 0.5
    %v116 = vadd.f32 %v114, %v105
    %v117 = vadd.f32 %v115, %v106
    %v118 = vmul.f32 %v112, %v107
    %v119 = vmul.f32 %v113, %v107
    %v120 = vsub.f32 %v116, %v118
    %v121 = vsub.f32 %v117, %v119
    %vm122 = vcmp.gt.f32.partialorder %v120, %v107
    %vm123 = vcmp.gt.f32.partialorder %v121, %v107
    %v124 = vsel %vm122, 1, 0
    %v125 = vsel %vm123, 1, 0
    %v126 = vcvt.s32.f32 %v124
    %v127 = vcvt.s32.f32 %v125
    %vm128 = vcmask 261120
    %129 = vst.msk [vmem:[#allocation2] sm:$0xff] %vm128, %v120
    %vm130 = vcmask 259072
    %131 = vst.msk [vmem:[#allocation2 + $0x8] sm:$0x3f] %vm130, %v121
    %132 = vst.msk [vmem:[#allocation3 + $0x2] sm:$0xff] %vm128, %v126
    %133 = vst.msk [vmem:[#allocation3 + $0xa] sm:$0x3f] %vm130, %v127
    %v134 = vld [vmem:[#allocation3] sm:$0xff]
    %v135 = vld [vmem:[#allocation3 + $0x8] sm:$0x3f]
    %v136 = vld [vmem:[%s1] sm:$0xff]
    %v137 = vld [vmem:[%s1 + $0x8] sm:$0xff]
    %v138 = vld [vmem:[%s1 + $0x10] sm:$0xff]
    %v139 = vld [vmem:[%s1 + $0x18] sm:$0xff]
    %v140 = vld [vmem:[#allocation3 + $0x2] sm:$0xff]
    %v141 = vld [vmem:[#allocation3 + $0xa] sm:$0x3f]
    %v142 = vld [vmem:[%s1 + $0x20] sm:$0xff]
    %v143 = vld [vmem:[%s1 + $0x28] sm:$0xff]
    %v144 = vld [vmem:[%s1 + $0x30] sm:$0xff]
    %v145 = vld [vmem:[%s1 + $0x38] sm:$0xff]
    %v147 = vsel %vm128, %v140, 0
    %v150 = vsel %vm128, %v141, 0
    %152 = vmatprep.subr.mxu0 0.0
    %153 = vmatpush1.msra.mxu0 %v142
    %154 = vmatprep.subr.mxu0 0.0
    %155 = vmatpush1.msra.mxu0 %v143
    %156 = vmatprep.subr.mxu0 0.0
    %157 = vmatpush1.msra.mxu0 %v144
    %158 = vmatprep.subr.mxu0 0.0
    %159 = vmatpush1.msra.mxu0 %v145
    %160 = vmatprep.subr.mxu0 0.0
    %161 = vmatpush1.msra.mxu0 0.0
    %162 = vmatprep.subr.mxu0 0.0
    %163 = vmatpush1.msra.mxu0 0.0
    %164 = vmatprep.subr.mxu0 0.0
    %165 = vmatpush1.msra.mxu0 0.0
    %166 = vmatprep.subr.mxu0 0.0
    %167 = vmatpush1.msra.mxu0 0.0
    %168 = vmatprep.subr.mxu0 0.0
    %169 = vmatpush1.msra.mxu0 0.0
    %170 = vmatprep.subr.mxu0 0.0
    %171 = vmatpush1.msra.mxu0 0.0
    %172 = vmatprep.subr.mxu0 0.0
    %173 = vmatpush1.msra.mxu0 0.0
    %174 = vmatprep.subr.mxu0 0.0
    %175 = vmatpush1.msra.mxu0 0.0
    %176 = vmatprep.subr.mxu0 0.0
    %177 = vmatpush1.msra.mxu0 0.0
    %178 = vmatprep.subr.mxu0 0.0
    %179 = vmatpush1.msra.mxu0 0.0
    %180 = vmatprep.subr.mxu0 0.0
    %181 = vmatpush1.msra.mxu0 0.0
    %182 = vmatprep.subr.mxu0 0.0
    %183 = vmatpush1.msra.mxu0 0.0
    %184 = vmatprep.subr.mxu0 0.0
    %185 = vmatpush1.msra.mxu0 0.0
    %186 = vmatprep.subr.mxu0 0.0
    %187 = vmatpush1.msra.mxu0 0.0
    %188 = vmatprep.subr.mxu0 0.0
    %189 = vmatpush1.msra.mxu0 0.0
    %190 = vmatprep.subr.mxu0 0.0
    %191 = vmatpush1.msra.mxu0 0.0
    %192 = vmatprep.subr.mxu0 0.0
    %193 = vmatpush1.msra.mxu0 0.0
    %194 = vmatprep.subr.mxu0 0.0
    %195 = vmatpush1.msra.mxu0 0.0
    %196 = vmatprep.subr.mxu0 0.0
    %197 = vmatpush1.msra.mxu0 0.0
    %198 = vmatprep.subr.mxu0 0.0
    %199 = vmatpush1.msra.mxu0 0.0
    %200 = vmatprep.subr.mxu0 0.0
    %201 = vmatpush1.msra.mxu0 0.0
    %202 = vmatprep.subr.mxu0 0.0
    %203 = vmatpush1.msra.mxu0 0.0
    %204 = vmatprep.subr.mxu0 0.0
    %205 = vmatpush1.msra.mxu0 0.0
    %206 = vmatprep.subr.mxu0 0.0
    %207 = vmatpush1.msra.mxu0 0.0
    %208 = vmatprep.subr.mxu0 0.0
    %209 = vmatpush1.msra.mxu0 0.0
    %210 = vmatprep.subr.mxu0 0.0
    %211 = vmatpush1.msra.mxu0 0.0
    %212 = vmatprep.subr.mxu0 0.0
    %213 = vmatpush1.msra.mxu0 0.0
    %214 = vmatprep.subr.mxu0 0.0
    %215 = vmatpush1.msra.mxu0 0.0
    %216 = vmatprep.mubr.f32.mxu0 0.0
    %217 = vmatmul.mubr.f32.gmra.mrb[0].mxu0 %v147
    %v218 = vpop.f32.mrb[0].mxu0
    %v219 = vadd.f32 0.0, %v218
    %v220 = vpop.f32.mrb[0].mxu0
    %221 = vmatprep.mubr.f32.mxu0 0.0
    %222 = vmatmul.mubr.f32.gmra.mrb[0].mxu0 %v150
    %v223 = vpop.f32.mrb[0].mxu0
    %v224 = vadd.f32 0.0, %v223
    %v225 = vpop.f32.mrb[0].mxu0
    %226 = vdwg.mxu0
    %v228 = vsel %vm128, %v134, 0
    %v231 = vsel %vm128, %v135, 0
    %233 = vmatprep.subr.mxu0 0.0
    %234 = vmatpush1.msra.mxu0 %v136
    %235 = vmatprep.subr.mxu0 0.0
    %236 = vmatpush1.msra.mxu0 %v137
    %237 = vmatprep.subr.mxu0 0.0
    %238 = vmatpush1.msra.mxu0 %v138
    %239 = vmatprep.subr.mxu0 0.0
    %240 = vmatpush1.msra.mxu0 %v139
    %241 = vmatprep.subr.mxu0 0.0
    %242 = vmatpush1.msra.mxu0 0.0
    %243 = vmatprep.subr.mxu0 0.0
    %244 = vmatpush1.msra.mxu0 0.0
    %245 = vmatprep.subr.mxu0 0.0
    %246 = vmatpush1.msra.mxu0 0.0
    %247 = vmatprep.subr.mxu0 0.0
    %248 = vmatpush1.msra.mxu0 0.0
    %249 = vmatprep.subr.mxu0 0.0
    %250 = vmatpush1.msra.mxu0 0.0
    %251 = vmatprep.subr.mxu0 0.0
    %252 = vmatpush1.msra.mxu0 0.0
    %253 = vmatprep.subr.mxu0 0.0
    %254 = vmatpush1.msra.mxu0 0.0
    %255 = vmatprep.subr.mxu0 0.0
    %256 = vmatpush1.msra.mxu0 0.0
    %257 = vmatprep.subr.mxu0 0.0
    %258 = vmatpush1.msra.mxu0 0.0
    %259 = vmatprep.subr.mxu0 0.0
    %260 = vmatpush1.msra.mxu0 0.0
    %261 = vmatprep.subr.mxu0 0.0
    %262 = vmatpush1.msra.mxu0 0.0
    %263 = vmatprep.subr.mxu0 0.0
    %264 = vmatpush1.msra.mxu0 0.0
    %265 = vmatprep.subr.mxu0 0.0
    %266 = vmatpush1.msra.mxu0 0.0
    %267 = vmatprep.subr.mxu0 0.0
    %268 = vmatpush1.msra.mxu0 0.0
    %269 = vmatprep.subr.mxu0 0.0
    %270 = vmatpush1.msra.mxu0 0.0
    %271 = vmatprep.subr.mxu0 0.0
    %272 = vmatpush1.msra.mxu0 0.0
    %273 = vmatprep.subr.mxu0 0.0
    %274 = vmatpush1.msra.mxu0 0.0
    %275 = vmatprep.subr.mxu0 0.0
    %276 = vmatpush1.msra.mxu0 0.0
    %277 = vmatprep.subr.mxu0 0.0
    %278 = vmatpush1.msra.mxu0 0.0
    %279 = vmatprep.subr.mxu0 0.0
    %280 = vmatpush1.msra.mxu0 0.0
    %281 = vmatprep.subr.mxu0 0.0
    %282 = vmatpush1.msra.mxu0 0.0
    %283 = vmatprep.subr.mxu0 0.0
    %284 = vmatpush1.msra.mxu0 0.0
    %285 = vmatprep.subr.mxu0 0.0
    %286 = vmatpush1.msra.mxu0 0.0
    %287 = vmatprep.subr.mxu0 0.0
    %288 = vmatpush1.msra.mxu0 0.0
    %289 = vmatprep.subr.mxu0 0.0
    %290 = vmatpush1.msra.mxu0 0.0
    %291 = vmatprep.subr.mxu0 0.0
    %292 = vmatpush1.msra.mxu0 0.0
    %293 = vmatprep.subr.mxu0 0.0
    %294 = vmatpush1.msra.mxu0 0.0
    %295 = vmatprep.subr.mxu0 0.0
    %296 = vmatpush1.msra.mxu0 0.0
    %297 = vmatprep.mubr.f32.mxu0 0.0
    %298 = vmatmul.mubr.f32.gmra.mrb[0].mxu0 %v228
    %v299 = vpop.f32.mrb[0].mxu0
    %v300 = vadd.f32 %v219, %v299
    %v301 = vpop.f32.mrb[0].mxu0
    %302 = vmatprep.mubr.f32.mxu0 0.0
    %303 = vmatmul.mubr.f32.gmra.mrb[0].mxu0 %v231
    %v304 = vpop.f32.mrb[0].mxu0
    %v305 = vadd.f32 %v224, %v304
    %v306 = vpop.f32.mrb[0].mxu0
    %307 = vdwg.mxu0
    %v308 = vld [vmem:[#allocation3 + $0x4] sm:$0xff]
    %v309 = vld [vmem:[#allocation3 + $0xc] sm:$0x3f]
    %v310 = vld [vmem:[%s1 + $0x40] sm:$0xff]
    %v311 = vld [vmem:[%s1 + $0x48] sm:$0xff]
    %v312 = vld [vmem:[%s1 + $0x50] sm:$0xff]
    %v313 = vld [vmem:[%s1 + $0x58] sm:$0xff]
    %v315 = vsel %vm128, %v308, 0
    %v318 = vsel %vm128, %v309, 0
    %320 = vmatprep.subr.mxu0 0.0
    %321 = vmatpush1.msra.mxu0 %v310
    %322 = vmatprep.subr.mxu0 0.0
    %323 = vmatpush1.msra.mxu0 %v311
    %324 = vmatprep.subr.mxu0 0.0
    %325 = vmatpush1.msra.mxu0 %v312
    %326 = vmatprep.subr.mxu0 0.0
    %327 = vmatpush1.msra.mxu0 %v313
    %328 = vmatprep.subr.mxu0 0.0
    %329 = vmatpush1.msra.mxu0 0.0
    %330 = vmatprep.subr.mxu0 0.0
    %331 = vmatpush1.msra.mxu0 0.0
    %332 = vmatprep.subr.mxu0 0.0
    %333 = vmatpush1.msra.mxu0 0.0
    %334 = vmatprep.subr.mxu0 0.0
    %335 = vmatpush1.msra.mxu0 0.0
    %336 = vmatprep.subr.mxu0 0.0
    %337 = vmatpush1.msra.mxu0 0.0
    %338 = vmatprep.subr.mxu0 0.0
    %339 = vmatpush1.msra.mxu0 0.0
    %340 = vmatprep.subr.mxu0 0.0
    %341 = vmatpush1.msra.mxu0 0.0
    %342 = vmatprep.subr.mxu0 0.0
    %343 = vmatpush1.msra.mxu0 0.0
    %344 = vmatprep.subr.mxu0 0.0
    %345 = vmatpush1.msra.mxu0 0.0
    %346 = vmatprep.subr.mxu0 0.0
    %347 = vmatpush1.msra.mxu0 0.0
    %348 = vmatprep.subr.mxu0 0.0
    %349 = vmatpush1.msra.mxu0 0.0
    %350 = vmatprep.subr.mxu0 0.0
    %351 = vmatpush1.msra.mxu0 0.0
    %352 = vmatprep.subr.mxu0 0.0
    %353 = vmatpush1.msra.mxu0 0.0
    %354 = vmatprep.subr.mxu0 0.0
    %355 = vmatpush1.msra.mxu0 0.0
    %356 = vmatprep.subr.mxu0 0.0
    %357 = vmatpush1.msra.mxu0 0.0
    %358 = vmatprep.subr.mxu0 0.0
    %359 = vmatpush1.msra.mxu0 0.0
    %360 = vmatprep.subr.mxu0 0.0
    %361 = vmatpush1.msra.mxu0 0.0
    %362 = vmatprep.subr.mxu0 0.0
    %363 = vmatpush1.msra.mxu0 0.0
    %364 = vmatprep.subr.mxu0 0.0
    %365 = vmatpush1.msra.mxu0 0.0
    %366 = vmatprep.subr.mxu0 0.0
    %367 = vmatpush1.msra.mxu0 0.0
    %368 = vmatprep.subr.mxu0 0.0
    %369 = vmatpush1.msra.mxu0 0.0
    %370 = vmatprep.subr.mxu0 0.0
    %371 = vmatpush1.msra.mxu0 0.0
    %372 = vmatprep.subr.mxu0 0.0
    %373 = vmatpush1.msra.mxu0 0.0
    %374 = vmatprep.subr.mxu0 0.0
    %375 = vmatpush1.msra.mxu0 0.0
    %376 = vmatprep.subr.mxu0 0.0
    %377 = vmatpush1.msra.mxu0 0.0
    %378 = vmatprep.subr.mxu0 0.0
    %379 = vmatpush1.msra.mxu0 0.0
    %380 = vmatprep.subr.mxu0 0.0
    %381 = vmatpush1.msra.mxu0 0.0
    %382 = vmatprep.subr.mxu0 0.0
    %383 = vmatpush1.msra.mxu0 0.0
    %384 = vmatprep.mubr.f32.mxu0 0.0
    %385 = vmatmul.mubr.f32.gmra.mrb[0].mxu0 %v315
    %v386 = vpop.f32.mrb[0].mxu0
    %v387 = vadd.f32 0.0, %v386
    %v388 = vpop.f32.mrb[0].mxu0
    %389 = vmatprep.mubr.f32.mxu0 0.0
    %390 = vmatmul.mubr.f32.gmra.mrb[0].mxu0 %v318
    %v391 = vpop.f32.mrb[0].mxu0
    %v392 = vadd.f32 0.0, %v391
    %v393 = vpop.f32.mrb[0].mxu0
    %394 = vdwg.mxu0
    %v395 = vadd.f32 %v300, %v387
    %v396 = vadd.f32 %v305, %v392
    %v398 = vlaneseq
    %v399 = vshrl.u32 %v398, 7
    %v400 = vsub.s32 0, %v399
    %v401 = vrot.slane %v68, %v400
    %v403 = vadd.f32 %v395, %v401
    %v404 = vadd.f32 %v396, %v401
    %v406 = vrot.slane %v403, 2
    %v408 = vmax.f32 %v403, %v406
    %v409 = vrot.slane %v403, 4
    %v411 = vmax.f32 %v408, %v409
    %v413 = vrot.slane %v404, 4
    %v415 = vmax.f32 %v408, %v413
    %v416 = vrot.slane %v404, 2
    %v418 = vmax.f32 %v404, %v416
    %v419 = vmax.f32 %v418, %v413
    %v421 = vrot.slane %v415, 2
    %v424 = vrot.slane %v419, 4
    %vm426 = vcmask 1041408
    %v427 = vsel %vm426, %v411, %v421
    %vm428 = vcmask 1043456
    %v429 = vsel %vm428, %v427, %v424
    %v430 = vld [vmem:[#allocation4] sm:$0x3f]
    %v431 = vstv %s65
    %vm432 = vcmp.gt.f32.partialorder %v430, %v431
    %v433 = vsel %vm432, 1, 0
    %v434 = vcvt.s32.f32 %v433
    %v435 = vmul.f32 %v430, 0.5
    %v436 = vadd.f32 %v435, %v429
    %v437 = vmul.f32 %v434, %v431
    %v438 = vsub.f32 %v436, %v437
    %vm439 = vcmp.gt.f32.partialorder %v438, %v431
    %v440 = vsel %vm439, 1, 0
    %v441 = vcvt.s32.f32 %v440
    %vm442 = vcmask 521216
    %443 = vst.msk [vmem:[#allocation4] sm:$0x3f] %vm442, %v438
    %v444 = vld [vmem:[%s3] sm:$0xff]
    %v445 = vld [vmem:[%s3 + $0x8] sm:$0xff]
    %v446 = vld [vmem:[%s3 + $0x10] sm:$0xff]
    %v447 = vld [vmem:[%s3 + $0x18] sm:$0xff]
    %v448 = vld [vmem:[%s3 + $0x20] sm:$0xff]
    %v449 = vld [vmem:[%s3 + $0x28] sm:$0xff]
    %v450 = vld [vmem:[%s3 + $0x30] sm:$0xff]
    %v451 = vld [vmem:[%s3 + $0x38] sm:$0xff]
    %v452 = vld [vmem:[%s3 + $0x40] sm:$0xff]
    %v453 = vld [vmem:[%s3 + $0x48] sm:$0xff]
    %v454 = vld [vmem:[%s3 + $0x50] sm:$0xff]
    %v455 = vld [vmem:[%s3 + $0x58] sm:$0xff]
    %v456 = vld [vmem:[%s3 + $0x60] sm:$0xff]
    %v457 = vld [vmem:[%s3 + $0x68] sm:$0xff]
    %v458 = vld [vmem:[%s3 + $0x70] sm:$0xff]
    %v459 = vld [vmem:[%s3 + $0x78] sm:$0xff]
    %v460 = vld [vmem:[%s3 + $0x80] sm:$0xff]
    %v461 = vld [vmem:[%s3 + $0x88] sm:$0xff]
    %v462 = vld [vmem:[%s3 + $0x90] sm:$0xff]
    %v463 = vld [vmem:[%s3 + $0x98] sm:$0xff]
    %v464 = vld [vmem:[%s3 + $0xa0] sm:$0xff]
    %v465 = vld [vmem:[%s3 + $0xa8] sm:$0xff]
    %v466 = vld [vmem:[%s3 + $0xb0] sm:$0xff]
    %v467 = vld [vmem:[%s3 + $0xb8] sm:$0xff]
    %v468 = vld [vmem:[%s3 + $0xc0] sm:$0xff]
    %v469 = vld [vmem:[%s3 + $0xc8] sm:$0xff]
    %v470 = vld [vmem:[%s3 + $0xd0] sm:$0xff]
    %v471 = vld [vmem:[%s3 + $0xd8] sm:$0xff]
    %v472 = vld [vmem:[%s3 + $0xe0] sm:$0xff]
    %v473 = vld [vmem:[%s3 + $0xe8] sm:$0xff]
    %v474 = vld [vmem:[%s3 + $0xf0] sm:$0xff]
    %v475 = vld [vmem:[%s3 + $0xf8] sm:$0xff]
    %v477 = vrot.slane %v441, 2
    %vm478 = vcmask 523264
    %v479 = vsel %vm478, %v477, 0
    %481 = vmatprep.subr.mxu0 %v461
    %482 = vmatpush1.msra.mxu0 %v460
    %483 = vmatprep.subr.mxu0 %v463
    %484 = vmatpush1.msra.mxu0 %v462
    %485 = vmatprep.subr.mxu0 %v465
    %486 = vmatpush1.msra.mxu0 %v464
    %487 = vmatprep.subr.mxu0 %v467
    %488 = vmatpush1.msra.mxu0 %v466
    %489 = vmatprep.subr.mxu0 %v469
    %490 = vmatpush1.msra.mxu0 %v468
    %491 = vmatprep.subr.mxu0 %v471
    %492 = vmatpush1.msra.mxu0 %v470
    %493 = vmatprep.subr.mxu0 %v473
    %494 = vmatpush1.msra.mxu0 %v472
    %495 = vmatprep.subr.mxu0 %v475
    %496 = vmatpush1.msra.mxu0 %v474
    %497 = vmatprep.subr.mxu0 0.0
    %498 = vmatpush1.msra.mxu0 0.0
    %499 = vmatprep.subr.mxu0 0.0
    %500 = vmatpush1.msra.mxu0 0.0
    %501 = vmatprep.subr.mxu0 0.0
    %502 = vmatpush1.msra.mxu0 0.0
    %503 = vmatprep.subr.mxu0 0.0
    %504 = vmatpush1.msra.mxu0 0.0
    %505 = vmatprep.subr.mxu0 0.0
    %506 = vmatpush1.msra.mxu0 0.0
    %507 = vmatprep.subr.mxu0 0.0
    %508 = vmatpush1.msra.mxu0 0.0
    %509 = vmatprep.subr.mxu0 0.0
    %510 = vmatpush1.msra.mxu0 0.0
    %511 = vmatprep.subr.mxu0 0.0
    %512 = vmatpush1.msra.mxu0 0.0
    %513 = vmatprep.subr.mxu0 0.0
    %514 = vmatpush1.msra.mxu0 0.0
    %515 = vmatprep.subr.mxu0 0.0
    %516 = vmatpush1.msra.mxu0 0.0
    %517 = vmatprep.subr.mxu0 0.0
    %518 = vmatpush1.msra.mxu0 0.0
    %519 = vmatprep.subr.mxu0 0.0
    %520 = vmatpush1.msra.mxu0 0.0
    %521 = vmatprep.subr.mxu0 0.0
    %522 = vmatpush1.msra.mxu0 0.0
    %523 = vmatprep.subr.mxu0 0.0
    %524 = vmatpush1.msra.mxu0 0.0
    %525 = vmatprep.subr.mxu0 0.0
    %526 = vmatpush1.msra.mxu0 0.0
    %527 = vmatprep.subr.mxu0 0.0
    %528 = vmatpush1.msra.mxu0 0.0
    %529 = vmatprep.subr.mxu0 0.0
    %530 = vmatpush1.msra.mxu0 0.0
    %531 = vmatprep.subr.mxu0 0.0
    %532 = vmatpush1.msra.mxu0 0.0
    %533 = vmatprep.subr.mxu0 0.0
    %534 = vmatpush1.msra.mxu0 0.0
    %535 = vmatprep.subr.mxu0 0.0
    %536 = vmatpush1.msra.mxu0 0.0
    %537 = vmatprep.subr.mxu0 0.0
    %538 = vmatpush1.msra.mxu0 0.0
    %539 = vmatprep.subr.mxu0 0.0
    %540 = vmatpush1.msra.mxu0 0.0
    %541 = vmatprep.subr.mxu0 0.0
    %542 = vmatpush1.msra.mxu0 0.0
    %543 = vmatprep.subr.mxu0 0.0
    %544 = vmatpush1.msra.mxu0 0.0
    %545 = vmatprep.mubr.f32.mxu0 0.0
    %546 = vmatmul.mubr.f32.gmra.mrb[0].mxu0 %v479
    %v547 = vpop.f32.mrb[0].mxu0
    %v548 = vadd.f32 0.0, %v547
    %v549 = vpop.f32.mrb[0].mxu0
    %v550 = vadd.f32 0.0, %v549
    %551 = vdwg.mxu0
    %v552 = vsel %vm478, %v441, 0
    %554 = vmatprep.subr.mxu0 %v445
    %555 = vmatpush1.msra.mxu0 %v444
    %556 = vmatprep.subr.mxu0 %v447
    %557 = vmatpush1.msra.mxu0 %v446
    %558 = vmatprep.subr.mxu0 %v449
    %559 = vmatpush1.msra.mxu0 %v448
    %560 = vmatprep.subr.mxu0 %v451
    %561 = vmatpush1.msra.mxu0 %v450
    %562 = vmatprep.subr.mxu0 %v453
    %563 = vmatpush1.msra.mxu0 %v452
    %564 = vmatprep.subr.mxu0 %v455
    %565 = vmatpush1.msra.mxu0 %v454
    %566 = vmatprep.subr.mxu0 %v457
    %567 = vmatpush1.msra.mxu0 %v456
    %568 = vmatprep.subr.mxu0 %v459
    %569 = vmatpush1.msra.mxu0 %v458
    %570 = vmatprep.subr.mxu0 0.0
    %571 = vmatpush1.msra.mxu0 0.0
    %572 = vmatprep.subr.mxu0 0.0
    %573 = vmatpush1.msra.mxu0 0.0
    %574 = vmatprep.subr.mxu0 0.0
    %575 = vmatpush1.msra.mxu0 0.0
    %576 = vmatprep.subr.mxu0 0.0
    %577 = vmatpush1.msra.mxu0 0.0
    %578 = vmatprep.subr.mxu0 0.0
    %579 = vmatpush1.msra.mxu0 0.0
    %580 = vmatprep.subr.mxu0 0.0
    %581 = vmatpush1.msra.mxu0 0.0
    %582 = vmatprep.subr.mxu0 0.0
    %583 = vmatpush1.msra.mxu0 0.0
    %584 = vmatprep.subr.mxu0 0.0
    %585 = vmatpush1.msra.mxu0 0.0
    %586 = vmatprep.subr.mxu0 0.0
    %587 = vmatpush1.msra.mxu0 0.0
    %588 = vmatprep.subr.mxu0 0.0
    %589 = vmatpush1.msra.mxu0 0.0
    %590 = vmatprep.subr.mxu0 0.0
    %591 = vmatpush1.msra.mxu0 0.0
    %592 = vmatprep.subr.mxu0 0.0
    %593 = vmatpush1.msra.mxu0 0.0
    %594 = vmatprep.subr.mxu0 0.0
    %595 = vmatpush1.msra.mxu0 0.0
    %596 = vmatprep.subr.mxu0 0.0
    %597 = vmatpush1.msra.mxu0 0.0
    %598 = vmatprep.subr.mxu0 0.0
    %599 = vmatpush1.msra.mxu0 0.0
    %600 = vmatprep.subr.mxu0 0.0
    %601 = vmatpush1.msra.mxu0 0.0
    %602 = vmatprep.subr.mxu0 0.0
    %603 = vmatpush1.msra.mxu0 0.0
    %604 = vmatprep.subr.mxu0 0.0
    %605 = vmatpush1.msra.mxu0 0.0
    %606 = vmatprep.subr.mxu0 0.0
    %607 = vmatpush1.msra.mxu0 0.0
    %608 = vmatprep.subr.mxu0 0.0
    %609 = vmatpush1.msra.mxu0 0.0
    %610 = vmatprep.subr.mxu0 0.0
    %611 = vmatpush1.msra.mxu0 0.0
    %612 = vmatprep.subr.mxu0 0.0
    %613 = vmatpush1.msra.mxu0 0.0
    %614 = vmatprep.subr.mxu0 0.0
    %615 = vmatpush1.msra.mxu0 0.0
    %616 = vmatprep.subr.mxu0 0.0
    %617 = vmatpush1.msra.mxu0 0.0
    %618 = vmatprep.mubr.f32.mxu0 0.0
    %619 = vmatmul.mubr.f32.gmra.mrb[0].mxu0 %v552
    %v620 = vpop.f32.mrb[0].mxu0
    %v621 = vadd.f32 %v548, %v620
    %v622 = vpop.f32.mrb[0].mxu0
    %v623 = vadd.f32 %v550, %v622
    %624 = vdwg.mxu0
    %v625 = vld [vmem:[%s3 + $0x100] sm:$0xff]
    %v626 = vld [vmem:[%s3 + $0x108] sm:$0xff]
    %v627 = vld [vmem:[%s3 + $0x110] sm:$0xff]
    %v628 = vld [vmem:[%s3 + $0x118] sm:$0xff]
    %v629 = vld [vmem:[%s3 + $0x120] sm:$0xff]
    %v630 = vld [vmem:[%s3 + $0x128] sm:$0xff]
    %v631 = vld [vmem:[%s3 + $0x130] sm:$0xff]
    %v632 = vld [vmem:[%s3 + $0x138] sm:$0xff]
    %v633 = vld [vmem:[%s3 + $0x140] sm:$0xff]
    %v634 = vld [vmem:[%s3 + $0x148] sm:$0xff]
    %v635 = vld [vmem:[%s3 + $0x150] sm:$0xff]
    %v636 = vld [vmem:[%s3 + $0x158] sm:$0xff]
    %v637 = vld [vmem:[%s3 + $0x160] sm:$0xff]
    %v638 = vld [vmem:[%s3 + $0x168] sm:$0xff]
    %v639 = vld [vmem:[%s3 + $0x170] sm:$0xff]
    %v640 = vld [vmem:[%s3 + $0x178] sm:$0xff]
    %v641 = vrot.slane %v441, 4
    %v642 = vsel %vm478, %v641, 0
    %644 = vmatprep.subr.mxu0 %v626
    %645 = vmatpush1.msra.mxu0 %v625
    %646 = vmatprep.subr.mxu0 %v628
    %647 = vmatpush1.msra.mxu0 %v627
    %648 = vmatprep.subr.mxu0 %v630
    %649 = vmatpush1.msra.mxu0 %v629
    %650 = vmatprep.subr.mxu0 %v632
    %651 = vmatpush1.msra.mxu0 %v631
    %652 = vmatprep.subr.mxu0 %v634
    %653 = vmatpush1.msra.mxu0 %v633
    %654 = vmatprep.subr.mxu0 %v636
    %655 = vmatpush1.msra.mxu0 %v635
    %656 = vmatprep.subr.mxu0 %v638
    %657 = vmatpush1.msra.mxu0 %v637
    %658 = vmatprep.subr.mxu0 %v640
    %659 = vmatpush1.msra.mxu0 %v639
    %660 = vmatprep.subr.mxu0 0.0
    %661 = vmatpush1.msra.mxu0 0.0
    %662 = vmatprep.subr.mxu0 0.0
    %663 = vmatpush1.msra.mxu0 0.0
    %664 = vmatprep.subr.mxu0 0.0
    %665 = vmatpush1.msra.mxu0 0.0
    %666 = vmatprep.subr.mxu0 0.0
    %667 = vmatpush1.msra.mxu0 0.0
    %668 = vmatprep.subr.mxu0 0.0
    %669 = vmatpush1.msra.mxu0 0.0
    %670 = vmatprep.subr.mxu0 0.0
    %671 = vmatpush1.msra.mxu0 0.0
    %672 = vmatprep.subr.mxu0 0.0
    %673 = vmatpush1.msra.mxu0 0.0
    %674 = vmatprep.subr.mxu0 0.0
    %675 = vmatpush1.msra.mxu0 0.0
    %676 = vmatprep.subr.mxu0 0.0
    %677 = vmatpush1.msra.mxu0 0.0
    %678 = vmatprep.subr.mxu0 0.0
    %679 = vmatpush1.msra.mxu0 0.0
    %680 = vmatprep.subr.mxu0 0.0
    %681 = vmatpush1.msra.mxu0 0.0
    %682 = vmatprep.subr.mxu0 0.0
    %683 = vmatpush1.msra.mxu0 0.0
    %684 = vmatprep.subr.mxu0 0.0
    %685 = vmatpush1.msra.mxu0 0.0
    %686 = vmatprep.subr.mxu0 0.0
    %687 = vmatpush1.msra.mxu0 0.0
    %688 = vmatprep.subr.mxu0 0.0
    %689 = vmatpush1.msra.mxu0 0.0
    %690 = vmatprep.subr.mxu0 0.0
    %691 = vmatpush1.msra.mxu0 0.0
    %692 = vmatprep.subr.mxu0 0.0
    %693 = vmatpush1.msra.mxu0 0.0
    %694 = vmatprep.subr.mxu0 0.0
    %695 = vmatpush1.msra.mxu0 0.0
    %696 = vmatprep.subr.mxu0 0.0
    %697 = vmatpush1.msra.mxu0 0.0
    %698 = vmatprep.subr.mxu0 0.0
    %699 = vmatpush1.msra.mxu0 0.0
    %700 = vmatprep.subr.mxu0 0.0
    %701 = vmatpush1.msra.mxu0 0.0
    %702 = vmatprep.subr.mxu0 0.0
    %703 = vmatpush1.msra.mxu0 0.0
    %704 = vmatprep.subr.mxu0 0.0
    %705 = vmatpush1.msra.mxu0 0.0
    %706 = vmatprep.subr.mxu0 0.0
    %707 = vmatpush1.msra.mxu0 0.0
    %708 = vmatprep.mubr.f32.mxu0 0.0
    %709 = vmatmul.mubr.f32.gmra.mrb[0].mxu0 %v642
    %v710 = vpop.f32.mrb[0].mxu0
    %v711 = vadd.f32 0.0, %v710
    %v712 = vpop.f32.mrb[0].mxu0
    %v713 = vadd.f32 0.0, %v712
    %714 = vdwg.mxu0
    %v715 = vadd.f32 %v621, %v711
    %v716 = vadd.f32 %v623, %v713
    %v718 = vlaneseq
    %v719 = vshrl.u32 %v718, 7
    %v720 = vsub.s32 0, %v719
    %v721 = vrot.slane %v69, %v720
    %v722 = vlaneseq
    %v723 = vshrl.u32 %v722, 7
    %v724 = vsub.s32 1, %v723
    %v725 = vrot.slane %v69, %v724
    %v728 = vadd.f32 %v715, %v721
    %v729 = vadd.f32 %v716, %v725
    %v730 = vld [vmem:[#allocation5] sm:$0xf]
    %v731 = vstv %s66
    %vm732 = vcmp.gt.f32.partialorder %v730, %v731
    %v733 = vsel %vm732, 1, 0
    %v734 = vcvt.s32.f32 %v733
    %v735 = vmul.f32 %v730, 0.5
    %v738 = vcombine.low %v728, %v729
    %v740 = vunpack.c.l.s4 1983009808
    %v741 = vunpack.c.0.s8 %v740
    %v742 = vlaneseq
    %v743 = vshrl.u32 %v742, 7
    %v744 = vsub.s32 %v741, %v743
    %v745 = vrot.slane %v738, %v744
    %v747 = vadd.f32 %v735, %v745
    %v748 = vmul.f32 %v734, %v731
    %v749 = vsub.f32 %v747, %v748
    %vm750 = vcmp.gt.f32.partialorder %v749, %v731
    %v751 = vsel %vm750, 1, 0
    %v752 = vcvt.s32.f32 %v751
    %753 = vst [vmem:[#allocation5] sm:$0xf] %v749
    %754 = vst [vmem:[#allocation10] sm:$0xf] %v752
    %755 = vst [vmem:[#allocation11] sm:$0xf] %v749
    %v757 = vlaneseq
    %v758 = vshrl.u32 %v757, 7
    %v759 = vsub.s32 0, %v758
    %v760 = vrot.slane %v102, %v759
    %v764 = vunpack.c.l.s4 1983009808
    %v765 = vunpack.c.0.s8 %v764
    %v766 = vlaneseq
    %v767 = vshrl.u32 %v766, 7
    %v768 = vsub.s32 %v765, %v767
    %v769 = vrot.slane %v752, %v768
    %v770 = vcombine.high %v769, %v769
    %773 = vmatprep.subr.mxu0 0.0
    %774 = vmatpush1.msra.mxu0 %v70
    %775 = vmatprep.subr.mxu0 0.0
    %776 = vmatpush1.msra.mxu0 %v71
    %777 = vmatprep.subr.mxu0 0.0
    %778 = vmatpush1.msra.mxu0 %v72
    %779 = vmatprep.subr.mxu0 0.0
    %780 = vmatpush1.msra.mxu0 %v73
    %781 = vmatprep.subr.mxu0 0.0
    %782 = vmatpush1.msra.mxu0 %v74
    %783 = vmatprep.subr.mxu0 0.0
    %784 = vmatpush1.msra.mxu0 %v75
    %785 = vmatprep.subr.mxu0 0.0
    %786 = vmatpush1.msra.mxu0 %v76
    %787 = vmatprep.subr.mxu0 0.0
    %788 = vmatpush1.msra.mxu0 %v77
    %789 = vmatprep.subr.mxu0 0.0
    %790 = vmatpush1.msra.mxu0 %v78
    %791 = vmatprep.subr.mxu0 0.0
    %792 = vmatpush1.msra.mxu0 %v79
    %793 = vmatprep.subr.mxu0 0.0
    %794 = vmatpush1.msra.mxu0 %v80
    %795 = vmatprep.subr.mxu0 0.0
    %796 = vmatpush1.msra.mxu0 %v81
    %797 = vmatprep.subr.mxu0 0.0
    %798 = vmatpush1.msra.mxu0 %v82
    %799 = vmatprep.subr.mxu0 0.0
    %800 = vmatpush1.msra.mxu0 %v83
    %801 = vmatprep.subr.mxu0 0.0
    %802 = vmatpush1.msra.mxu0 %v84
    %803 = vmatprep.subr.mxu0 0.0
    %804 = vmatpush1.msra.mxu0 %v85
    %805 = vmatprep.subr.mxu0 0.0
    %806 = vmatpush1.msra.mxu0 %v86
    %807 = vmatprep.subr.mxu0 0.0
    %808 = vmatpush1.msra.mxu0 %v87
    %809 = vmatprep.subr.mxu0 0.0
    %810 = vmatpush1.msra.mxu0 %v88
    %811 = vmatprep.subr.mxu0 0.0
    %812 = vmatpush1.msra.mxu0 %v89
    %813 = vmatprep.subr.mxu0 0.0
    %814 = vmatpush1.msra.mxu0 %v90
    %815 = vmatprep.subr.mxu0 0.0
    %816 = vmatpush1.msra.mxu0 %v91
    %817 = vmatprep.subr.mxu0 0.0
    %818 = vmatpush1.msra.mxu0 %v92
    %819 = vmatprep.subr.mxu0 0.0
    %820 = vmatpush1.msra.mxu0 %v93
    %821 = vmatprep.subr.mxu0 0.0
    %822 = vmatpush1.msra.mxu0 %v94
    %823 = vmatprep.subr.mxu0 0.0
    %824 = vmatpush1.msra.mxu0 %v95
    %825 = vmatprep.subr.mxu0 0.0
    %826 = vmatpush1.msra.mxu0 %v96
    %827 = vmatprep.subr.mxu0 0.0
    %828 = vmatpush1.msra.mxu0 %v97
    %829 = vmatprep.subr.mxu0 0.0
    %830 = vmatpush1.msra.mxu0 %v98
    %831 = vmatprep.subr.mxu0 0.0
    %832 = vmatpush1.msra.mxu0 %v99
    %833 = vmatprep.subr.mxu0 0.0
    %834 = vmatpush1.msra.mxu0 %v100
    %835 = vmatprep.subr.mxu0 0.0
    %836 = vmatpush1.msra.mxu0 %v101
    %837 = vmatprep.mubr.f32.mxu0 %v770
    %838 = vmatmul.mubr.f32.gmra.mrb[0].mxu0 %v769
    %v839 = vpop.f32.mrb[0].mxu0
    %v840 = vadd.f32 %v760, %v839
    %v841 = vpop.f32.mrb[0].mxu0
    %842 = vdwg.mxu0
    %v843 = vld [vmem:[#allocation6] sm:$0x3]
    %v844 = vstv %s67
    %vm845 = vcmp.gt.f32.partialorder %v843, %v844
    %v846 = vsel %vm845, 1, 0
    %v847 = vcvt.s32.f32 %v846
    %v848 = vmul.f32 %v843, 0.5
    %v849 = vadd.f32 %v848, %v840
    %v850 = vmul.f32 %v847, %v844
    %v851 = vsub.f32 %v849, %v850
    %vm852 = vcmp.gt.f32.partialorder %v851, %v844
    %v853 = vsel %vm852, 1, 0
    %v854 = vcvt.s32.f32 %v853
    %855 = vst [vmem:[#allocation6] sm:$0x3] %v851
    %856 = vst [vmem:[%s10] sm:$0x3] %v854
    %857 = vst [vmem:[%s11] sm:$0x3] %v851
    %v858 = vld [vmem:[#allocation2] sm:$0xff]
    %v859 = vld [vmem:[#allocation2 + $0x8] sm:$0x3f]
    %s860 = scalar_lea.vmem %s0, 16
    %v861 = vld [vmem:[%s860] sm:$0xff]
    %v862 = vld [vmem:[%s860 + $0x8] sm:$0x3f]
    %vm863 = vcmp.gt.f32.partialorder %v858, %v107
    %vm864 = vcmp.gt.f32.partialorder %v859, %v107
    %v865 = vsel %vm863, 1, 0
    %v866 = vsel %vm864, 1, 0
    %v867 = vcvt.s32.f32 %v865
    %v868 = vcvt.s32.f32 %v866
    %v869 = vmul.f32 %v858, 0.5
    %v870 = vmul.f32 %v859, 0.5
    %v871 = vadd.f32 %v869, %v861
    %v872 = vadd.f32 %v870, %v862
    %v873 = vmul.f32 %v867, %v107
    %v874 = vmul.f32 %v868, %v107
    %v875 = vsub.f32 %v871, %v873
    %v876 = vsub.f32 %v872, %v874
    %vm877 = vcmp.gt.f32.partialorder %v875, %v107
    %vm878 = vcmp.gt.f32.partialorder %v876, %v107
    %v879 = vsel %vm877, 1, 0
    %v880 = vsel %vm878, 1, 0
    %v881 = vcvt.s32.f32 %v879
    %v882 = vcvt.s32.f32 %v880
    %883 = vst.msk [vmem:[#allocation2] sm:$0xff] %vm128, %v875
    %884 = vst.msk [vmem:[#allocation2 + $0x8] sm:$0x3f] %vm130, %v876
    %885 = vst.msk [vmem:[#allocation3 + $0x2] sm:$0xff] %vm128, %v881
    %886 = vst.msk [vmem:[#allocation3 + $0xa] sm:$0x3f] %vm130, %v882
    %v887 = vld [vmem:[#allocation3] sm:$0xff]
    %v888 = vld [vmem:[#allocation3 + $0x8] sm:$0x3f]
    %v889 = vld [vmem:[%s1] sm:$0xff]
    %v890 = vld [vmem:[%s1 + $0x8] sm:$0xff]
    %v891 = vld [vmem:[%s1 + $0x10] sm:$0xff]
    %v892 = vld [vmem:[%s1 + $0x18] sm:$0xff]
    %v893 = vld [vmem:[#allocation3 + $0x2] sm:$0xff]
    %v894 = vld [vmem:[#allocation3 + $0xa] sm:$0x3f]
    %v895 = vld [vmem:[%s1 + $0x20] sm:$0xff]
    %v896 = vld [vmem:[%s1 + $0x28] sm:$0xff]
    %v897 = vld [vmem:[%s1 + $0x30] sm:$0xff]
    %v898 = vld [vmem:[%s1 + $0x38] sm:$0xff]
    %v900 = vsel %vm128, %v893, 0
    %v903 = vsel %vm128, %v894, 0
    %905 = vmatprep.subr.mxu0 0.0
    %906 = vmatpush1.msra.mxu0 %v895
    %907 = vmatprep.subr.mxu0 0.0
    %908 = vmatpush1.msra.mxu0 %v896
    %909 = vmatprep.subr.mxu0 0.0
    %910 = vmatpush1.msra.mxu0 %v897
    %911 = vmatprep.subr.mxu0 0.0
    %912 = vmatpush1.msra.mxu0 %v898
    %913 = vmatprep.subr.mxu0 0.0
    %914 = vmatpush1.msra.mxu0 0.0
    %915 = vmatprep.subr.mxu0 0.0
    %916 = vmatpush1.msra.mxu0 0.0
    %917 = vmatprep.subr.mxu0 0.0
    %918 = vmatpush1.msra.mxu0 0.0
    %919 = vmatprep.subr.mxu0 0.0
    %920 = vmatpush1.msra.mxu0 0.0
    %921 = vmatprep.subr.mxu0 0.0
    %922 = vmatpush1.msra.mxu0 0.0
    %923 = vmatprep.subr.mxu0 0.0
    %924 = vmatpush1.msra.mxu0 0.0
    %925 = vmatprep.subr.mxu0 0.0
    %926 = vmatpush1.msra.mxu0 0.0
    %927 = vmatprep.subr.mxu0 0.0
    %928 = vmatpush1.msra.mxu0 0.0
    %929 = vmatprep.subr.mxu0 0.0
    %930 = vmatpush1.msra.mxu0 0.0
    %931 = vmatprep.subr.mxu0 0.0
    %932 = vmatpush1.msra.mxu0 0.0
    %933 = vmatprep.subr.mxu0 0.0
    %934 = vmatpush1.msra.mxu0 0.0
    %935 = vmatprep.subr.mxu0 0.0
    %936 = vmatpush1.msra.mxu0 0.0
    %937 = vmatprep.subr.mxu0 0.0
    %938 = vmatpush1.msra.mxu0 0.0
    %939 = vmatprep.subr.mxu0 0.0
    %940 = vmatpush1.msra.mxu0 0.0
    %941 = vmatprep.subr.mxu0 0.0
    %942 = vmatpush1.msra.mxu0 0.0
    %943 = vmatprep.subr.mxu0 0.0
    %944 = vmatpush1.msra.mxu0 0.0
    %945 = vmatprep.subr.mxu0 0.0
    %946 = vmatpush1.msra.mxu0 0.0
    %947 = vmatprep.subr.mxu0 0.0
    %948 = vmatpush1.msra.mxu0 0.0
    %949 = vmatprep.subr.mxu0 0.0
    %950 = vmatpush1.msra.mxu0 0.0
    %951 = vmatprep.subr.mxu0 0.0
    %952 = vmatpush1.msra.mxu0 0.0
    %953 = vmatprep.subr.mxu0 0.0
    %954 = vmatpush1.msra.mxu0 0.0
    %955 = vmatprep.subr.mxu0 0.0
    %956 = vmatpush1.msra.mxu0 0.0
    %957 = vmatprep.subr.mxu0 0.0
    %958 = vmatpush1.msra.mxu0 0.0
    %959 = vmatprep.subr.mxu0 0.0
    %960 = vmatpush1.msra.mxu0 0.0
    %961 = vmatprep.subr.mxu0 0.0
    %962 = vmatpush1.msra.mxu0 0.0
    %963 = vmatprep.subr.mxu0 0.0
    %964 = vmatpush1.msra.mxu0 0.0
    %965 = vmatprep.subr.mxu0 0.0
    %966 = vmatpush1.msra.mxu0 0.0
    %967 = vmatprep.subr.mxu0 0.0
    %968 = vmatpush1.msra.mxu0 0.0
    %969 = vmatprep.mubr.f32.mxu0 0.0
    %970 = vmatmul.mubr.f32.gmra.mrb[0].mxu0 %v900
    %v971 = vpop.f32.mrb[0].mxu0
    %v972 = vadd.f32 0.0, %v971
    %v973 = vpop.f32.mrb[0].mxu0
    %974 = vmatprep.mubr.f32.mxu0 0.0
    %975 = vmatmul.mubr.f32.gmra.mrb[0].mxu0 %v903
    %v976 = vpop.f32.mrb[0].mxu0
    %v977 = vadd.f32 0.0, %v976
    %v978 = vpop.f32.mrb[0].mxu0
    %979 = vdwg.mxu0
    %v981 = vsel %vm128, %v887, 0
    %v984 = vsel %vm128, %v888, 0
    %986 = vmatprep.subr.mxu0 0.0
    %987 = vmatpush1.msra.mxu0 %v889
    %988 = vmatprep.subr.mxu0 0.0
    %989 = vmatpush1.msra.mxu0 %v890
    %990 = vmatprep.subr.mxu0 0.0
    %991 = vmatpush1.msra.mxu0 %v891
    %992 = vmatprep.subr.mxu0 0.0
    %993 = vmatpush1.msra.mxu0 %v892
    %994 = vmatprep.subr.mxu0 0.0
    %995 = vmatpush1.msra.mxu0 0.0
    %996 = vmatprep.subr.mxu0 0.0
    %997 = vmatpush1.msra.mxu0 0.0
    %998 = vmatprep.subr.mxu0 0.0
    %999 = vmatpush1.msra.mxu0 0.0
    %1000 = vmatprep.subr.mxu0 0.0
    %1001 = vmatpush1.msra.mxu0 0.0
    %1002 = vmatprep.subr.mxu0 0.0
    %1003 = vmatpush1.msra.mxu0 0.0
    %1004 = vmatprep.subr.mxu0 0.0
    %1005 = vmatpush1.msra.mxu0 0.0
    %1006 = vmatprep.subr.mxu0 0.0
    %1007 = vmatpush1.msra.mxu0 0.0
    %1008 = vmatprep.subr.mxu0 0.0
    %1009 = vmatpush1.msra.mxu0 0.0
    %1010 = vmatprep.subr.mxu0 0.0
    %1011 = vmatpush1.msra.mxu0 0.0
    %1012 = vmatprep.subr.mxu0 0.0
    %1013 = vmatpush1.msra.mxu0 0.0
    %1014 = vmatprep.subr.mxu0 0.0
    %1015 = vmatpush1.msra.mxu0 0.0
    %1016 = vmatprep.subr.mxu0 0.0
    %1017 = vmatpush1.msra.mxu0 0.0
    %1018 = vmatprep.subr.mxu0 0.0
    %1019 = vmatpush1.msra.mxu0 0.0
    %1020 = vmatprep.subr.mxu0 0.0
    %1021 = vmatpush1.msra.mxu0 0.0
    %1022 = vmatprep.subr.mxu0 0.0
    %1023 = vmatpush1.msra.mxu0 0.0
    %1024 = vmatprep.subr.mxu0 0.0
    %1025 = vmatpush1.msra.mxu0 0.0
    %1026 = vmatprep.subr.mxu0 0.0
    %1027 = vmatpush1.msra.mxu0 0.0
    %1028 = vmatprep.subr.mxu0 0.0
    %1029 = vmatpush1.msra.mxu0 0.0
    %1030 = vmatprep.subr.mxu0 0.0
    %1031 = vmatpush1.msra.mxu0 0.0
    %1032 = vmatprep.subr.mxu0 0.0
    %1033 = vmatpush1.msra.mxu0 0.0
    %1034 = vmatprep.subr.mxu0 0.0
    %1035 = vmatpush1.msra.mxu0 0.0
    %1036 = vmatprep.subr.mxu0 0.0
    %1037 = vmatpush1.msra.mxu0 0.0
    %1038 = vmatprep.subr.mxu0 0.0
    %1039 = vmatpush1.msra.mxu0 0.0
    %1040 = vmatprep.subr.mxu0 0.0
    %1041 = vmatpush1.msra.mxu0 0.0
    %1042 = vmatprep.subr.mxu0 0.0
    %1043 = vmatpush1.msra.mxu0 0.0
    %1044 = vmatprep.subr.mxu0 0.0
    %1045 = vmatpush1.msra.mxu0 0.0
    %1046 = vmatprep.subr.mxu0 0.0
    %1047 = vmatpush1.msra.mxu0 0.0
    %1048 = vmatprep.subr.mxu0 0.0
    %1049 = vmatpush1.msra.mxu0 0.0
    %1050 = vmatprep.mubr.f32.mxu0 0.0
    %1051 = vmatmul.mubr.f32.gmra.mrb[0].mxu0 %v981
    %v1052 = vpop.f32.mrb[0].mxu0
    %v1053 = vadd.f32 %v972, %v1052
    %v1054 = vpop.f32.mrb[0].mxu0
    %1055 = vmatprep.mubr.f32.mxu0 0.0
    %1056 = vmatmul.mubr.f32.gmra.mrb[0].mxu0 %v984
    %v1057 = vpop.f32.mrb[0].mxu0
    %v1058 = vadd.f32 %v977, %v1057
    %v1059 = vpop.f32.mrb[0].mxu0
    %1060 = vdwg.mxu0
    %v1061 = vld [vmem:[#allocation3 + $0x4] sm:$0xff]
    %v1062 = vld [vmem:[#allocation3 + $0xc] sm:$0x3f]
    %v1063 = vld [vmem:[%s1 + $0x40] sm:$0xff]
    %v1064 = vld [vmem:[%s1 + $0x48] sm:$0xff]
    %v1065 = vld [vmem:[%s1 + $0x50] sm:$0xff]
    %v1066 = vld [vmem:[%s1 + $0x58] sm:$0xff]
    %v1068 = vsel %vm128, %v1061, 0
    %v1071 = vsel %vm128, %v1062, 0
    %1073 = vmatprep.subr.mxu0 0.0
    %1074 = vmatpush1.msra.mxu0 %v1063
    %1075 = vmatprep.subr.mxu0 0.0
    %1076 = vmatpush1.msra.mxu0 %v1064
    %1077 = vmatprep.subr.mxu0 0.0
    %1078 = vmatpush1.msra.mxu0 %v1065
    %1079 = vmatprep.subr.mxu0 0.0
    %1080 = vmatpush1.msra.mxu0 %v1066
    %1081 = vmatprep.subr.mxu0 0.0
    %1082 = vmatpush1.msra.mxu0 0.0
    %1083 = vmatprep.subr.mxu0 0.0
    %1084 = vmatpush1.msra.mxu0 0.0
    %1085 = vmatprep.subr.mxu0 0.0
    %1086 = vmatpush1.msra.mxu0 0.0
    %1087 = vmatprep.subr.mxu0 0.0
    %1088 = vmatpush1.msra.mxu0 0.0
    %1089 = vmatprep.subr.mxu0 0.0
    %1090 = vmatpush1.msra.mxu0 0.0
    %1091 = vmatprep.subr.mxu0 0.0
    %1092 = vmatpush1.msra.mxu0 0.0
    %1093 = vmatprep.subr.mxu0 0.0
    %1094 = vmatpush1.msra.mxu0 0.0
    %1095 = vmatprep.subr.mxu0 0.0
    %1096 = vmatpush1.msra.mxu0 0.0
    %1097 = vmatprep.subr.mxu0 0.0
    %1098 = vmatpush1.msra.mxu0 0.0
    %1099 = vmatprep.subr.mxu0 0.0
    %1100 = vmatpush1.msra.mxu0 0.0
    %1101 = vmatprep.subr.mxu0 0.0
    %1102 = vmatpush1.msra.mxu0 0.0
    %1103 = vmatprep.subr.mxu0 0.0
    %1104 = vmatpush1.msra.mxu0 0.0
    %1105 = vmatprep.subr.mxu0 0.0
    %1106 = vmatpush1.msra.mxu0 0.0
    %1107 = vmatprep.subr.mxu0 0.0
    %1108 = vmatpush1.msra.mxu0 0.0
    %1109 = vmatprep.subr.mxu0 0.0
    %1110 = vmatpush1.msra.mxu0 0.0
    %1111 = vmatprep.subr.mxu0 0.0
    %1112 = vmatpush1.msra.mxu0 0.0
    %1113 = vmatprep.subr.mxu0 0.0
    %1114 = vmatpush1.msra.mxu0 0.0
    %1115 = vmatprep.subr.mxu0 0.0
    %1116 = vmatpush1.msra.mxu0 0.0
    %1117 = vmatprep.subr.mxu0 0.0
    %1118 = vmatpush1.msra.mxu0 0.0
    %1119 = vmatprep.subr.mxu0 0.0
    %1120 = vmatpush1.msra.mxu0 0.0
    %1121 = vmatprep.subr.mxu0 0.0
    %1122 = vmatpush1.msra.mxu0 0.0
    %1123 = vmatprep.subr.mxu0 0.0
    %1124 = vmatpush1.msra.mxu0 0.0
    %1125 = vmatprep.subr.mxu0 0.0
    %1126 = vmatpush1.msra.mxu0 0.0
    %1127 = vmatprep.subr.mxu0 0.0
    %1128 = vmatpush1.msra.mxu0 0.0
    %1129 = vmatprep.subr.mxu0 0.0
    %1130 = vmatpush1.msra.mxu0 0.0
    %1131 = vmatprep.subr.mxu0 0.0
    %1132 = vmatpush1.msra.mxu0 0.0
    %1133 = vmatprep.subr.mxu0 0.0
    %1134 = vmatpush1.msra.mxu0 0.0
    %1135 = vmatprep.subr.mxu0 0.0
    %1136 = vmatpush1.msra.mxu0 0.0
    %1137 = vmatprep.mubr.f32.mxu0 0.0
    %1138 = vmatmul.mubr.f32.gmra.mrb[0].mxu0 %v1068
    %v1139 = vpop.f32.mrb[0].mxu0
    %v1140 = vadd.f32 0.0, %v1139
    %v1141 = vpop.f32.mrb[0].mxu0
    %1142 = vmatprep.mubr.f32.mxu0 0.0
    %1143 = vmatmul.mubr.f32.gmra.mrb[0].mxu0 %v1071
    %v1144 = vpop.f32.mrb[0].mxu0
    %v1145 = vadd.f32 0.0, %v1144
    %v1146 = vpop.f32.mrb[0].mxu0
    %1147 = vdwg.mxu0
    %v1148 = vadd.f32 %v1053, %v1140
    %v1149 = vadd.f32 %v1058, %v1145
    %v1150 = vadd.f32 %v1148, %v401
    %v1151 = vadd.f32 %v1149, %v401
    %v1153 = vrot.slane %v1150, 2
    %v1155 = vmax.f32 %v1150, %v1153
    %v1156 = vrot.slane %v1150, 4
    %v1158 = vmax.f32 %v1155, %v1156
    %v1160 = vrot.slane %v1151, 4
    %v1162 = vmax.f32 %v1155, %v1160
    %v1163 = vrot.slane %v1151, 2
    %v1165 = vmax.f32 %v1151, %v1163
    %v1166 = vmax.f32 %v1165, %v1160
    %v1168 = vrot.slane %v1162, 2
    %v1171 = vrot.slane %v1166, 4
    %v1173 = vsel %vm426, %v1158, %v1168
    %v1174 = vsel %vm428, %v1173, %v1171
    %v1175 = vld [vmem:[#allocation4] sm:$0x3f]
    %vm1176 = vcmp.gt.f32.partialorder %v1175, %v431
    %v1177 = vsel %vm1176, 1, 0
    %v1178 = vcvt.s32.f32 %v1177
    %v1179 = vmul.f32 %v1175, 0.5
    %v1180 = vadd.f32 %v1179, %v1174
    %v1181 = vmul.f32 %v1178, %v431
    %v1182 = vsub.f32 %v1180, %v1181
    %vm1183 = vcmp.gt.f32.partialorder %v1182, %v431
    %v1184 = vsel %vm1183, 1, 0
    %v1185 = vcvt.s32.f32 %v1184
    %1186 = vst.msk [vmem:[#allocation4] sm:$0x3f] %vm442, %v1182
    %v1187 = vld [vmem:[%s3] sm:$0xff]
    %v1188 = vld [vmem:[%s3 + $0x8] sm:$0xff]
    %v1189 = vld [vmem:[%s3 + $0x10] sm:$0xff]
    %v1190 = vld [vmem:[%s3 + $0x18] sm:$0xff]
    %v1191 = vld [vmem:[%s3 + $0x20] sm:$0xff]
    %v1192 = vld [vmem:[%s3 + $0x28] sm:$0xff]
    %v1193 = vld [vmem:[%s3 + $0x30] sm:$0xff]
    %v1194 = vld [vmem:[%s3 + $0x38] sm:$0xff]
    %v1195 = vld [vmem:[%s3 + $0x40] sm:$0xff]
    %v1196 = vld [vmem:[%s3 + $0x48] sm:$0xff]
    %v1197 = vld [vmem:[%s3 + $0x50] sm:$0xff]
    %v1198 = vld [vmem:[%s3 + $0x58] sm:$0xff]
    %v1199 = vld [vmem:[%s3 + $0x60] sm:$0xff]
    %v1200 = vld [vmem:[%s3 + $0x68] sm:$0xff]
    %v1201 = vld [vmem:[%s3 + $0x70] sm:$0xff]
    %v1202 = vld [vmem:[%s3 + $0x78] sm:$0xff]
    %v1203 = vld [vmem:[%s3 + $0x80] sm:$0xff]
    %v1204 = vld [vmem:[%s3 + $0x88] sm:$0xff]
    %v1205 = vld [vmem:[%s3 + $0x90] sm:$0xff]
    %v1206 = vld [vmem:[%s3 + $0x98] sm:$0xff]
    %v1207 = vld [vmem:[%s3 + $0xa0] sm:$0xff]
    %v1208 = vld [vmem:[%s3 + $0xa8] sm:$0xff]
    %v1209 = vld [vmem:[%s3 + $0xb0] sm:$0xff]
    %v1210 = vld [vmem:[%s3 + $0xb8] sm:$0xff]
    %v1211 = vld [vmem:[%s3 + $0xc0] sm:$0xff]
    %v1212 = vld [vmem:[%s3 + $0xc8] sm:$0xff]
    %v1213 = vld [vmem:[%s3 + $0xd0] sm:$0xff]
    %v1214 = vld [vmem:[%s3 + $0xd8] sm:$0xff]
    %v1215 = vld [vmem:[%s3 + $0xe0] sm:$0xff]
    %v1216 = vld [vmem:[%s3 + $0xe8] sm:$0xff]
    %v1217 = vld [vmem:[%s3 + $0xf0] sm:$0xff]
    %v1218 = vld [vmem:[%s3 + $0xf8] sm:$0xff]
    %v1220 = vrot.slane %v1185, 2
    %v1221 = vsel %vm478, %v1220, 0
    %1223 = vmatprep.subr.mxu0 %v1204
    %1224 = vmatpush1.msra.mxu0 %v1203
    %1225 = vmatprep.subr.mxu0 %v1206
    %1226 = vmatpush1.msra.mxu0 %v1205
    %1227 = vmatprep.subr.mxu0 %v1208
    %1228 = vmatpush1.msra.mxu0 %v1207
    %1229 = vmatprep.subr.mxu0 %v1210
    %1230 = vmatpush1.msra.mxu0 %v1209
    %1231 = vmatprep.subr.mxu0 %v1212
    %1232 = vmatpush1.msra.mxu0 %v1211
    %1233 = vmatprep.subr.mxu0 %v1214
    %1234 = vmatpush1.msra.mxu0 %v1213
    %1235 = vmatprep.subr.mxu0 %v1216
    %1236 = vmatpush1.msra.mxu0 %v1215
    %1237 = vmatprep.subr.mxu0 %v1218
    %1238 = vmatpush1.msra.mxu0 %v1217
    %1239 = vmatprep.subr.mxu0 0.0
    %1240 = vmatpush1.msra.mxu0 0.0
    %1241 = vmatprep.subr.mxu0 0.0
    %1242 = vmatpush1.msra.mxu0 0.0
    %1243 = vmatprep.subr.mxu0 0.0
    %1244 = vmatpush1.msra.mxu0 0.0
    %1245 = vmatprep.subr.mxu0 0.0
    %1246 = vmatpush1.msra.mxu0 0.0
    %1247 = vmatprep.subr.mxu0 0.0
    %1248 = vmatpush1.msra.mxu0 0.0
    %1249 = vmatprep.subr.mxu0 0.0
    %1250 = vmatpush1.msra.mxu0 0.0
    %1251 = vmatprep.subr.mxu0 0.0
    %1252 = vmatpush1.msra.mxu0 0.0
    %1253 = vmatprep.subr.mxu0 0.0
    %1254 = vmatpush1.msra.mxu0 0.0
    %1255 = vmatprep.subr.mxu0 0.0
    %1256 = vmatpush1.msra.mxu0 0.0
    %1257 = vmatprep.subr.mxu0 0.0
    %1258 = vmatpush1.msra.mxu0 0.0
    %1259 = vmatprep.subr.mxu0 0.0
    %1260 = vmatpush1.msra.mxu0 0.0
    %1261 = vmatprep.subr.mxu0 0.0
    %1262 = vmatpush1.msra.mxu0 0.0
    %1263 = vmatprep.subr.mxu0 0.0
    %1264 = vmatpush1.msra.mxu0 0.0
    %1265 = vmatprep.subr.mxu0 0.0
    %1266 = vmatpush1.msra.mxu0 0.0
    %1267 = vmatprep.subr.mxu0 0.0
    %1268 = vmatpush1.msra.mxu0 0.0
    %1269 = vmatprep.subr.mxu0 0.0
    %1270 = vmatpush1.msra.mxu0 0.0
    %1271 = vmatprep.subr.mxu0 0.0
    %1272 = vmatpush1.msra.mxu0 0.0
    %1273 = vmatprep.subr.mxu0 0.0
    %1274 = vmatpush1.msra.mxu0 0.0
    %1275 = vmatprep.subr.mxu0 0.0
    %1276 = vmatpush1.msra.mxu0 0.0
    %1277 = vmatprep.subr.mxu0 0.0
    %1278 = vmatpush1.msra.mxu0 0.0
    %1279 = vmatprep.subr.mxu0 0.0
    %1280 = vmatpush1.msra.mxu0 0.0
    %1281 = vmatprep.subr.mxu0 0.0
    %1282 = vmatpush1.msra.mxu0 0.0
    %1283 = vmatprep.subr.mxu0 0.0
    %1284 = vmatpush1.msra.mxu0 0.0
    %1285 = vmatprep.subr.mxu0 0.0
    %1286 = vmatpush1.msra.mxu0 0.0
    %1287 = vmatprep.mubr.f32.mxu0 0.0
    %1288 = vmatmul.mubr.f32.gmra.mrb[0].mxu0 %v1221
    %v1289 = vpop.f32.mrb[0].mxu0
    %v1290 = vadd.f32 0.0, %v1289
    %v1291 = vpop.f32.mrb[0].mxu0
    %v1292 = vadd.f32 0.0, %v1291
    %1293 = vdwg.mxu0
    %v1294 = vsel %vm478, %v1185, 0
    %1296 = vmatprep.subr.mxu0 %v1188
    %1297 = vmatpush1.msra.mxu0 %v1187
    %1298 = vmatprep.subr.mxu0 %v1190
    %1299 = vmatpush1.msra.mxu0 %v1189
    %1300 = vmatprep.subr.mxu0 %v1192
    %1301 = vmatpush1.msra.mxu0 %v1191
    %1302 = vmatprep.subr.mxu0 %v1194
    %1303 = vmatpush1.msra.mxu0 %v1193
    %1304 = vmatprep.subr.mxu0 %v1196
    %1305 = vmatpush1.msra.mxu0 %v1195
    %1306 = vmatprep.subr.mxu0 %v1198
    %1307 = vmatpush1.msra.mxu0 %v1197
    %1308 = vmatprep.subr.mxu0 %v1200
    %1309 = vmatpush1.msra.mxu0 %v1199
    %1310 = vmatprep.subr.mxu0 %v1202
    %1311 = vmatpush1.msra.mxu0 %v1201
    %1312 = vmatprep.subr.mxu0 0.0
    %1313 = vmatpush1.msra.mxu0 0.0
    %1314 = vmatprep.subr.mxu0 0.0
    %1315 = vmatpush1.msra.mxu0 0.0
    %1316 = vmatprep.subr.mxu0 0.0
    %1317 = vmatpush1.msra.mxu0 0.0
    %1318 = vmatprep.subr.mxu0 0.0
    %1319 = vmatpush1.msra.mxu0 0.0
    %1320 = vmatprep.subr.mxu0 0.0
    %1321 = vmatpush1.msra.mxu0 0.0
    %1322 = vmatprep.subr.mxu0 0.0
    %1323 = vmatpush1.msra.mxu0 0.0
    %1324 = vmatprep.subr.mxu0 0.0
    %1325 = vmatpush1.msra.mxu0 0.0
    %1326 = vmatprep.subr.mxu0 0.0
    %1327 = vmatpush1.msra.mxu0 0.0
    %1328 = vmatprep.subr.mxu0 0.0
    %1329 = vmatpush1.msra.mxu0 0.0
    %1330 = vmatprep.subr.mxu0 0.0
    %1331 = vmatpush1.msra.mxu0 0.0
    %1332 = vmatprep.subr.mxu0 0.0
    %1333 = vmatpush1.msra.mxu0 0.0
    %1334 = vmatprep.subr.mxu0 0.0
    %1335 = vmatpush1.msra.mxu0 0.0
    %1336 = vmatprep.subr.mxu0 0.0
    %1337 = vmatpush1.msra.mxu0 0.0
    %1338 = vmatprep.subr.mxu0 0.0
    %1339 = vmatpush1.msra.mxu0 0.0
    %1340 = vmatprep.subr.mxu0 0.0
    %1341 = vmatpush1.msra.mxu0 0.0
    %1342 = vmatprep.subr.mxu0 0.0
    %1343 = vmatpush1.msra.mxu0 0.0
    %1344 = vmatprep.subr.mxu0 0.0
    %1345 = vmatpush1.msra.mxu0 0.0
    %1346 = vmatprep.subr.mxu0 0.0
    %1347 = vmatpush1.msra.mxu0 0.0
    %1348 = vmatprep.subr.mxu0 0.0
    %1349 = vmatpush1.msra.mxu0 0.0
    %1350 = vmatprep.subr.mxu0 0.0
    %1351 = vmatpush1.msra.mxu0 0.0
    %1352 = vmatprep.subr.mxu0 0.0
    %1353 = vmatpush1.msra.mxu0 0.0
    %1354 = vmatprep.subr.mxu0 0.0
    %1355 = vmatpush1.msra.mxu0 0.0
    %1356 = vmatprep.subr.mxu0 0.0
    %1357 = vmatpush1.msra.mxu0 0.0
    %1358 = vmatprep.subr.mxu0 0.0
    %1359 = vmatpush1.msra.mxu0 0.0
    %1360 = vmatprep.mubr.f32.mxu0 0.0
    %1361 = vmatmul.mubr.f32.gmra.mrb[0].mxu0 %v1294
    %v1362 = vpop.f32.mrb[0].mxu0
    %v1363 = vadd.f32 %v1290, %v1362
    %v1364 = vpop.f32.mrb[0].mxu0
    %v1365 = vadd.f32 %v1292, %v1364
    %1366 = vdwg.mxu0
    %v1367 = vld [vmem:[%s3 + $0x100] sm:$0xff]
    %v1368 = vld [vmem:[%s3 + $0x108] sm:$0xff]
    %v1369 = vld [vmem:[%s3 + $0x110] sm:$0xff]
    %v1370 = vld [vmem:[%s3 + $0x118] sm:$0xff]
    %v1371 = vld [vmem:[%s3 + $0x120] sm:$0xff]
    %v1372 = vld [vmem:[%s3 + $0x128] sm:$0xff]
    %v1373 = vld [vmem:[%s3 + $0x130] sm:$0xff]
    %v1374 = vld [vmem:[%s3 + $0x138] sm:$0xff]
    %v1375 = vld [vmem:[%s3 + $0x140] sm:$0xff]
    %v1376 = vld [vmem:[%s3 + $0x148] sm:$0xff]
    %v1377 = vld [vmem:[%s3 + $0x150] sm:$0xff]
    %v1378 = vld [vmem:[%s3 + $0x158] sm:$0xff]
    %v1379 = vld [vmem:[%s3 + $0x160] sm:$0xff]
    %v1380 = vld [vmem:[%s3 + $0x168] sm:$0xff]
    %v1381 = vld [vmem:[%s3 + $0x170] sm:$0xff]
    %v1382 = vld [vmem:[%s3 + $0x178] sm:$0xff]
    %v1383 = vrot.slane %v1185, 4
    %v1384 = vsel %vm478, %v1383, 0
    %1386 = vmatprep.subr.mxu0 %v1368
    %1387 = vmatpush1.msra.mxu0 %v1367
    %1388 = vmatprep.subr.mxu0 %v1370
    %1389 = vmatpush1.msra.mxu0 %v1369
    %1390 = vmatprep.subr.mxu0 %v1372
    %1391 = vmatpush1.msra.mxu0 %v1371
    %1392 = vmatprep.subr.mxu0 %v1374
    %1393 = vmatpush1.msra.mxu0 %v1373
    %1394 = vmatprep.subr.mxu0 %v1376
    %1395 = vmatpush1.msra.mxu0 %v1375
    %1396 = vmatprep.subr.mxu0 %v1378
    %1397 = vmatpush1.msra.mxu0 %v1377
    %1398 = vmatprep.subr.mxu0 %v1380
    %1399 = vmatpush1.msra.mxu0 %v1379
    %1400 = vmatprep.subr.mxu0 %v1382
    %1401 = vmatpush1.msra.mxu0 %v1381
    %1402 = vmatprep.subr.mxu0 0.0
    %1403 = vmatpush1.msra.mxu0 0.0
    %1404 = vmatprep.subr.mxu0 0.0
    %1405 = vmatpush1.msra.mxu0 0.0
    %1406 = vmatprep.subr.mxu0 0.0
    %1407 = vmatpush1.msra.mxu0 0.0
    %1408 = vmatprep.subr.mxu0 0.0
    %1409 = vmatpush1.msra.mxu0 0.0
    %1410 = vmatprep.subr.mxu0 0.0
    %1411 = vmatpush1.msra.mxu0 0.0
    %1412 = vmatprep.subr.mxu0 0.0
    %1413 = vmatpush1.msra.mxu0 0.0
    %1414 = vmatprep.subr.mxu0 0.0
    %1415 = vmatpush1.msra.mxu0 0.0
    %1416 = vmatprep.subr.mxu0 0.0
    %1417 = vmatpush1.msra.mxu0 0.0
    %1418 = vmatprep.subr.mxu0 0.0
    %1419 = vmatpush1.msra.mxu0 0.0
    %1420 = vmatprep.subr.mxu0 0.0
    %1421 = vmatpush1.msra.mxu0 0.0
    %1422 = vmatprep.subr.mxu0 0.0
    %1423 = vmatpush1.msra.mxu0 0.0
    %1424 = vmatprep.subr.mxu0 0.0
    %1425 = vmatpush1.msra.mxu0 0.0
    %1426 = vmatprep.subr.mxu0 0.0
    %1427 = vmatpush1.msra.mxu0 0.0
    %1428 = vmatprep.subr.mxu0 0.0
    %1429 = vmatpush1.msra.mxu0 0.0
    %1430 = vmatprep.subr.mxu0 0.0
    %1431 = vmatpush1.msra.mxu0 0.0
    %1432 = vmatprep.subr.mxu0 0.0
    %1433 = vmatpush1.msra.mxu0 0.0
    %1434 = vmatprep.subr.mxu0 0.0
    %1435 = vmatpush1.msra.mxu0 0.0
    %1436 = vmatprep.subr.mxu0 0.0
    %1437 = vmatpush1.msra.mxu0 0.0
    %1438 = vmatprep.subr.mxu0 0.0
    %1439 = vmatpush1.msra.mxu0 0.0
    %1440 = vmatprep.subr.mxu0 0.0
    %1441 = vmatpush1.msra.mxu0 0.0
    %1442 = vmatprep.subr.mxu0 0.0
    %1443 = vmatpush1.msra.mxu0 0.0
    %1444 = vmatprep.subr.mxu0 0.0
    %1445 = vmatpush1.msra.mxu0 0.0
    %1446 = vmatprep.subr.mxu0 0.0
    %1447 = vmatpush1.msra.mxu0 0.0
    %1448 = vmatprep.subr.mxu0 0.0
    %1449 = vmatpush1.msra.mxu0 0.0
    %1450 = vmatprep.mubr.f32.mxu0 0.0
    %1451 = vmatmul.mubr.f32.gmra.mrb[0].mxu0 %v1384
    %v1452 = vpop.f32.mrb[0].mxu0
    %v1453 = vadd.f32 0.0, %v1452
    %v1454 = vpop.f32.mrb[0].mxu0
    %v1455 = vadd.f32 0.0, %v1454
    %1456 = vdwg.mxu0
    %v1457 = vadd.f32 %v1363, %v1453
    %v1458 = vadd.f32 %v1365, %v1455
    %v1459 = vadd.f32 %v1457, %v721
    %v1460 = vadd.f32 %v1458, %v725
    %v1461 = vld [vmem:[#allocation5] sm:$0xf]
    %vm1462 = vcmp.gt.f32.partialorder %v1461, %v731
    %v1463 = vsel %vm1462, 1, 0
    %v1464 = vcvt.s32.f32 %v1463
    %v1465 = vmul.f32 %v1461, 0.5
    %v1468 = vcombine.low %v1459, %v1460
    %v1470 = vunpack.c.l.s4 1983009808
    %v1471 = vunpack.c.0.s8 %v1470
    %v1472 = vlaneseq
    %v1473 = vshrl.u32 %v1472, 7
    %v1474 = vsub.s32 %v1471, %v1473
    %v1475 = vrot.slane %v1468, %v1474
    %v1477 = vadd.f32 %v1465, %v1475
    %v1478 = vmul.f32 %v1464, %v731
    %v1479 = vsub.f32 %v1477, %v1478
    %vm1480 = vcmp.gt.f32.partialorder %v1479, %v731
    %v1481 = vsel %vm1480, 1, 0
    %v1482 = vcvt.s32.f32 %v1481
    %1483 = vst [vmem:[#allocation5] sm:$0xf] %v1479
    %s1484 = scalar_lea.vmem [#allocation10], 4
    %1485 = vst [vmem:[%s1484] sm:$0xf] %v1482
    %s1486 = scalar_lea.vmem [#allocation11], 4
    %1487 = vst [vmem:[%s1486] sm:$0xf] %v1479
    %v1490 = vunpack.c.l.s4 1983009808
    %v1491 = vunpack.c.0.s8 %v1490
    %v1492 = vlaneseq
    %v1493 = vshrl.u32 %v1492, 7
    %v1494 = vsub.s32 %v1491, %v1493
    %v1495 = vrot.slane %v1482, %v1494
    %v1496 = vcombine.high %v1495, %v1495
    %1499 = vmatprep.subr.mxu0 0.0
    %1500 = vmatpush1.msra.mxu0 %v70
    %1501 = vmatprep.subr.mxu0 0.0
    %1502 = vmatpush1.msra.mxu0 %v71
    %1503 = vmatprep.subr.mxu0 0.0
    %1504 = vmatpush1.msra.mxu0 %v72
    %1505 = vmatprep.subr.mxu0 0.0
    %1506 = vmatpush1.msra.mxu0 %v73
    %1507 = vmatprep.subr.mxu0 0.0
    %1508 = vmatpush1.msra.mxu0 %v74
    %1509 = vmatprep.subr.mxu0 0.0
    %1510 = vmatpush1.msra.mxu0 %v75
    %1511 = vmatprep.subr.mxu0 0.0
    %1512 = vmatpush1.msra.mxu0 %v76
    %1513 = vmatprep.subr.mxu0 0.0
    %1514 = vmatpush1.msra.mxu0 %v77
    %1515 = vmatprep.subr.mxu0 0.0
    %1516 = vmatpush1.msra.mxu0 %v78
    %1517 = vmatprep.subr.mxu0 0.0
    %1518 = vmatpush1.msra.mxu0 %v79
    %1519 = vmatprep.subr.mxu0 0.0
    %1520 = vmatpush1.msra.mxu0 %v80
    %1521 = vmatprep.subr.mxu0 0.0
    %1522 = vmatpush1.msra.mxu0 %v81
    %1523 = vmatprep.subr.mxu0 0.0
    %1524 = vmatpush1.msra.mxu0 %v82
    %1525 = vmatprep.subr.mxu0 0.0
    %1526 = vmatpush1.msra.mxu0 %v83
    %1527 = vmatprep.subr.mxu0 0.0
    %1528 = vmatpush1.msra.mxu0 %v84
    %1529 = vmatprep.subr.mxu0 0.0
    %1530 = vmatpush1.msra.mxu0 %v85
    %1531 = vmatprep.subr.mxu0 0.0
    %1532 = vmatpush1.msra.mxu0 %v86
    %1533 = vmatprep.subr.mxu0 0.0
    %1534 = vmatpush1.msra.mxu0 %v87
    %1535 = vmatprep.subr.mxu0 0.0
    %1536 = vmatpush1.msra.mxu0 %v88
    %1537 = vmatprep.subr.mxu0 0.0
    %1538 = vmatpush1.msra.mxu0 %v89
    %1539 = vmatprep.subr.mxu0 0.0
    %1540 = vmatpush1.msra.mxu0 %v90
    %1541 = vmatprep.subr.mxu0 0.0
    %1542 = vmatpush1.msra.mxu0 %v91
    %1543 = vmatprep.subr.mxu0 0.0
    %1544 = vmatpush1.msra.mxu0 %v92
    %1545 = vmatprep.subr.mxu0 0.0
    %1546 = vmatpush1.msra.mxu0 %v93
    %1547 = vmatprep.subr.mxu0 0.0
    %1548 = vmatpush1.msra.mxu0 %v94
    %1549 = vmatprep.subr.mxu0 0.0
    %1550 = vmatpush1.msra.mxu0 %v95
    %1551 = vmatprep.subr.mxu0 0.0
    %1552 = vmatpush1.msra.mxu0 %v96
    %1553 = vmatprep.subr.mxu0 0.0
    %1554 = vmatpush1.msra.mxu0 %v97
    %1555 = vmatprep.subr.mxu0 0.0
    %1556 = vmatpush1.msra.mxu0 %v98
    %1557 = vmatprep.subr.mxu0 0.0
    %1558 = vmatpush1.msra.mxu0 %v99
    %1559 = vmatprep.subr.mxu0 0.0
    %1560 = vmatpush1.msra.mxu0 %v100
    %1561 = vmatprep.subr.mxu0 0.0
    %1562 = vmatpush1.msra.mxu0 %v101
    %1563 = vmatprep.mubr.f32.mxu0 %v1496
    %1564 = vmatmul.mubr.f32.gmra.mrb[0].mxu0 %v1495
    %v1565 = vpop.f32.mrb[0].mxu0
    %v1566 = vadd.f32 %v760, %v1565
    %v1567 = vpop.f32.mrb[0].mxu0
    %1568 = vdwg.mxu0
    %v1569 = vld [vmem:[#allocation6] sm:$0x3]
    %vm1570 = vcmp.gt.f32.partialorder %v1569, %v844
    %v1571 = vsel %vm1570, 1, 0
    %v1572 = vcvt.s32.f32 %v1571
    %v1573 = vmul.f32 %v1569, 0.5
    %v1574 = vadd.f32 %v1573, %v1566
    %v1575 = vmul.f32 %v1572, %v844
    %v1576 = vsub.f32 %v1574, %v1575
    %vm1577 = vcmp.gt.f32.partialorder %v1576, %v844
    %v1578 = vsel %vm1577, 1, 0
    %v1579 = vcvt.s32.f32 %v1578
    %1580 = vst [vmem:[#allocation6] sm:$0x3] %v1576
    %s1581 = scalar_lea.vmem %s10, 2
    %1582 = vst [vmem:[%s1581] sm:$0x3] %v1579
    %s1583 = scalar_lea.vmem %s11, 2
    %1584 = vst [vmem:[%s1583] sm:$0x3] %v1576
    %v1585 = vld [vmem:[#allocation2] sm:$0xff]
    %v1586 = vld [vmem:[#allocation2 + $0x8] sm:$0x3f]
    %s1587 = scalar_lea.vmem %s0, 32
    %v1588 = vld [vmem:[%s1587] sm:$0xff]
    %v1589 = vld [vmem:[%s1587 + $0x8] sm:$0x3f]
    %vm1590 = vcmp.gt.f32.partialorder %v1585, %v107
    %vm1591 = vcmp.gt.f32.partialorder %v1586, %v107
    %v1592 = vsel %vm1590, 1, 0
    %v1593 = vsel %vm1591, 1, 0
    %v1594 = vcvt.s32.f32 %v1592
    %v1595 = vcvt.s32.f32 %v1593
    %v1596 = vmul.f32 %v1585, 0.5
    %v1597 = vmul.f32 %v1586, 0.5
    %v1598 = vadd.f32 %v1596, %v1588
    %v1599 = vadd.f32 %v1597, %v1589
    %v1600 = vmul.f32 %v1594, %v107
    %v1601 = vmul.f32 %v1595, %v107
    %v1602 = vsub.f32 %v1598, %v1600
    %v1603 = vsub.f32 %v1599, %v1601
    %vm1604 = vcmp.gt.f32.partialorder %v1602, %v107
    %vm1605 = vcmp.gt.f32.partialorder %v1603, %v107
    %v1606 = vsel %vm1604, 1, 0
    %v1607 = vsel %vm1605, 1, 0
    %v1608 = vcvt.s32.f32 %v1606
    %v1609 = vcvt.s32.f32 %v1607
    %1610 = vst.msk [vmem:[#allocation2] sm:$0xff] %vm128, %v1602
    %1611 = vst.msk [vmem:[#allocation2 + $0x8] sm:$0x3f] %vm130, %v1603
    %1612 = vst.msk [vmem:[#allocation3 + $0x2] sm:$0xff] %vm128, %v1608
    %1613 = vst.msk [vmem:[#allocation3 + $0xa] sm:$0x3f] %vm130, %v1609
    %v1614 = vld [vmem:[#allocation3] sm:$0xff]
    %v1615 = vld [vmem:[#allocation3 + $0x8] sm:$0x3f]
    %v1616 = vld [vmem:[%s1] sm:$0xff]
    %v1617 = vld [vmem:[%s1 + $0x8] sm:$0xff]
    %v1618 = vld [vmem:[%s1 + $0x10] sm:$0xff]
    %v1619 = vld [vmem:[%s1 + $0x18] sm:$0xff]
    %v1620 = vld [vmem:[#allocation3 + $0x2] sm:$0xff]
    %v1621 = vld [vmem:[#allocation3 + $0xa] sm:$0x3f]
    %v1622 = vld [vmem:[%s1 + $0x20] sm:$0xff]
    %v1623 = vld [vmem:[%s1 + $0x28] sm:$0xff]
    %v1624 = vld [vmem:[%s1 + $0x30] sm:$0xff]
    %v1625 = vld [vmem:[%s1 + $0x38] sm:$0xff]
    %v1627 = vsel %vm128, %v1620, 0
    %v1630 = vsel %vm128, %v1621, 0
    %1632 = vmatprep.subr.mxu0 0.0
    %1633 = vmatpush1.msra.mxu0 %v1622
    %1634 = vmatprep.subr.mxu0 0.0
    %1635 = vmatpush1.msra.mxu0 %v1623
    %1636 = vmatprep.subr.mxu0 0.0
    %1637 = vmatpush1.msra.mxu0 %v1624
    %1638 = vmatprep.subr.mxu0 0.0
    %1639 = vmatpush1.msra.mxu0 %v1625
    %1640 = vmatprep.subr.mxu0 0.0
    %1641 = vmatpush1.msra.mxu0 0.0
    %1642 = vmatprep.subr.mxu0 0.0
    %1643 = vmatpush1.msra.mxu0 0.0
    %1644 = vmatprep.subr.mxu0 0.0
    %1645 = vmatpush1.msra.mxu0 0.0
    %1646 = vmatprep.subr.mxu0 0.0
    %1647 = vmatpush1.msra.mxu0 0.0
    %1648 = vmatprep.subr.mxu0 0.0
    %1649 = vmatpush1.msra.mxu0 0.0
    %1650 = vmatprep.subr.mxu0 0.0
    %1651 = vmatpush1.msra.mxu0 0.0
    %1652 = vmatprep.subr.mxu0 0.0
    %1653 = vmatpush1.msra.mxu0 0.0
    %1654 = vmatprep.subr.mxu0 0.0
    %1655 = vmatpush1.msra.mxu0 0.0
    %1656 = vmatprep.subr.mxu0 0.0
    %1657 = vmatpush1.msra.mxu0 0.0
    %1658 = vmatprep.subr.mxu0 0.0
    %1659 = vmatpush1.msra.mxu0 0.0
    %1660 = vmatprep.subr.mxu0 0.0
    %1661 = vmatpush1.msra.mxu0 0.0
    %1662 = vmatprep.subr.mxu0 0.0
    %1663 = vmatpush1.msra.mxu0 0.0
    %1664 = vmatprep.subr.mxu0 0.0
    %1665 = vmatpush1.msra.mxu0 0.0
    %1666 = vmatprep.subr.mxu0 0.0
    %1667 = vmatpush1.msra.mxu0 0.0
    %1668 = vmatprep.subr.mxu0 0.0
    %1669 = vmatpush1.msra.mxu0 0.0
    %1670 = vmatprep.subr.mxu0 0.0
    %1671 = vmatpush1.msra.mxu0 0.0
    %1672 = vmatprep.subr.mxu0 0.0
    %1673 = vmatpush1.msra.mxu0 0.0
    %1674 = vmatprep.subr.mxu0 0.0
    %1675 = vmatpush1.msra.mxu0 0.0
    %1676 = vmatprep.subr.mxu0 0.0
    %1677 = vmatpush1.msra.mxu0 0.0
    %1678 = vmatprep.subr.mxu0 0.0
    %1679 = vmatpush1.msra.mxu0 0.0
    %1680 = vmatprep.subr.mxu0 0.0
    %1681 = vmatpush1.msra.mxu0 0.0
    %1682 = vmatprep.subr.mxu0 0.0
    %1683 = vmatpush1.msra.mxu0 0.0
    %1684 = vmatprep.subr.mxu0 0.0
    %1685 = vmatpush1.msra.mxu0 0.0
    %1686 = vmatprep.subr.mxu0 0.0
    %1687 = vmatpush1.msra.mxu0 0.0
    %1688 = vmatprep.subr.mxu0 0.0
    %1689 = vmatpush1.msra.mxu0 0.0
    %1690 = vmatprep.subr.mxu0 0.0
    %1691 = vmatpush1.msra.mxu0 0.0
    %1692 = vmatprep.subr.mxu0 0.0
    %1693 = vmatpush1.msra.mxu0 0.0
    %1694 = vmatprep.subr.mxu0 0.0
    %1695 = vmatpush1.msra.mxu0 0.0
    %1696 = vmatprep.mubr.f32.mxu0 0.0
    %1697 = vmatmul.mubr.f32.gmra.mrb[0].mxu0 %v1627
    %v1698 = vpop.f32.mrb[0].mxu0
    %v1699 = vadd.f32 0.0, %v1698
    %v1700 = vpop.f32.mrb[0].mxu0
    %1701 = vmatprep.mubr.f32.mxu0 0.0
    %1702 = vmatmul.mubr.f32.gmra.mrb[0].mxu0 %v1630
    %v1703 = vpop.f32.mrb[0].mxu0
    %v1704 = vadd.f32 0.0, %v1703
    %v1705 = vpop.f32.mrb[0].mxu0
    %1706 = vdwg.mxu0
    %v1708 = vsel %vm128, %v1614, 0
    %v1711 = vsel %vm128, %v1615, 0
    %1713 = vmatprep.subr.mxu0 0.0
    %1714 = vmatpush1.msra.mxu0 %v1616
    %1715 = vmatprep.subr.mxu0 0.0
    %1716 = vmatpush1.msra.mxu0 %v1617
    %1717 = vmatprep.subr.mxu0 0.0
    %1718 = vmatpush1.msra.mxu0 %v1618
    %1719 = vmatprep.subr.mxu0 0.0
    %1720 = vmatpush1.msra.mxu0 %v1619
    %1721 = vmatprep.subr.mxu0 0.0
    %1722 = vmatpush1.msra.mxu0 0.0
    %1723 = vmatprep.subr.mxu0 0.0
    %1724 = vmatpush1.msra.mxu0 0.0
    %1725 = vmatprep.subr.mxu0 0.0
    %1726 = vmatpush1.msra.mxu0 0.0
    %1727 = vmatprep.subr.mxu0 0.0
    %1728 = vmatpush1.msra.mxu0 0.0
    %1729 = vmatprep.subr.mxu0 0.0
    %1730 = vmatpush1.msra.mxu0 0.0
    %1731 = vmatprep.subr.mxu0 0.0
    %1732 = vmatpush1.msra.mxu0 0.0
    %1733 = vmatprep.subr.mxu0 0.0
    %1734 = vmatpush1.msra.mxu0 0.0
    %1735 = vmatprep.subr.mxu0 0.0
    %1736 = vmatpush1.msra.mxu0 0.0
    %1737 = vmatprep.subr.mxu0 0.0
    %1738 = vmatpush1.msra.mxu0 0.0
    %1739 = vmatprep.subr.mxu0 0.0
    %1740 = vmatpush1.msra.mxu0 0.0
    %1741 = vmatprep.subr.mxu0 0.0
    %1742 = vmatpush1.msra.mxu0 0.0
    %1743 = vmatprep.subr.mxu0 0.0
    %1744 = vmatpush1.msra.mxu0 0.0
    %1745 = vmatprep.subr.mxu0 0.0
    %1746 = vmatpush1.msra.mxu0 0.0
    %1747 = vmatprep.subr.mxu0 0.0
    %1748 = vmatpush1.msra.mxu0 0.0
    %1749 = vmatprep.subr.mxu0 0.0
    %1750 = vmatpush1.msra.mxu0 0.0
    %1751 = vmatprep.subr.mxu0 0.0
    %1752 = vmatpush1.msra.mxu0 0.0
    %1753 = vmatprep.subr.mxu0 0.0
    %1754 = vmatpush1.msra.mxu0 0.0
    %1755 = vmatprep.subr.mxu0 0.0
    %1756 = vmatpush1.msra.mxu0 0.0
    %1757 = vmatprep.subr.mxu0 0.0
    %1758 = vmatpush1.msra.mxu0 0.0
    %1759 = vmatprep.subr.mxu0 0.0
    %1760 = vmatpush1.msra.mxu0 0.0
    %1761 = vmatprep.subr.mxu0 0.0
    %1762 = vmatpush1.msra.mxu0 0.0
    %1763 = vmatprep.subr.mxu0 0.0
    %1764 = vmatpush1.msra.mxu0 0.0
    %1765 = vmatprep.subr.mxu0 0.0
    %1766 = vmatpush1.msra.mxu0 0.0
    %1767 = vmatprep.subr.mxu0 0.0
    %1768 = vmatpush1.msra.mxu0 0.0
    %1769 = vmatprep.subr.mxu0 0.0
    %1770 = vmatpush1.msra.mxu0 0.0
    %1771 = vmatprep.subr.mxu0 0.0
    %1772 = vmatpush1.msra.mxu0 0.0
    %1773 = vmatprep.subr.mxu0 0.0
    %1774 = vmatpush1.msra.mxu0 0.0
    %1775 = vmatprep.subr.mxu0 0.0
    %1776 = vmatpush1.msra.mxu0 0.0
    %1777 = vmatprep.mubr.f32.mxu0 0.0
    %1778 = vmatmul.mubr.f32.gmra.mrb[0].mxu0 %v1708
    %v1779 = vpop.f32.mrb[0].mxu0
    %v1780 = vadd.f32 %v1699, %v1779
    %v1781 = vpop.f32.mrb[0].mxu0
    %1782 = vmatprep.mubr.f32.mxu0 0.0
    %1783 = vmatmul.mubr.f32.gmra.mrb[0].mxu0 %v1711
    %v1784 = vpop.f32.mrb[0].mxu0
    %v1785 = vadd.f32 %v1704, %v1784
    %v1786 = vpop.f32.mrb[0].mxu0
    %1787 = vdwg.mxu0
    %v1788 = vld [vmem:[#allocation3 + $0x4] sm:$0xff]
    %v1789 = vld [vmem:[#allocation3 + $0xc] sm:$0x3f]
    %v1790 = vld [vmem:[%s1 + $0x40] sm:$0xff]
    %v1791 = vld [vmem:[%s1 + $0x48] sm:$0xff]
    %v1792 = vld [vmem:[%s1 + $0x50] sm:$0xff]
    %v1793 = vld [vmem:[%s1 + $0x58] sm:$0xff]
    %v1795 = vsel %vm128, %v1788, 0
    %v1798 = vsel %vm128, %v1789, 0
    %1800 = vmatprep.subr.mxu0 0.0
    %1801 = vmatpush1.msra.mxu0 %v1790
    %1802 = vmatprep.subr.mxu0 0.0
    %1803 = vmatpush1.msra.mxu0 %v1791
    %1804 = vmatprep.subr.mxu0 0.0
    %1805 = vmatpush1.msra.mxu0 %v1792
    %1806 = vmatprep.subr.mxu0 0.0
    %1807 = vmatpush1.msra.mxu0 %v1793
    %1808 = vmatprep.subr.mxu0 0.0
    %1809 = vmatpush1.msra.mxu0 0.0
    %1810 = vmatprep.subr.mxu0 0.0
    %1811 = vmatpush1.msra.mxu0 0.0
    %1812 = vmatprep.subr.mxu0 0.0
    %1813 = vmatpush1.msra.mxu0 0.0
    %1814 = vmatprep.subr.mxu0 0.0
    %1815 = vmatpush1.msra.mxu0 0.0
    %1816 = vmatprep.subr.mxu0 0.0
    %1817 = vmatpush1.msra.mxu0 0.0
    %1818 = vmatprep.subr.mxu0 0.0
    %1819 = vmatpush1.msra.mxu0 0.0
    %1820 = vmatprep.subr.mxu0 0.0
    %1821 = vmatpush1.msra.mxu0 0.0
    %1822 = vmatprep.subr.mxu0 0.0
    %1823 = vmatpush1.msra.mxu0 0.0
    %1824 = vmatprep.subr.mxu0 0.0
    %1825 = vmatpush1.msra.mxu0 0.0
    %1826 = vmatprep.subr.mxu0 0.0
    %1827 = vmatpush1.msra.mxu0 0.0
    %1828 = vmatprep.subr.mxu0 0.0
    %1829 = vmatpush1.msra.mxu0 0.0
    %1830 = vmatprep.subr.mxu0 0.0
    %1831 = vmatpush1.msra.mxu0 0.0
    %1832 = vmatprep.subr.mxu0 0.0
    %1833 = vmatpush1.msra.mxu0 0.0
    %1834 = vmatprep.subr.mxu0 0.0
    %1835 = vmatpush1.msra.mxu0 0.0
    %1836 = vmatprep.subr.mxu0 0.0
    %1837 = vmatpush1.msra.mxu0 0.0
    %1838 = vmatprep.subr.mxu0 0.0
    %1839 = vmatpush1.msra.mxu0 0.0
    %1840 = vmatprep.subr.mxu0 0.0
    %1841 = vmatpush1.msra.mxu0 0.0
    %1842 = vmatprep.subr.mxu0 0.0
    %1843 = vmatpush1.msra.mxu0 0.0
    %1844 = vmatprep.subr.mxu0 0.0
    %1845 = vmatpush1.msra.mxu0 0.0
    %1846 = vmatprep.subr.mxu0 0.0
    %1847 = vmatpush1.msra.mxu0 0.0
    %1848 = vmatprep.subr.mxu0 0.0
    %1849 = vmatpush1.msra.mxu0 0.0
    %1850 = vmatprep.subr.mxu0 0.0
    %1851 = vmatpush1.msra.mxu0 0.0
    %1852 = vmatprep.subr.mxu0 0.0
    %1853 = vmatpush1.msra.mxu0 0.0
    %1854 = vmatprep.subr.mxu0 0.0
    %1855 = vmatpush1.msra.mxu0 0.0
    %1856 = vmatprep.subr.mxu0 0.0
    %1857 = vmatpush1.msra.mxu0 0.0
    %1858 = vmatprep.subr.mxu0 0.0
    %1859 = vmatpush1.msra.mxu0 0.0
    %1860 = vmatprep.subr.mxu0 0.0
    %1861 = vmatpush1.msra.mxu0 0.0
    %1862 = vmatprep.subr.mxu0 0.0
    %1863 = vmatpush1.msra.mxu0 0.0
    %1864 = vmatprep.mubr.f32.mxu0 0.0
    %1865 = vmatmul.mubr.f32.gmra.mrb[0].mxu0 %v1795
    %v1866 = vpop.f32.mrb[0].mxu0
    %v1867 = vadd.f32 0.0, %v1866
    %v1868 = vpop.f32.mrb[0].mxu0
    %1869 = vmatprep.mubr.f32.mxu0 0.0
    %1870 = vmatmul.mubr.f32.gmra.mrb[0].mxu0 %v1798
    %v1871 = vpop.f32.mrb[0].mxu0
    %v1872 = vadd.f32 0.0, %v1871
    %v1873 = vpop.f32.mrb[0].mxu0
    %1874 = vdwg.mxu0
    %v1875 = vadd.f32 %v1780, %v1867
    %v1876 = vadd.f32 %v1785, %v1872
    %v1877 = vadd.f32 %v1875, %v401
    %v1878 = vadd.f32 %v1876, %v401
    %v1880 = vrot.slane %v1877, 2
    %v1882 = vmax.f32 %v1877, %v1880
    %v1883 = vrot.slane %v1877, 4
    %v1885 = vmax.f32 %v1882, %v1883
    %v1887 = vrot.slane %v1878, 4
    %v1889 = vmax.f32 %v1882, %v1887
    %v1890 = vrot.slane %v1878, 2
    %v1892 = vmax.f32 %v1878, %v1890
    %v1893 = vmax.f32 %v1892, %v1887
    %v1895 = vrot.slane %v1889, 2
    %v1898 = vrot.slane %v1893, 4
    %v1900 = vsel %vm426, %v1885, %v1895
    %v1901 = vsel %vm428, %v1900, %v1898
    %v1902 = vld [vmem:[#allocation4] sm:$0x3f]
    %vm1903 = vcmp.gt.f32.partialorder %v1902, %v431
    %v1904 = vsel %vm1903, 1, 0
    %v1905 = vcvt.s32.f32 %v1904
    %v1906 = vmul.f32 %v1902, 0.5
    %v1907 = vadd.f32 %v1906, %v1901
    %v1908 = vmul.f32 %v1905, %v431
    %v1909 = vsub.f32 %v1907, %v1908
    %vm1910 = vcmp.gt.f32.partialorder %v1909, %v431
    %v1911 = vsel %vm1910, 1, 0
    %v1912 = vcvt.s32.f32 %v1911
    %1913 = vst.msk [vmem:[#allocation4] sm:$0x3f] %vm442, %v1909
    %v1914 = vld [vmem:[%s3] sm:$0xff]
    %v1915 = vld [vmem:[%s3 + $0x8] sm:$0xff]
    %v1916 = vld [vmem:[%s3 + $0x10] sm:$0xff]
    %v1917 = vld [vmem:[%s3 + $0x18] sm:$0xff]
    %v1918 = vld [vmem:[%s3 + $0x20] sm:$0xff]
    %v1919 = vld [vmem:[%s3 + $0x28] sm:$0xff]
    %v1920 = vld [vmem:[%s3 + $0x30] sm:$0xff]
    %v1921 = vld [vmem:[%s3 + $0x38] sm:$0xff]
    %v1922 = vld [vmem:[%s3 + $0x40] sm:$0xff]
    %v1923 = vld [vmem:[%s3 + $0x48] sm:$0xff]
    %v1924 = vld [vmem:[%s3 + $0x50] sm:$0xff]
    %v1925 = vld [vmem:[%s3 + $0x58] sm:$0xff]
    %v1926 = vld [vmem:[%s3 + $0x60] sm:$0xff]
    %v1927 = vld [vmem:[%s3 + $0x68] sm:$0xff]
    %v1928 = vld [vmem:[%s3 + $0x70] sm:$0xff]
    %v1929 = vld [vmem:[%s3 + $0x78] sm:$0xff]
    %v1930 = vld [vmem:[%s3 + $0x80] sm:$0xff]
    %v1931 = vld [vmem:[%s3 + $0x88] sm:$0xff]
    %v1932 = vld [vmem:[%s3 + $0x90] sm:$0xff]
    %v1933 = vld [vmem:[%s3 + $0x98] sm:$0xff]
    %v1934 = vld [vmem:[%s3 + $0xa0] sm:$0xff]
    %v1935 = vld [vmem:[%s3 + $0xa8] sm:$0xff]
    %v1936 = vld [vmem:[%s3 + $0xb0] sm:$0xff]
    %v1937 = vld [vmem:[%s3 + $0xb8] sm:$0xff]
    %v1938 = vld [vmem:[%s3 + $0xc0] sm:$0xff]
    %v1939 = vld [vmem:[%s3 + $0xc8] sm:$0xff]
    %v1940 = vld [vmem:[%s3 + $0xd0] sm:$0xff]
    %v1941 = vld [vmem:[%s3 + $0xd8] sm:$0xff]
    %v1942 = vld [vmem:[%s3 + $0xe0] sm:$0xff]
    %v1943 = vld [vmem:[%s3 + $0xe8] sm:$0xff]
    %v1944 = vld [vmem:[%s3 + $0xf0] sm:$0xff]
    %v1945 = vld [vmem:[%s3 + $0xf8] sm:$0xff]
    %v1947 = vrot.slane %v1912, 2
    %v1948 = vsel %vm478, %v1947, 0
    %1950 = vmatprep.subr.mxu0 %v1931
    %1951 = vmatpush1.msra.mxu0 %v1930
    %1952 = vmatprep.subr.mxu0 %v1933
    %1953 = vmatpush1.msra.mxu0 %v1932
    %1954 = vmatprep.subr.mxu0 %v1935
    %1955 = vmatpush1.msra.mxu0 %v1934
    %1956 = vmatprep.subr.mxu0 %v1937
    %1957 = vmatpush1.msra.mxu0 %v1936
    %1958 = vmatprep.subr.mxu0 %v1939
    %1959 = vmatpush1.msra.mxu0 %v1938
    %1960 = vmatprep.subr.mxu0 %v1941
    %1961 = vmatpush1.msra.mxu0 %v1940
    %1962 = vmatprep.subr.mxu0 %v1943
    %1963 = vmatpush1.msra.mxu0 %v1942
    %1964 = vmatprep.subr.mxu0 %v1945
    %1965 = vmatpush1.msra.mxu0 %v1944
    %1966 = vmatprep.subr.mxu0 0.0
    %1967 = vmatpush1.msra.mxu0 0.0
    %1968 = vmatprep.subr.mxu0 0.0
    %1969 = vmatpush1.msra.mxu0 0.0
    %1970 = vmatprep.subr.mxu0 0.0
    %1971 = vmatpush1.msra.mxu0 0.0
    %1972 = vmatprep.subr.mxu0 0.0
    %1973 = vmatpush1.msra.mxu0 0.0
    %1974 = vmatprep.subr.mxu0 0.0
    %1975 = vmatpush1.msra.mxu0 0.0
    %1976 = vmatprep.subr.mxu0 0.0
    %1977 = vmatpush1.msra.mxu0 0.0
    %1978 = vmatprep.subr.mxu0 0.0
    %1979 = vmatpush1.msra.mxu0 0.0
    %1980 = vmatprep.subr.mxu0 0.0
    %1981 = vmatpush1.msra.mxu0 0.0
    %1982 = vmatprep.subr.mxu0 0.0
    %1983 = vmatpush1.msra.mxu0 0.0
    %1984 = vmatprep.subr.mxu0 0.0
    %1985 = vmatpush1.msra.mxu0 0.0
    %1986 = vmatprep.subr.mxu0 0.0
    %1987 = vmatpush1.msra.mxu0 0.0
    %1988 = vmatprep.subr.mxu0 0.0
    %1989 = vmatpush1.msra.mxu0 0.0
    %1990 = vmatprep.subr.mxu0 0.0
    %1991 = vmatpush1.msra.mxu0 0.0
    %1992 = vmatprep.subr.mxu0 0.0
    %1993 = vmatpush1.msra.mxu0 0.0
    %1994 = vmatprep.subr.mxu0 0.0
    %1995 = vmatpush1.msra.mxu0 0.0
    %1996 = vmatprep.subr.mxu0 0.0
    %1997 = vmatpush1.msra.mxu0 0.0
    %1998 = vmatprep.subr.mxu0 0.0
    %1999 = vmatpush1.msra.mxu0 0.0
    %2000 = vmatprep.subr.mxu0 0.0
    %2001 = vmatpush1.msra.mxu0 0.0
    %2002 = vmatprep.subr.mxu0 0.0
    %2003 = vmatpush1.msra.mxu0 0.0
    %2004 = vmatprep.subr.mxu0 0.0
    %2005 = vmatpush1.msra.mxu0 0.0
    %2006 = vmatprep.subr.mxu0 0.0
    %2007 = vmatpush1.msra.mxu0 0.0
    %2008 = vmatprep.subr.mxu0 0.0
    %2009 = vmatpush1.msra.mxu0 0.0
    %2010 = vmatprep.subr.mxu0 0.0
    %2011 = vmatpush1.msra.mxu0 0.0
    %2012 = vmatprep.subr.mxu0 0.0
    %2013 = vmatpush1.msra.mxu0 0.0
    %2014 = vmatprep.mubr.f32.mxu0 0.0
    %2015 = vmatmul.mubr.f32.gmra.mrb[0].mxu0 %v1948
    %v2016 = vpop.f32.mrb[0].mxu0
    %v2017 = vadd.f32 0.0, %v2016
    %v2018 = vpop.f32.mrb[0].mxu0
    %v2019 = vadd.f32 0.0, %v2018
    %2020 = vdwg.mxu0
    %v2021 = vsel %vm478, %v1912, 0
    %2023 = vmatprep.subr.mxu0 %v1915
    %2024 = vmatpush1.msra.mxu0 %v1914
    %2025 = vmatprep.subr.mxu0 %v1917
    %2026 = vmatpush1.msra.mxu0 %v1916
    %2027 = vmatprep.subr.mxu0 %v1919
    %2028 = vmatpush1.msra.mxu0 %v1918
    %2029 = vmatprep.subr.mxu0 %v1921
    %2030 = vmatpush1.msra.mxu0 %v1920
    %2031 = vmatprep.subr.mxu0 %v1923
    %2032 = vmatpush1.msra.mxu0 %v1922
    %2033 = vmatprep.subr.mxu0 %v1925
    %2034 = vmatpush1.msra.mxu0 %v1924
    %2035 = vmatprep.subr.mxu0 %v1927
    %2036 = vmatpush1.msra.mxu0 %v1926
    %2037 = vmatprep.subr.mxu0 %v1929
    %2038 = vmatpush1.msra.mxu0 %v1928
    %2039 = vmatprep.subr.mxu0 0.0
    %2040 = vmatpush1.msra.mxu0 0.0
    %2041 = vmatprep.subr.mxu0 0.0
    %2042 = vmatpush1.msra.mxu0 0.0
    %2043 = vmatprep.subr.mxu0 0.0
    %2044 = vmatpush1.msra.mxu0 0.0
    %2045 = vmatprep.subr.mxu0 0.0
    %2046 = vmatpush1.msra.mxu0 0.0
    %2047 = vmatprep.subr.mxu0 0.0
    %2048 = vmatpush1.msra.mxu0 0.0
    %2049 = vmatprep.subr.mxu0 0.0
    %2050 = vmatpush1.msra.mxu0 0.0
    %2051 = vmatprep.subr.mxu0 0.0
    %2052 = vmatpush1.msra.mxu0 0.0
    %2053 = vmatprep.subr.mxu0 0.0
    %2054 = vmatpush1.msra.mxu0 0.0
    %2055 = vmatprep.subr.mxu0 0.0
    %2056 = vmatpush1.msra.mxu0 0.0
    %2057 = vmatprep.subr.mxu0 0.0
    %2058 = vmatpush1.msra.mxu0 0.0
    %2059 = vmatprep.subr.mxu0 0.0
    %2060 = vmatpush1.msra.mxu0 0.0
    %2061 = vmatprep.subr.mxu0 0.0
    %2062 = vmatpush1.msra.mxu0 0.0
    %2063 = vmatprep.subr.mxu0 0.0
    %2064 = vmatpush1.msra.mxu0 0.0
    %2065 = vmatprep.subr.mxu0 0.0
    %2066 = vmatpush1.msra.mxu0 0.0
    %2067 = vmatprep.subr.mxu0 0.0
    %2068 = vmatpush1.msra.mxu0 0.0
    %2069 = vmatprep.subr.mxu0 0.0
    %2070 = vmatpush1.msra.mxu0 0.0
    %2071 = vmatprep.subr.mxu0 0.0
    %2072 = vmatpush1.msra.mxu0 0.0
    %2073 = vmatprep.subr.mxu0 0.0
    %2074 = vmatpush1.msra.mxu0 0.0
    %2075 = vmatprep.subr.mxu0 0.0
    %2076 = vmatpush1.msra.mxu0 0.0
    %2077 = vmatprep.subr.mxu0 0.0
    %2078 = vmatpush1.msra.mxu0 0.0
    %2079 = vmatprep.subr.mxu0 0.0
    %2080 = vmatpush1.msra.mxu0 0.0
    %2081 = vmatprep.subr.mxu0 0.0
    %2082 = vmatpush1.msra.mxu0 0.0
    %2083 = vmatprep.subr.mxu0 0.0
    %2084 = vmatpush1.msra.mxu0 0.0
    %2085 = vmatprep.subr.mxu0 0.0
    %2086 = vmatpush1.msra.mxu0 0.0
    %2087 = vmatprep.mubr.f32.mxu0 0.0
    %2088 = vmatmul.mubr.f32.gmra.mrb[0].mxu0 %v2021
    %v2089 = vpop.f32.mrb[0].mxu0
    %v2090 = vadd.f32 %v2017, %v2089
    %v2091 = vpop.f32.mrb[0].mxu0
    %v2092 = vadd.f32 %v2019, %v2091
    %2093 = vdwg.mxu0
    %v2094 = vld [vmem:[%s3 + $0x100] sm:$0xff]
    %v2095 = vld [vmem:[%s3 + $0x108] sm:$0xff]
    %v2096 = vld [vmem:[%s3 + $0x110] sm:$0xff]
    %v2097 = vld [vmem:[%s3 + $0x118] sm:$0xff]
    %v2098 = vld [vmem:[%s3 + $0x120] sm:$0xff]
    %v2099 = vld [vmem:[%s3 + $0x128] sm:$0xff]
    %v2100 = vld [vmem:[%s3 + $0x130] sm:$0xff]
    %v2101 = vld [vmem:[%s3 + $0x138] sm:$0xff]
    %v2102 = vld [vmem:[%s3 + $0x140] sm:$0xff]
    %v2103 = vld [vmem:[%s3 + $0x148] sm:$0xff]
    %v2104 = vld [vmem:[%s3 + $0x150] sm:$0xff]
    %v2105 = vld [vmem:[%s3 + $0x158] sm:$0xff]
    %v2106 = vld [vmem:[%s3 + $0x160] sm:$0xff]
    %v2107 = vld [vmem:[%s3 + $0x168] sm:$0xff]
    %v2108 = vld [vmem:[%s3 + $0x170] sm:$0xff]
    %v2109 = vld [vmem:[%s3 + $0x178] sm:$0xff]
    %v2110 = vrot.slane %v1912, 4
    %v2111 = vsel %vm478, %v2110, 0
    %2113 = vmatprep.subr.mxu0 %v2095
    %2114 = vmatpush1.msra.mxu0 %v2094
    %2115 = vmatprep.subr.mxu0 %v2097
    %2116 = vmatpush1.msra.mxu0 %v2096
    %2117 = vmatprep.subr.mxu0 %v2099
    %2118 = vmatpush1.msra.mxu0 %v2098
    %2119 = vmatprep.subr.mxu0 %v2101
    %2120 = vmatpush1.msra.mxu0 %v2100
    %2121 = vmatprep.subr.mxu0 %v2103
    %2122 = vmatpush1.msra.mxu0 %v2102
    %2123 = vmatprep.subr.mxu0 %v2105
    %2124 = vmatpush1.msra.mxu0 %v2104
    %2125 = vmatprep.subr.mxu0 %v2107
    %2126 = vmatpush1.msra.mxu0 %v2106
    %2127 = vmatprep.subr.mxu0 %v2109
    %2128 = vmatpush1.msra.mxu0 %v2108
    %2129 = vmatprep.subr.mxu0 0.0
    %2130 = vmatpush1.msra.mxu0 0.0
    %2131 = vmatprep.subr.mxu0 0.0
    %2132 = vmatpush1.msra.mxu0 0.0
    %2133 = vmatprep.subr.mxu0 0.0
    %2134 = vmatpush1.msra.mxu0 0.0
    %2135 = vmatprep.subr.mxu0 0.0
    %2136 = vmatpush1.msra.mxu0 0.0
    %2137 = vmatprep.subr.mxu0 0.0
    %2138 = vmatpush1.msra.mxu0 0.0
    %2139 = vmatprep.subr.mxu0 0.0
    %2140 = vmatpush1.msra.mxu0 0.0
    %2141 = vmatprep.subr.mxu0 0.0
    %2142 = vmatpush1.msra.mxu0 0.0
    %2143 = vmatprep.subr.mxu0 0.0
    %2144 = vmatpush1.msra.mxu0 0.0
    %2145 = vmatprep.subr.mxu0 0.0
    %2146 = vmatpush1.msra.mxu0 0.0
    %2147 = vmatprep.subr.mxu0 0.0
    %2148 = vmatpush1.msra.mxu0 0.0
    %2149 = vmatprep.subr.mxu0 0.0
    %2150 = vmatpush1.msra.mxu0 0.0
    %2151 = vmatprep.subr.mxu0 0.0
    %2152 = vmatpush1.msra.mxu0 0.0
    %2153 = vmatprep.subr.mxu0 0.0
    %2154 = vmatpush1.msra.mxu0 0.0
    %2155 = vmatprep.subr.mxu0 0.0
    %2156 = vmatpush1.msra.mxu0 0.0
    %2157 = vmatprep.subr.mxu0 0.0
    %2158 = vmatpush1.msra.mxu0 0.0
    %2159 = vmatprep.subr.mxu0 0.0
    %2160 = vmatpush1.msra.mxu0 0.0
    %2161 = vmatprep.subr.mxu0 0.0
    %2162 = vmatpush1.msra.mxu0 0.0
    %2163 = vmatprep.subr.mxu0 0.0
    %2164 = vmatpush1.msra.mxu0 0.0
    %2165 = vmatprep.subr.mxu0 0.0
    %2166 = vmatpush1.msra.mxu0 0.0
    %2167 = vmatprep.subr.mxu0 0.0
    %2168 = vmatpush1.msra.mxu0 0.0
    %2169 = vmatprep.subr.mxu0 0.0
    %2170 = vmatpush1.msra.mxu0 0.0
    %2171 = vmatprep.subr.mxu0 0.0
    %2172 = vmatpush1.msra.mxu0 0.0
    %2173 = vmatprep.subr.mxu0 0.0
    %2174 = vmatpush1.msra.mxu0 0.0
    %2175 = vmatprep.subr.mxu0 0.0
    %2176 = vmatpush1.msra.mxu0 0.0
    %2177 = vmatprep.mubr.f32.mxu0 0.0
    %2178 = vmatmul.mubr.f32.gmra.mrb[0].mxu0 %v2111
    %v2179 = vpop.f32.mrb[0].mxu0
    %v2180 = vadd.f32 0.0, %v2179
    %v2181 = vpop.f32.mrb[0].mxu0
    %v2182 = vadd.f32 0.0, %v2181
    %2183 = vdwg.mxu0
    %v2184 = vadd.f32 %v2090, %v2180
    %v2185 = vadd.f32 %v2092, %v2182
    %v2186 = vadd.f32 %v2184, %v721
    %v2187 = vadd.f32 %v2185, %v725
    %v2188 = vld [vmem:[#allocation5] sm:$0xf]
    %vm2189 = vcmp.gt.f32.partialorder %v2188, %v731
    %v2190 = vsel %vm2189, 1, 0
    %v2191 = vcvt.s32.f32 %v2190
    %v2192 = vmul.f32 %v2188, 0.5
    %v2195 = vcombine.low %v2186, %v2187
    %v2197 = vunpack.c.l.s4 1983009808
    %v2198 = vunpack.c.0.s8 %v2197
    %v2199 = vlaneseq
    %v2200 = vshrl.u32 %v2199, 7
    %v2201 = vsub.s32 %v2198, %v2200
    %v2202 = vrot.slane %v2195, %v2201
    %v2204 = vadd.f32 %v2192, %v2202
    %v2205 = vmul.f32 %v2191, %v731
    %v2206 = vsub.f32 %v2204, %v2205
    %vm2207 = vcmp.gt.f32.partialorder %v2206, %v731
    %v2208 = vsel %vm2207, 1, 0
    %v2209 = vcvt.s32.f32 %v2208
    %2210 = vst [vmem:[#allocation5] sm:$0xf] %v2206
    %s2211 = scalar_lea.vmem [#allocation10], 8
    %2212 = vst [vmem:[%s2211] sm:$0xf] %v2209
    %s2213 = scalar_lea.vmem [#allocation11], 8
    %2214 = vst [vmem:[%s2213] sm:$0xf] %v2206
    %v2217 = vunpack.c.l.s4 1983009808
    %v2218 = vunpack.c.0.s8 %v2217
    %v2219 = vlaneseq
    %v2220 = vshrl.u32 %v2219, 7
    %v2221 = vsub.s32 %v2218, %v2220
    %v2222 = vrot.slane %v2209, %v2221
    %v2223 = vcombine.high %v2222, %v2222
    %2226 = vmatprep.subr.mxu0 0.0
    %2227 = vmatpush1.msra.mxu0 %v70
    %2228 = vmatprep.subr.mxu0 0.0
    %2229 = vmatpush1.msra.mxu0 %v71
    %2230 = vmatprep.subr.mxu0 0.0
    %2231 = vmatpush1.msra.mxu0 %v72
    %2232 = vmatprep.subr.mxu0 0.0
    %2233 = vmatpush1.msra.mxu0 %v73
    %2234 = vmatprep.subr.mxu0 0.0
    %2235 = vmatpush1.msra.mxu0 %v74
    %2236 = vmatprep.subr.mxu0 0.0
    %2237 = vmatpush1.msra.mxu0 %v75
    %2238 = vmatprep.subr.mxu0 0.0
    %2239 = vmatpush1.msra.mxu0 %v76
    %2240 = vmatprep.subr.mxu0 0.0
    %2241 = vmatpush1.msra.mxu0 %v77
    %2242 = vmatprep.subr.mxu0 0.0
    %2243 = vmatpush1.msra.mxu0 %v78
    %2244 = vmatprep.subr.mxu0 0.0
    %2245 = vmatpush1.msra.mxu0 %v79
    %2246 = vmatprep.subr.mxu0 0.0
    %2247 = vmatpush1.msra.mxu0 %v80
    %2248 = vmatprep.subr.mxu0 0.0
    %2249 = vmatpush1.msra.mxu0 %v81
    %2250 = vmatprep.subr.mxu0 0.0
    %2251 = vmatpush1.msra.mxu0 %v82
    %2252 = vmatprep.subr.mxu0 0.0
    %2253 = vmatpush1.msra.mxu0 %v83
    %2254 = vmatprep.subr.mxu0 0.0
    %2255 = vmatpush1.msra.mxu0 %v84
    %2256 = vmatprep.subr.mxu0 0.0
    %2257 = vmatpush1.msra.mxu0 %v85
    %2258 = vmatprep.subr.mxu0 0.0
    %2259 = vmatpush1.msra.mxu0 %v86
    %2260 = vmatprep.subr.mxu0 0.0
    %2261 = vmatpush1.msra.mxu0 %v87
    %2262 = vmatprep.subr.mxu0 0.0
    %2263 = vmatpush1.msra.mxu0 %v88
    %2264 = vmatprep.subr.mxu0 0.0
    %2265 = vmatpush1.msra.mxu0 %v89
    %2266 = vmatprep.subr.mxu0 0.0
    %2267 = vmatpush1.msra.mxu0 %v90
    %2268 = vmatprep.subr.mxu0 0.0
    %2269 = vmatpush1.msra.mxu0 %v91
    %2270 = vmatprep.subr.mxu0 0.0
    %2271 = vmatpush1.msra.mxu0 %v92
    %2272 = vmatprep.subr.mxu0 0.0
    %2273 = vmatpush1.msra.mxu0 %v93
    %2274 = vmatprep.subr.mxu0 0.0
    %2275 = vmatpush1.msra.mxu0 %v94
    %2276 = vmatprep.subr.mxu0 0.0
    %2277 = vmatpush1.msra.mxu0 %v95
    %2278 = vmatprep.subr.mxu0 0.0
    %2279 = vmatpush1.msra.mxu0 %v96
    %2280 = vmatprep.subr.mxu0 0.0
    %2281 = vmatpush1.msra.mxu0 %v97
    %2282 = vmatprep.subr.mxu0 0.0
    %2283 = vmatpush1.msra.mxu0 %v98
    %2284 = vmatprep.subr.mxu0 0.0
    %2285 = vmatpush1.msra.mxu0 %v99
    %2286 = vmatprep.subr.mxu0 0.0
    %2287 = vmatpush1.msra.mxu0 %v100
    %2288 = vmatprep.subr.mxu0 0.0
    %2289 = vmatpush1.msra.mxu0 %v101
    %2290 = vmatprep.mubr.f32.mxu0 %v2223
    %2291 = vmatmul.mubr.f32.gmra.mrb[0].mxu0 %v2222
    %v2292 = vpop.f32.mrb[0].mxu0
    %v2293 = vadd.f32 %v760, %v2292
    %v2294 = vpop.f32.mrb[0].mxu0
    %2295 = vdwg.mxu0
    %v2296 = vld [vmem:[#allocation6] sm:$0x3]
    %vm2297 = vcmp.gt.f32.partialorder %v2296, %v844
    %v2298 = vsel %vm2297, 1, 0
    %v2299 = vcvt.s32.f32 %v2298
    %v2300 = vmul.f32 %v2296, 0.5
    %v2301 = vadd.f32 %v2300, %v2293
    %v2302 = vmul.f32 %v2299, %v844
    %v2303 = vsub.f32 %v2301, %v2302
    %vm2304 = vcmp.gt.f32.partialorder %v2303, %v844
    %v2305 = vsel %vm2304, 1, 0
    %v2306 = vcvt.s32.f32 %v2305
    %2307 = vst [vmem:[#allocation6] sm:$0x3] %v2303
    %s2308 = scalar_lea.vmem %s10, 4
    %2309 = vst [vmem:[%s2308] sm:$0x3] %v2306
    %s2310 = scalar_lea.vmem %s11, 4
    %2311 = vst [vmem:[%s2310] sm:$0x3] %v2303
    %v2312 = vld [vmem:[#allocation2] sm:$0xff]
    %v2313 = vld [vmem:[#allocation2 + $0x8] sm:$0x3f]
    %s2314 = scalar_lea.vmem %s0, 48
    %v2315 = vld [vmem:[%s2314] sm:$0xff]
    %v2316 = vld [vmem:[%s2314 + $0x8] sm:$0x3f]
    %vm2317 = vcmp.gt.f32.partialorder %v2312, %v107
    %vm2318 = vcmp.gt.f32.partialorder %v2313, %v107
    %v2319 = vsel %vm2317, 1, 0
    %v2320 = vsel %vm2318, 1, 0
    %v2321 = vcvt.s32.f32 %v2319
    %v2322 = vcvt.s32.f32 %v2320
    %v2323 = vmul.f32 %v2312, 0.5
    %v2324 = vmul.f32 %v2313, 0.5
    %v2325 = vadd.f32 %v2323, %v2315
    %v2326 = vadd.f32 %v2324, %v2316
    %v2327 = vmul.f32 %v2321, %v107
    %v2328 = vmul.f32 %v2322, %v107
    %v2329 = vsub.f32 %v2325, %v2327
    %v2330 = vsub.f32 %v2326, %v2328
    %vm2331 = vcmp.gt.f32.partialorder %v2329, %v107
    %vm2332 = vcmp.gt.f32.partialorder %v2330, %v107
    %v2333 = vsel %vm2331, 1, 0
    %v2334 = vsel %vm2332, 1, 0
    %v2335 = vcvt.s32.f32 %v2333
    %v2336 = vcvt.s32.f32 %v2334
    %2337 = vst.msk [vmem:[#allocation2] sm:$0xff] %vm128, %v2329
    %2338 = vst.msk [vmem:[#allocation2 + $0x8] sm:$0x3f] %vm130, %v2330
    %2339 = vst.msk [vmem:[#allocation3 + $0x2] sm:$0xff] %vm128, %v2335
    %2340 = vst.msk [vmem:[#allocation3 + $0xa] sm:$0x3f] %vm130, %v2336
    %v2341 = vld [vmem:[#allocation3] sm:$0xff]
    %v2342 = vld [vmem:[#allocation3 + $0x8] sm:$0x3f]
    %v2343 = vld [vmem:[%s1] sm:$0xff]
    %v2344 = vld [vmem:[%s1 + $0x8] sm:$0xff]
    %v2345 = vld [vmem:[%s1 + $0x10] sm:$0xff]
    %v2346 = vld [vmem:[%s1 + $0x18] sm:$0xff]
    %v2347 = vld [vmem:[#allocation3 + $0x2] sm:$0xff]
    %v2348 = vld [vmem:[#allocation3 + $0xa] sm:$0x3f]
    %v2349 = vld [vmem:[%s1 + $0x20] sm:$0xff]
    %v2350 = vld [vmem:[%s1 + $0x28] sm:$0xff]
    %v2351 = vld [vmem:[%s1 + $0x30] sm:$0xff]
    %v2352 = vld [vmem:[%s1 + $0x38] sm:$0xff]
    %v2354 = vsel %vm128, %v2347, 0
    %v2357 = vsel %vm128, %v2348, 0
    %2359 = vmatprep.subr.mxu0 0.0
    %2360 = vmatpush1.msra.mxu0 %v2349
    %2361 = vmatprep.subr.mxu0 0.0
    %2362 = vmatpush1.msra.mxu0 %v2350
    %2363 = vmatprep.subr.mxu0 0.0
    %2364 = vmatpush1.msra.mxu0 %v2351
    %2365 = vmatprep.subr.mxu0 0.0
    %2366 = vmatpush1.msra.mxu0 %v2352
    %2367 = vmatprep.subr.mxu0 0.0
    %2368 = vmatpush1.msra.mxu0 0.0
    %2369 = vmatprep.subr.mxu0 0.0
    %2370 = vmatpush1.msra.mxu0 0.0
    %2371 = vmatprep.subr.mxu0 0.0
    %2372 = vmatpush1.msra.mxu0 0.0
    %2373 = vmatprep.subr.mxu0 0.0
    %2374 = vmatpush1.msra.mxu0 0.0
    %2375 = vmatprep.subr.mxu0 0.0
    %2376 = vmatpush1.msra.mxu0 0.0
    %2377 = vmatprep.subr.mxu0 0.0
    %2378 = vmatpush1.msra.mxu0 0.0
    %2379 = vmatprep.subr.mxu0 0.0
    %2380 = vmatpush1.msra.mxu0 0.0
    %2381 = vmatprep.subr.mxu0 0.0
    %2382 = vmatpush1.msra.mxu0 0.0
    %2383 = vmatprep.subr.mxu0 0.0
    %2384 = vmatpush1.msra.mxu0 0.0
    %2385 = vmatprep.subr.mxu0 0.0
    %2386 = vmatpush1.msra.mxu0 0.0
    %2387 = vmatprep.subr.mxu0 0.0
    %2388 = vmatpush1.msra.mxu0 0.0
    %2389 = vmatprep.subr.mxu0 0.0
    %2390 = vmatpush1.msra.mxu0 0.0
    %2391 = vmatprep.subr.mxu0 0.0
    %2392 = vmatpush1.msra.mxu0 0.0
    %2393 = vmatprep.subr.mxu0 0.0
    %2394 = vmatpush1.msra.mxu0 0.0
    %2395 = vmatprep.subr.mxu0 0.0
    %2396 = vmatpush1.msra.mxu0 0.0
    %2397 = vmatprep.subr.mxu0 0.0
    %2398 = vmatpush1.msra.mxu0 0.0
    %2399 = vmatprep.subr.mxu0 0.0
    %2400 = vmatpush1.msra.mxu0 0.0
    %2401 = vmatprep.subr.mxu0 0.0
    %2402 = vmatpush1.msra.mxu0 0.0
    %2403 = vmatprep.subr.mxu0 0.0
    %2404 = vmatpush1.msra.mxu0 0.0
    %2405 = vmatprep.subr.mxu0 0.0
    %2406 = vmatpush1.msra.mxu0 0.0
    %2407 = vmatprep.subr.mxu0 0.0
    %2408 = vmatpush1.msra.mxu0 0.0
    %2409 = vmatprep.subr.mxu0 0.0
    %2410 = vmatpush1.msra.mxu0 0.0
    %2411 = vmatprep.subr.mxu0 0.0
    %2412 = vmatpush1.msra.mxu0 0.0
    %2413 = vmatprep.subr.mxu0 0.0
    %2414 = vmatpush1.msra.mxu0 0.0
    %2415 = vmatprep.subr.mxu0 0.0
    %2416 = vmatpush1.msra.mxu0 0.0
    %2417 = vmatprep.subr.mxu0 0.0
    %2418 = vmatpush1.msra.mxu0 0.0
    %2419 = vmatprep.subr.mxu0 0.0
    %2420 = vmatpush1.msra.mxu0 0.0
    %2421 = vmatprep.subr.mxu0 0.0
    %2422 = vmatpush1.msra.mxu0 0.0
    %2423 = vmatprep.mubr.f32.mxu0 0.0
    %2424 = vmatmul.mubr.f32.gmra.mrb[0].mxu0 %v2354
    %v2425 = vpop.f32.mrb[0].mxu0
    %v2426 = vadd.f32 0.0, %v2425
    %v2427 = vpop.f32.mrb[0].mxu0
    %2428 = vmatprep.mubr.f32.mxu0 0.0
    %2429 = vmatmul.mubr.f32.gmra.mrb[0].mxu0 %v2357
    %v2430 = vpop.f32.mrb[0].mxu0
    %v2431 = vadd.f32 0.0, %v2430
    %v2432 = vpop.f32.mrb[0].mxu0
    %2433 = vdwg.mxu0
    %v2435 = vsel %vm128, %v2341, 0
    %v2438 = vsel %vm128, %v2342, 0
    %2440 = vmatprep.subr.mxu0 0.0
    %2441 = vmatpush1.msra.mxu0 %v2343
    %2442 = vmatprep.subr.mxu0 0.0
    %2443 = vmatpush1.msra.mxu0 %v2344
    %2444 = vmatprep.subr.mxu0 0.0
    %2445 = vmatpush1.msra.mxu0 %v2345
    %2446 = vmatprep.subr.mxu0 0.0
    %2447 = vmatpush1.msra.mxu0 %v2346
    %2448 = vmatprep.subr.mxu0 0.0
    %2449 = vmatpush1.msra.mxu0 0.0
    %2450 = vmatprep.subr.mxu0 0.0
    %2451 = vmatpush1.msra.mxu0 0.0
    %2452 = vmatprep.subr.mxu0 0.0
    %2453 = vmatpush1.msra.mxu0 0.0
    %2454 = vmatprep.subr.mxu0 0.0
    %2455 = vmatpush1.msra.mxu0 0.0
    %2456 = vmatprep.subr.mxu0 0.0
    %2457 = vmatpush1.msra.mxu0 0.0
    %2458 = vmatprep.subr.mxu0 0.0
    %2459 = vmatpush1.msra.mxu0 0.0
    %2460 = vmatprep.subr.mxu0 0.0
    %2461 = vmatpush1.msra.mxu0 0.0
    %2462 = vmatprep.subr.mxu0 0.0
    %2463 = vmatpush1.msra.mxu0 0.0
    %2464 = vmatprep.subr.mxu0 0.0
    %2465 = vmatpush1.msra.mxu0 0.0
    %2466 = vmatprep.subr.mxu0 0.0
    %2467 = vmatpush1.msra.mxu0 0.0
    %2468 = vmatprep.subr.mxu0 0.0
    %2469 = vmatpush1.msra.mxu0 0.0
    %2470 = vmatprep.subr.mxu0 0.0
    %2471 = vmatpush1.msra.mxu0 0.0
    %2472 = vmatprep.subr.mxu0 0.0
    %2473 = vmatpush1.msra.mxu0 0.0
    %2474 = vmatprep.subr.mxu0 0.0
    %2475 = vmatpush1.msra.mxu0 0.0
    %2476 = vmatprep.subr.mxu0 0.0
    %2477 = vmatpush1.msra.mxu0 0.0
    %2478 = vmatprep.subr.mxu0 0.0
    %2479 = vmatpush1.msra.mxu0 0.0
    %2480 = vmatprep.subr.mxu0 0.0
    %2481 = vmatpush1.msra.mxu0 0.0
    %2482 = vmatprep.subr.mxu0 0.0
    %2483 = vmatpush1.msra.mxu0 0.0
    %2484 = vmatprep.subr.mxu0 0.0
    %2485 = vmatpush1.msra.mxu0 0.0
    %2486 = vmatprep.subr.mxu0 0.0
    %2487 = vmatpush1.msra.mxu0 0.0
    %2488 = vmatprep.subr.mxu0 0.0
    %2489 = vmatpush1.msra.mxu0 0.0
    %2490 = vmatprep.subr.mxu0 0.0
    %2491 = vmatpush1.msra.mxu0 0.0
    %2492 = vmatprep.subr.mxu0 0.0
    %2493 = vmatpush1.msra.mxu0 0.0
    %2494 = vmatprep.subr.mxu0 0.0
    %2495 = vmatpush1.msra.mxu0 0.0
    %2496 = vmatprep.subr.mxu0 0.0
    %2497 = vmatpush1.msra.mxu0 0.0
    %2498 = vmatprep.subr.mxu0 0.0
    %2499 = vmatpush1.msra.mxu0 0.0
    %2500 = vmatprep.subr.mxu0 0.0
    %2501 = vmatpush1.msra.mxu0 0.0
    %2502 = vmatprep.subr.mxu0 0.0
    %2503 = vmatpush1.msra.mxu0 0.0
    %2504 = vmatprep.mubr.f32.mxu0 0.0
    %2505 = vmatmul.mubr.f32.gmra.mrb[0].mxu0 %v2435
    %v2506 = vpop.f32.mrb[0].mxu0
    %v2507 = vadd.f32 %v2426, %v2506
    %v2508 = vpop.f32.mrb[0].mxu0
    %2509 = vmatprep.mubr.f32.mxu0 0.0
    %2510 = vmatmul.mubr.f32.gmra.mrb[0].mxu0 %v2438
    %v2511 = vpop.f32.mrb[0].mxu0
    %v2512 = vadd.f32 %v2431, %v2511
    %v2513 = vpop.f32.mrb[0].mxu0
    %2514 = vdwg.mxu0
    %v2515 = vld [vmem:[#allocation3 + $0x4] sm:$0xff]
    %v2516 = vld [vmem:[#allocation3 + $0xc] sm:$0x3f]
    %v2517 = vld [vmem:[%s1 + $0x40] sm:$0xff]
    %v2518 = vld [vmem:[%s1 + $0x48] sm:$0xff]
    %v2519 = vld [vmem:[%s1 + $0x50] sm:$0xff]
    %v2520 = vld [vmem:[%s1 + $0x58] sm:$0xff]
    %v2522 = vsel %vm128, %v2515, 0
    %v2525 = vsel %vm128, %v2516, 0
    %2527 = vmatprep.subr.mxu0 0.0
    %2528 = vmatpush1.msra.mxu0 %v2517
    %2529 = vmatprep.subr.mxu0 0.0
    %2530 = vmatpush1.msra.mxu0 %v2518
    %2531 = vmatprep.subr.mxu0 0.0
    %2532 = vmatpush1.msra.mxu0 %v2519
    %2533 = vmatprep.subr.mxu0 0.0
    %2534 = vmatpush1.msra.mxu0 %v2520
    %2535 = vmatprep.subr.mxu0 0.0
    %2536 = vmatpush1.msra.mxu0 0.0
    %2537 = vmatprep.subr.mxu0 0.0
    %2538 = vmatpush1.msra.mxu0 0.0
    %2539 = vmatprep.subr.mxu0 0.0
    %2540 = vmatpush1.msra.mxu0 0.0
    %2541 = vmatprep.subr.mxu0 0.0
    %2542 = vmatpush1.msra.mxu0 0.0
    %2543 = vmatprep.subr.mxu0 0.0
    %2544 = vmatpush1.msra.mxu0 0.0
    %2545 = vmatprep.subr.mxu0 0.0
    %2546 = vmatpush1.msra.mxu0 0.0
    %2547 = vmatprep.subr.mxu0 0.0
    %2548 = vmatpush1.msra.mxu0 0.0
    %2549 = vmatprep.subr.mxu0 0.0
    %2550 = vmatpush1.msra.mxu0 0.0
    %2551 = vmatprep.subr.mxu0 0.0
    %2552 = vmatpush1.msra.mxu0 0.0
    %2553 = vmatprep.subr.mxu0 0.0
    %2554 = vmatpush1.msra.mxu0 0.0
    %2555 = vmatprep.subr.mxu0 0.0
    %2556 = vmatpush1.msra.mxu0 0.0
    %2557 = vmatprep.subr.mxu0 0.0
    %2558 = vmatpush1.msra.mxu0 0.0
    %2559 = vmatprep.subr.mxu0 0.0
    %2560 = vmatpush1.msra.mxu0 0.0
    %2561 = vmatprep.subr.mxu0 0.0
    %2562 = vmatpush1.msra.mxu0 0.0
    %2563 = vmatprep.subr.mxu0 0.0
    %2564 = vmatpush1.msra.mxu0 0.0
    %2565 = vmatprep.subr.mxu0 0.0
    %2566 = vmatpush1.msra.mxu0 0.0
    %2567 = vmatprep.subr.mxu0 0.0
    %2568 = vmatpush1.msra.mxu0 0.0
    %2569 = vmatprep.subr.mxu0 0.0
    %2570 = vmatpush1.msra.mxu0 0.0
    %2571 = vmatprep.subr.mxu0 0.0
    %2572 = vmatpush1.msra.mxu0 0.0
    %2573 = vmatprep.subr.mxu0 0.0
    %2574 = vmatpush1.msra.mxu0 0.0
    %2575 = vmatprep.subr.mxu0 0.0
    %2576 = vmatpush1.msra.mxu0 0.0
    %2577 = vmatprep.subr.mxu0 0.0
    %2578 = vmatpush1.msra.mxu0 0.0
    %2579 = vmatprep.subr.mxu0 0.0
    %2580 = vmatpush1.msra.mxu0 0.0
    %2581 = vmatprep.subr.mxu0 0.0
    %2582 = vmatpush1.msra.mxu0 0.0
    %2583 = vmatprep.subr.mxu0 0.0
    %2584 = vmatpush1.msra.mxu0 0.0
    %2585 = vmatprep.subr.mxu0 0.0
    %2586 = vmatpush1.msra.mxu0 0.0
    %2587 = vmatprep.subr.mxu0 0.0
    %2588 = vmatpush1.msra.mxu0 0.0
    %2589 = vmatprep.subr.mxu0 0.0
    %2590 = vmatpush1.msra.mxu0 0.0
    %2591 = vmatprep.mubr.f32.mxu0 0.0
    %2592 = vmatmul.mubr.f32.gmra.mrb[0].mxu0 %v2522
    %v2593 = vpop.f32.mrb[0].mxu0
    %v2594 = vadd.f32 0.0, %v2593
    %v2595 = vpop.f32.mrb[0].mxu0
    %2596 = vmatprep.mubr.f32.mxu0 0.0
    %2597 = vmatmul.mubr.f32.gmra.mrb[0].mxu0 %v2525
    %v2598 = vpop.f32.mrb[0].mxu0
    %v2599 = vadd.f32 0.0, %v2598
    %v2600 = vpop.f32.mrb[0].mxu0
    %2601 = vdwg.mxu0
    %v2602 = vadd.f32 %v2507, %v2594
    %v2603 = vadd.f32 %v2512, %v2599
    %v2604 = vadd.f32 %v2602, %v401
    %v2605 = vadd.f32 %v2603, %v401
    %v2607 = vrot.slane %v2604, 2
    %v2609 = vmax.f32 %v2604, %v2607
    %v2610 = vrot.slane %v2604, 4
    %v2612 = vmax.f32 %v2609, %v2610
    %v2614 = vrot.slane %v2605, 4
    %v2616 = vmax.f32 %v2609, %v2614
    %v2617 = vrot.slane %v2605, 2
    %v2619 = vmax.f32 %v2605, %v2617
    %v2620 = vmax.f32 %v2619, %v2614
    %v2622 = vrot.slane %v2616, 2
    %v2625 = vrot.slane %v2620, 4
    %v2627 = vsel %vm426, %v2612, %v2622
    %v2628 = vsel %vm428, %v2627, %v2625
    %v2629 = vld [vmem:[#allocation4] sm:$0x3f]
    %vm2630 = vcmp.gt.f32.partialorder %v2629, %v431
    %v2631 = vsel %vm2630, 1, 0
    %v2632 = vcvt.s32.f32 %v2631
    %v2633 = vmul.f32 %v2629, 0.5
    %v2634 = vadd.f32 %v2633, %v2628
    %v2635 = vmul.f32 %v2632, %v431
    %v2636 = vsub.f32 %v2634, %v2635
    %vm2637 = vcmp.gt.f32.partialorder %v2636, %v431
    %v2638 = vsel %vm2637, 1, 0
    %v2639 = vcvt.s32.f32 %v2638
    %2640 = vst.msk [vmem:[#allocation4] sm:$0x3f] %vm442, %v2636
    %v2641 = vld [vmem:[%s3] sm:$0xff]
    %v2642 = vld [vmem:[%s3 + $0x8] sm:$0xff]
    %v2643 = vld [vmem:[%s3 + $0x10] sm:$0xff]
    %v2644 = vld [vmem:[%s3 + $0x18] sm:$0xff]
    %v2645 = vld [vmem:[%s3 + $0x20] sm:$0xff]
    %v2646 = vld [vmem:[%s3 + $0x28] sm:$0xff]
    %v2647 = vld [vmem:[%s3 + $0x30] sm:$0xff]
    %v2648 = vld [vmem:[%s3 + $0x38] sm:$0xff]
    %v2649 = vld [vmem:[%s3 + $0x40] sm:$0xff]
    %v2650 = vld [vmem:[%s3 + $0x48] sm:$0xff]
    %v2651 = vld [vmem:[%s3 + $0x50] sm:$0xff]
    %v2652 = vld [vmem:[%s3 + $0x58] sm:$0xff]
    %v2653 = vld [vmem:[%s3 + $0x60] sm:$0xff]
    %v2654 = vld [vmem:[%s3 + $0x68] sm:$0xff]
    %v2655 = vld [vmem:[%s3 + $0x70] sm:$0xff]
    %v2656 = vld [vmem:[%s3 + $0x78] sm:$0xff]
    %v2657 = vld [vmem:[%s3 + $0x80] sm:$0xff]
    %v2658 = vld [vmem:[%s3 + $0x88] sm:$0xff]
    %v2659 = vld [vmem:[%s3 + $0x90] sm:$0xff]
    %v2660 = vld [vmem:[%s3 + $0x98] sm:$0xff]
    %v2661 = vld [vmem:[%s3 + $0xa0] sm:$0xff]
    %v2662 = vld [vmem:[%s3 + $0xa8] sm:$0xff]
    %v2663 = vld [vmem:[%s3 + $0xb0] sm:$0xff]
    %v2664 = vld [vmem:[%s3 + $0xb8] sm:$0xff]
    %v2665 = vld [vmem:[%s3 + $0xc0] sm:$0xff]
    %v2666 = vld [vmem:[%s3 + $0xc8] sm:$0xff]
    %v2667 = vld [vmem:[%s3 + $0xd0] sm:$0xff]
    %v2668 = vld [vmem:[%s3 + $0xd8] sm:$0xff]
    %v2669 = vld [vmem:[%s3 + $0xe0] sm:$0xff]
    %v2670 = vld [vmem:[%s3 + $0xe8] sm:$0xff]
    %v2671 = vld [vmem:[%s3 + $0xf0] sm:$0xff]
    %v2672 = vld [vmem:[%s3 + $0xf8] sm:$0xff]
    %v2674 = vrot.slane %v2639, 2
    %v2675 = vsel %vm478, %v2674, 0
    %2677 = vmatprep.subr.mxu0 %v2658
    %2678 = vmatpush1.msra.mxu0 %v2657
    %2679 = vmatprep.subr.mxu0 %v2660
    %2680 = vmatpush1.msra.mxu0 %v2659
    %2681 = vmatprep.subr.mxu0 %v2662
    %2682 = vmatpush1.msra.mxu0 %v2661
    %2683 = vmatprep.subr.mxu0 %v2664
    %2684 = vmatpush1.msra.mxu0 %v2663
    %2685 = vmatprep.subr.mxu0 %v2666
    %2686 = vmatpush1.msra.mxu0 %v2665
    %2687 = vmatprep.subr.mxu0 %v2668
    %2688 = vmatpush1.msra.mxu0 %v2667
    %2689 = vmatprep.subr.mxu0 %v2670
    %2690 = vmatpush1.msra.mxu0 %v2669
    %2691 = vmatprep.subr.mxu0 %v2672
    %2692 = vmatpush1.msra.mxu0 %v2671
    %2693 = vmatprep.subr.mxu0 0.0
    %2694 = vmatpush1.msra.mxu0 0.0
    %2695 = vmatprep.subr.mxu0 0.0
    %2696 = vmatpush1.msra.mxu0 0.0
    %2697 = vmatprep.subr.mxu0 0.0
    %2698 = vmatpush1.msra.mxu0 0.0
    %2699 = vmatprep.subr.mxu0 0.0
    %2700 = vmatpush1.msra.mxu0 0.0
    %2701 = vmatprep.subr.mxu0 0.0
    %2702 = vmatpush1.msra.mxu0 0.0
    %2703 = vmatprep.subr.mxu0 0.0
    %2704 = vmatpush1.msra.mxu0 0.0
    %2705 = vmatprep.subr.mxu0 0.0
    %2706 = vmatpush1.msra.mxu0 0.0
    %2707 = vmatprep.subr.mxu0 0.0
    %2708 = vmatpush1.msra.mxu0 0.0
    %2709 = vmatprep.subr.mxu0 0.0
    %2710 = vmatpush1.msra.mxu0 0.0
    %2711 = vmatprep.subr.mxu0 0.0
    %2712 = vmatpush1.msra.mxu0 0.0
    %2713 = vmatprep.subr.mxu0 0.0
    %2714 = vmatpush1.msra.mxu0 0.0
    %2715 = vmatprep.subr.mxu0 0.0
    %2716 = vmatpush1.msra.mxu0 0.0
    %2717 = vmatprep.subr.mxu0 0.0
    %2718 = vmatpush1.msra.mxu0 0.0
    %2719 = vmatprep.subr.mxu0 0.0
    %2720 = vmatpush1.msra.mxu0 0.0
    %2721 = vmatprep.subr.mxu0 0.0
    %2722 = vmatpush1.msra.mxu0 0.0
    %2723 = vmatprep.subr.mxu0 0.0
    %2724 = vmatpush1.msra.mxu0 0.0
    %2725 = vmatprep.subr.mxu0 0.0
    %2726 = vmatpush1.msra.mxu0 0.0
    %2727 = vmatprep.subr.mxu0 0.0
    %2728 = vmatpush1.msra.mxu0 0.0
    %2729 = vmatprep.subr.mxu0 0.0
    %2730 = vmatpush1.msra.mxu0 0.0
    %2731 = vmatprep.subr.mxu0 0.0
    %2732 = vmatpush1.msra.mxu0 0.0
    %2733 = vmatprep.subr.mxu0 0.0
    %2734 = vmatpush1.msra.mxu0 0.0
    %2735 = vmatprep.subr.mxu0 0.0
    %2736 = vmatpush1.msra.mxu0 0.0
    %2737 = vmatprep.subr.mxu0 0.0
    %2738 = vmatpush1.msra.mxu0 0.0
    %2739 = vmatprep.subr.mxu0 0.0
    %2740 = vmatpush1.msra.mxu0 0.0
    %2741 = vmatprep.mubr.f32.mxu0 0.0
    %2742 = vmatmul.mubr.f32.gmra.mrb[0].mxu0 %v2675
    %v2743 = vpop.f32.mrb[0].mxu0
    %v2744 = vadd.f32 0.0, %v2743
    %v2745 = vpop.f32.mrb[0].mxu0
    %v2746 = vadd.f32 0.0, %v2745
    %2747 = vdwg.mxu0
    %v2748 = vsel %vm478, %v2639, 0
    %2750 = vmatprep.subr.mxu0 %v2642
    %2751 = vmatpush1.msra.mxu0 %v2641
    %2752 = vmatprep.subr.mxu0 %v2644
    %2753 = vmatpush1.msra.mxu0 %v2643
    %2754 = vmatprep.subr.mxu0 %v2646
    %2755 = vmatpush1.msra.mxu0 %v2645
    %2756 = vmatprep.subr.mxu0 %v2648
    %2757 = vmatpush1.msra.mxu0 %v2647
    %2758 = vmatprep.subr.mxu0 %v2650
    %2759 = vmatpush1.msra.mxu0 %v2649
    %2760 = vmatprep.subr.mxu0 %v2652
    %2761 = vmatpush1.msra.mxu0 %v2651
    %2762 = vmatprep.subr.mxu0 %v2654
    %2763 = vmatpush1.msra.mxu0 %v2653
    %2764 = vmatprep.subr.mxu0 %v2656
    %2765 = vmatpush1.msra.mxu0 %v2655
    %2766 = vmatprep.subr.mxu0 0.0
    %2767 = vmatpush1.msra.mxu0 0.0
    %2768 = vmatprep.subr.mxu0 0.0
    %2769 = vmatpush1.msra.mxu0 0.0
    %2770 = vmatprep.subr.mxu0 0.0
    %2771 = vmatpush1.msra.mxu0 0.0
    %2772 = vmatprep.subr.mxu0 0.0
    %2773 = vmatpush1.msra.mxu0 0.0
    %2774 = vmatprep.subr.mxu0 0.0
    %2775 = vmatpush1.msra.mxu0 0.0
    %2776 = vmatprep.subr.mxu0 0.0
    %2777 = vmatpush1.msra.mxu0 0.0
    %2778 = vmatprep.subr.mxu0 0.0
    %2779 = vmatpush1.msra.mxu0 0.0
    %2780 = vmatprep.subr.mxu0 0.0
    %2781 = vmatpush1.msra.mxu0 0.0
    %2782 = vmatprep.subr.mxu0 0.0
    %2783 = vmatpush1.msra.mxu0 0.0
    %2784 = vmatprep.subr.mxu0 0.0
    %2785 = vmatpush1.msra.mxu0 0.0
    %2786 = vmatprep.subr.mxu0 0.0
    %2787 = vmatpush1.msra.mxu0 0.0
    %2788 = vmatprep.subr.mxu0 0.0
    %2789 = vmatpush1.msra.mxu0 0.0
    %2790 = vmatprep.subr.mxu0 0.0
    %2791 = vmatpush1.msra.mxu0 0.0
    %2792 = vmatprep.subr.mxu0 0.0
    %2793 = vmatpush1.msra.mxu0 0.0
    %2794 = vmatprep.subr.mxu0 0.0
    %2795 = vmatpush1.msra.mxu0 0.0
    %2796 = vmatprep.subr.mxu0 0.0
    %2797 = vmatpush1.msra.mxu0 0.0
    %2798 = vmatprep.subr.mxu0 0.0
    %2799 = vmatpush1.msra.mxu0 0.0
    %2800 = vmatprep.subr.mxu0 0.0
    %2801 = vmatpush1.msra.mxu0 0.0
    %2802 = vmatprep.subr.mxu0 0.0
    %2803 = vmatpush1.msra.mxu0 0.0
    %2804 = vmatprep.subr.mxu0 0.0
    %2805 = vmatpush1.msra.mxu0 0.0
    %2806 = vmatprep.subr.mxu0 0.0
    %2807 = vmatpush1.msra.mxu0 0.0
    %2808 = vmatprep.subr.mxu0 0.0
    %2809 = vmatpush1.msra.mxu0 0.0
    %2810 = vmatprep.subr.mxu0 0.0
    %2811 = vmatpush1.msra.mxu0 0.0
    %2812 = vmatprep.subr.mxu0 0.0
    %2813 = vmatpush1.msra.mxu0 0.0
    %2814 = vmatprep.mubr.f32.mxu0 0.0
    %2815 = vmatmul.mubr.f32.gmra.mrb[0].mxu0 %v2748
    %v2816 = vpop.f32.mrb[0].mxu0
    %v2817 = vadd.f32 %v2744, %v2816
    %v2818 = vpop.f32.mrb[0].mxu0
    %v2819 = vadd.f32 %v2746, %v2818
    %2820 = vdwg.mxu0
    %v2821 = vld [vmem:[%s3 + $0x100] sm:$0xff]
    %v2822 = vld [vmem:[%s3 + $0x108] sm:$0xff]
    %v2823 = vld [vmem:[%s3 + $0x110] sm:$0xff]
    %v2824 = vld [vmem:[%s3 + $0x118] sm:$0xff]
    %v2825 = vld [vmem:[%s3 + $0x120] sm:$0xff]
    %v2826 = vld [vmem:[%s3 + $0x128] sm:$0xff]
    %v2827 = vld [vmem:[%s3 + $0x130] sm:$0xff]
    %v2828 = vld [vmem:[%s3 + $0x138] sm:$0xff]
    %v2829 = vld [vmem:[%s3 + $0x140] sm:$0xff]
    %v2830 = vld [vmem:[%s3 + $0x148] sm:$0xff]
    %v2831 = vld [vmem:[%s3 + $0x150] sm:$0xff]
    %v2832 = vld [vmem:[%s3 + $0x158] sm:$0xff]
    %v2833 = vld [vmem:[%s3 + $0x160] sm:$0xff]
    %v2834 = vld [vmem:[%s3 + $0x168] sm:$0xff]
    %v2835 = vld [vmem:[%s3 + $0x170] sm:$0xff]
    %v2836 = vld [vmem:[%s3 + $0x178] sm:$0xff]
    %v2837 = vrot.slane %v2639, 4
    %v2838 = vsel %vm478, %v2837, 0
    %2840 = vmatprep.subr.mxu0 %v2822
    %2841 = vmatpush1.msra.mxu0 %v2821
    %2842 = vmatprep.subr.mxu0 %v2824
    %2843 = vmatpush1.msra.mxu0 %v2823
    %2844 = vmatprep.subr.mxu0 %v2826
    %2845 = vmatpush1.msra.mxu0 %v2825
    %2846 = vmatprep.subr.mxu0 %v2828
    %2847 = vmatpush1.msra.mxu0 %v2827
    %2848 = vmatprep.subr.mxu0 %v2830
    %2849 = vmatpush1.msra.mxu0 %v2829
    %2850 = vmatprep.subr.mxu0 %v2832
    %2851 = vmatpush1.msra.mxu0 %v2831
    %2852 = vmatprep.subr.mxu0 %v2834
    %2853 = vmatpush1.msra.mxu0 %v2833
    %2854 = vmatprep.subr.mxu0 %v2836
    %2855 = vmatpush1.msra.mxu0 %v2835
    %2856 = vmatprep.subr.mxu0 0.0
    %2857 = vmatpush1.msra.mxu0 0.0
    %2858 = vmatprep.subr.mxu0 0.0
    %2859 = vmatpush1.msra.mxu0 0.0
    %2860 = vmatprep.subr.mxu0 0.0
    %2861 = vmatpush1.msra.mxu0 0.0
    %2862 = vmatprep.subr.mxu0 0.0
    %2863 = vmatpush1.msra.mxu0 0.0
    %2864 = vmatprep.subr.mxu0 0.0
    %2865 = vmatpush1.msra.mxu0 0.0
    %2866 = vmatprep.subr.mxu0 0.0
    %2867 = vmatpush1.msra.mxu0 0.0
    %2868 = vmatprep.subr.mxu0 0.0
    %2869 = vmatpush1.msra.mxu0 0.0
    %2870 = vmatprep.subr.mxu0 0.0
    %2871 = vmatpush1.msra.mxu0 0.0
    %2872 = vmatprep.subr.mxu0 0.0
    %2873 = vmatpush1.msra.mxu0 0.0
    %2874 = vmatprep.subr.mxu0 0.0
    %2875 = vmatpush1.msra.mxu0 0.0
    %2876 = vmatprep.subr.mxu0 0.0
    %2877 = vmatpush1.msra.mxu0 0.0
    %2878 = vmatprep.subr.mxu0 0.0
    %2879 = vmatpush1.msra.mxu0 0.0
    %2880 = vmatprep.subr.mxu0 0.0
    %2881 = vmatpush1.msra.mxu0 0.0
    %2882 = vmatprep.subr.mxu0 0.0
    %2883 = vmatpush1.msra.mxu0 0.0
    %2884 = vmatprep.subr.mxu0 0.0
    %2885 = vmatpush1.msra.mxu0 0.0
    %2886 = vmatprep.subr.mxu0 0.0
    %2887 = vmatpush1.msra.mxu0 0.0
    %2888 = vmatprep.subr.mxu0 0.0
    %2889 = vmatpush1.msra.mxu0 0.0
    %2890 = vmatprep.subr.mxu0 0.0
    %2891 = vmatpush1.msra.mxu0 0.0
    %2892 = vmatprep.subr.mxu0 0.0
    %2893 = vmatpush1.msra.mxu0 0.0
    %2894 = vmatprep.subr.mxu0 0.0
    %2895 = vmatpush1.msra.mxu0 0.0
    %2896 = vmatprep.subr.mxu0 0.0
    %2897 = vmatpush1.msra.mxu0 0.0
    %2898 = vmatprep.subr.mxu0 0.0
    %2899 = vmatpush1.msra.mxu0 0.0
    %2900 = vmatprep.subr.mxu0 0.0
    %2901 = vmatpush1.msra.mxu0 0.0
    %2902 = vmatprep.subr.mxu0 0.0
    %2903 = vmatpush1.msra.mxu0 0.0
    %2904 = vmatprep.mubr.f32.mxu0 0.0
    %2905 = vmatmul.mubr.f32.gmra.mrb[0].mxu0 %v2838
    %v2906 = vpop.f32.mrb[0].mxu0
    %v2907 = vadd.f32 0.0, %v2906
    %v2908 = vpop.f32.mrb[0].mxu0
    %v2909 = vadd.f32 0.0, %v2908
    %2910 = vdwg.mxu0
    %v2911 = vadd.f32 %v2817, %v2907
    %v2912 = vadd.f32 %v2819, %v2909
    %v2913 = vadd.f32 %v2911, %v721
    %v2914 = vadd.f32 %v2912, %v725
    %v2915 = vld [vmem:[#allocation5] sm:$0xf]
    %vm2916 = vcmp.gt.f32.partialorder %v2915, %v731
    %v2917 = vsel %vm2916, 1, 0
    %v2918 = vcvt.s32.f32 %v2917
    %v2919 = vmul.f32 %v2915, 0.5
    %v2922 = vcombine.low %v2913, %v2914
    %v2924 = vunpack.c.l.s4 1983009808
    %v2925 = vunpack.c.0.s8 %v2924
    %v2926 = vlaneseq
    %v2927 = vshrl.u32 %v2926, 7
    %v2928 = vsub.s32 %v2925, %v2927
    %v2929 = vrot.slane %v2922, %v2928
    %v2931 = vadd.f32 %v2919, %v2929
    %v2932 = vmul.f32 %v2918, %v731
    %v2933 = vsub.f32 %v2931, %v2932
    %vm2934 = vcmp.gt.f32.partialorder %v2933, %v731
    %v2935 = vsel %vm2934, 1, 0
    %v2936 = vcvt.s32.f32 %v2935
    %2937 = vst [vmem:[#allocation5] sm:$0xf] %v2933
    %s2938 = scalar_lea.vmem [#allocation10], 12
    %2939 = vst [vmem:[%s2938] sm:$0xf] %v2936
    %s2940 = scalar_lea.vmem [#allocation11], 12
    %2941 = vst [vmem:[%s2940] sm:$0xf] %v2933
    %v2944 = vunpack.c.l.s4 1983009808
    %v2945 = vunpack.c.0.s8 %v2944
    %v2946 = vlaneseq
    %v2947 = vshrl.u32 %v2946, 7
    %v2948 = vsub.s32 %v2945, %v2947
    %v2949 = vrot.slane %v2936, %v2948
    %v2950 = vcombine.high %v2949, %v2949
    %2953 = vmatprep.subr.mxu0 0.0
    %2954 = vmatpush1.msra.mxu0 %v70
    %2955 = vmatprep.subr.mxu0 0.0
    %2956 = vmatpush1.msra.mxu0 %v71
    %2957 = vmatprep.subr.mxu0 0.0
    %2958 = vmatpush1.msra.mxu0 %v72
    %2959 = vmatprep.subr.mxu0 0.0
    %2960 = vmatpush1.msra.mxu0 %v73
    %2961 = vmatprep.subr.mxu0 0.0
    %2962 = vmatpush1.msra.mxu0 %v74
    %2963 = vmatprep.subr.mxu0 0.0
    %2964 = vmatpush1.msra.mxu0 %v75
    %2965 = vmatprep.subr.mxu0 0.0
    %2966 = vmatpush1.msra.mxu0 %v76
    %2967 = vmatprep.subr.mxu0 0.0
    %2968 = vmatpush1.msra.mxu0 %v77
    %2969 = vmatprep.subr.mxu0 0.0
    %2970 = vmatpush1.msra.mxu0 %v78
    %2971 = vmatprep.subr.mxu0 0.0
    %2972 = vmatpush1.msra.mxu0 %v79
    %2973 = vmatprep.subr.mxu0 0.0
    %2974 = vmatpush1.msra.mxu0 %v80
    %2975 = vmatprep.subr.mxu0 0.0
    %2976 = vmatpush1.msra.mxu0 %v81
    %2977 = vmatprep.subr.mxu0 0.0
    %2978 = vmatpush1.msra.mxu0 %v82
    %2979 = vmatprep.subr.mxu0 0.0
    %2980 = vmatpush1.msra.mxu0 %v83
    %2981 = vmatprep.subr.mxu0 0.0
    %2982 = vmatpush1.msra.mxu0 %v84
    %2983 = vmatprep.subr.mxu0 0.0
    %2984 = vmatpush1.msra.mxu0 %v85
    %2985 = vmatprep.subr.mxu0 0.0
    %2986 = vmatpush1.msra.mxu0 %v86
    %2987 = vmatprep.subr.mxu0 0.0
    %2988 = vmatpush1.msra.mxu0 %v87
    %2989 = vmatprep.subr.mxu0 0.0
    %2990 = vmatpush1.msra.mxu0 %v88
    %2991 = vmatprep.subr.mxu0 0.0
    %2992 = vmatpush1.msra.mxu0 %v89
    %2993 = vmatprep.subr.mxu0 0.0
    %2994 = vmatpush1.msra.mxu0 %v90
    %2995 = vmatprep.subr.mxu0 0.0
    %2996 = vmatpush1.msra.mxu0 %v91
    %2997 = vmatprep.subr.mxu0 0.0
    %2998 = vmatpush1.msra.mxu0 %v92
    %2999 = vmatprep.subr.mxu0 0.0
    %3000 = vmatpush1.msra.mxu0 %v93
    %3001 = vmatprep.subr.mxu0 0.0
    %3002 = vmatpush1.msra.mxu0 %v94
    %3003 = vmatprep.subr.mxu0 0.0
    %3004 = vmatpush1.msra.mxu0 %v95
    %3005 = vmatprep.subr.mxu0 0.0
    %3006 = vmatpush1.msra.mxu0 %v96
    %3007 = vmatprep.subr.mxu0 0.0
    %3008 = vmatpush1.msra.mxu0 %v97
    %3009 = vmatprep.subr.mxu0 0.0
    %3010 = vmatpush1.msra.mxu0 %v98
    %3011 = vmatprep.subr.mxu0 0.0
    %3012 = vmatpush1.msra.mxu0 %v99
    %3013 = vmatprep.subr.mxu0 0.0
    %3014 = vmatpush1.msra.mxu0 %v100
    %3015 = vmatprep.subr.mxu0 0.0
    %3016 = vmatpush1.msra.mxu0 %v101
    %3017 = vmatprep.mubr.f32.mxu0 %v2950
    %3018 = vmatmul.mubr.f32.gmra.mrb[0].mxu0 %v2949
    %v3019 = vpop.f32.mrb[0].mxu0
    %v3020 = vadd.f32 %v760, %v3019
    %v3021 = vpop.f32.mrb[0].mxu0
    %3022 = vdwg.mxu0
    %v3023 = vld [vmem:[#allocation6] sm:$0x3]
    %vm3024 = vcmp.gt.f32.partialorder %v3023, %v844
    %v3025 = vsel %vm3024, 1, 0
    %v3026 = vcvt.s32.f32 %v3025
    %v3027 = vmul.f32 %v3023, 0.5
    %v3028 = vadd.f32 %v3027, %v3020
    %v3029 = vmul.f32 %v3026, %v844
    %v3030 = vsub.f32 %v3028, %v3029
    %vm3031 = vcmp.gt.f32.partialorder %v3030, %v844
    %v3032 = vsel %vm3031, 1, 0
    %v3033 = vcvt.s32.f32 %v3032
    %3034 = vst [vmem:[#allocation6] sm:$0x3] %v3030
    %s3035 = scalar_lea.vmem %s10, 6
    %3036 = vst [vmem:[%s3035] sm:$0x3] %v3033
    %s3037 = scalar_lea.vmem %s11, 6
    %3038 = vst [vmem:[%s3037] sm:$0x3] %v3030
    // Predicated region
    $region42: #{_oc_scnn_forward.3} parent=1 // pred_check
      _
    $region43: #{_oc_scnn_forward.3} parent=1 // pred_check_branch
      %3040 = sbr.rel (0) target = $region45
    $region44: #{_oc_scnn_forward.3} parent=1 // pred_region
      %s3042 = ssub.s32 256, 256
      %3043 = vsyncadd [#allocation8], %s3042
      %s3044 = sshll.u32 [#allocation10], 4
      %s3045 = int_to_ptr.vmem [resolvable:$true] %s3044
      %3050 = dma.vmem_to_hbm [thread:$0]  %s3045, 256, %s8, [#allocation8], 64, 64, 4
    $region45: #{_oc_scnn_forward.3} parent=1 // pred_fallthru
      _
    // Predicated region
    $region46: #{_oc_scnn_forward.3} parent=1 // pred_check
      _
    $region47: #{_oc_scnn_forward.3} parent=1 // pred_check_branch
      %3052 = sbr.rel (0) target = $region49
    $region48: #{_oc_scnn_forward.3} parent=1 // pred_region
      %s3054 = ssub.s32 256, 256
      %3055 = vsyncadd [#allocation12], %s3054
      %s3056 = sshll.u32 [#allocation11], 4
      %s3057 = int_to_ptr.vmem [resolvable:$true] %s3056
      %3062 = dma.vmem_to_hbm [thread:$0]  %s3057, 256, %s9, [#allocation12], 64, 64, 4
    $region49: #{_oc_scnn_forward.3} parent=1 // pred_fallthru
      _
    // Predicated region
    $region50: #{_oc_scnn_forward.3} parent=1 // pred_check
      _
    $region51: #{_oc_scnn_forward.3} parent=1 // pred_check_branch
      %3064 = sbr.rel (0) target = $region53
    $region52: #{_oc_scnn_forward.3} parent=1 // pred_region
      _
    $region53: #{_oc_scnn_forward.3} parent=1 // pred_fallthru
      _
    // Predicated region
    $region54: #{_oc_scnn_forward.3} parent=1 // pred_check
      _
    $region55: #{_oc_scnn_forward.3} parent=1 // pred_check_branch
      %3066 = sbr.rel (0) target = $region57
    $region56: #{_oc_scnn_forward.3} parent=1 // pred_region
      _
    $region57: #{_oc_scnn_forward.3} parent=1 // pred_fallthru
      _
    // Predicated region
    $region58: #{_oc_scnn_forward.3} parent=1 // pred_check
      _
    $region59: #{_oc_scnn_forward.3} parent=1 // pred_check_branch
      %3068 = sbr.rel (0) target = $region61
    $region60: #{_oc_scnn_forward.3} parent=1 // pred_region
      %3069 = dma.done [#allocation8], 256
    $region61: #{_oc_scnn_forward.3} parent=1 // pred_fallthru
      _
    // Predicated region
    $region62: #{_oc_scnn_forward.3} parent=1 // pred_check
      _
    $region63: #{_oc_scnn_forward.3} parent=1 // pred_check_branch
      %3071 = sbr.rel (0) target = $region65
    $region64: #{_oc_scnn_forward.3} parent=1 // pred_region
      %3072 = dma.done [#allocation12], 256
    $region65: #{_oc_scnn_forward.3} parent=1 // pred_fallthru
      _
    // Predicated region
    $region66: #{_oc_scnn_forward.3} parent=1 // pred_check
      _
    $region67: #{_oc_scnn_forward.3} parent=1 // pred_check_branch
      %3074 = sbr.rel (0) target = $region69
    $region68: #{_oc_scnn_forward.3} parent=1 // pred_region
      _
    $region69: #{_oc_scnn_forward.3} parent=1 // pred_fallthru
      _
    // Predicated region
    $region70: #{_oc_scnn_forward.3} parent=1 // pred_check
      _
    $region71: #{_oc_scnn_forward.3} parent=1 // pred_check_branch
      %3076 = sbr.rel (0) target = $region73
    $region72: #{_oc_scnn_forward.3} parent=1 // pred_region
      _
    $region73: #{_oc_scnn_forward.3} parent=1 // pred_fallthru
      _
    %3077 = vsyncpa [#allocation8], 1
    %3078 = vsyncpa [#allocation12], 1
    %3079 = vsyncpa [#allocation9], 1

</llo_original>
